<compile_context>
chip_gen: v5e
topology: v5e:2x2
jax: 0.10.0
libtpu: 0.0.40
codegen_flags: <defaults>
</compile_context>

<pallas_src>
import functools

import jax
import jax.numpy as jnp
from jax import lax
from jax.experimental import pallas as pl
from jax.experimental.pallas import tpu as pltpu

NEG = -1e30          # finite "-inf": padded lanes never produce NaN via (-inf)-(-inf)
T_PAD = 128          # CRF tag axis padded to one full lane width for the emission matmul


def _vmem_capacity_bytes():
    try:
        info = pltpu.get_tpu_info()
        return int(getattr(info, "vmem_capacity_bytes", 64 * 1024 * 1024))
    except Exception:                     # no hw info -> conservative (v7x-sized) budget
        return 64 * 1024 * 1024


_VMEM_CAP = _vmem_capacity_bytes()
# generation-aware scoped-VMEM budget: ~70% of physical, capped at 96 MiB
VMEM_LIMIT = min(int(_VMEM_CAP * 0.7), 96 * 1024 * 1024)
_BIG_VMEM = _VMEM_CAP >= 100 * 1024 * 1024        # v5e/v6e (128 MiB) vs v7x (64 MiB)
_TM_DEF = 512 if _BIG_VMEM else 256
_TN_DEF = 1024 if _BIG_VMEM else 512
_TK_DEF = 512


def _tile(dim, target, unit):
    """Largest block <= target dividing dim and multiple of `unit`, else full dim."""
    if dim <= target:
        return dim
    t = (target // unit) * unit
    while t >= unit:
        if dim % t == 0:
            return t
        t -= unit
    return dim


# ----------------------------------------------------------------------------
# Tiled linear:  y = x @ w + b  (optional fused relu / grouped log_softmax epilogue)
# grid = (M/tm, N/tn, K/tk); bias + activation applied only on the last K step.
# ----------------------------------------------------------------------------
def _matmul_kernel(x_ref, w_ref, b_ref, o_ref, acc_ref, *, activation, ls_groups):
    @pl.when(pl.program_id(2) == 0)
    def _():
        acc_ref[...] = jnp.zeros_like(acc_ref)

    acc_ref[...] += jnp.dot(x_ref[...].astype(jnp.bfloat16),
                            w_ref[...].astype(jnp.bfloat16),
                            preferred_element_type=jnp.float32)

    @pl.when(pl.program_id(2) == pl.num_programs(2) - 1)
    def _():
        y = acc_ref[...] + b_ref[...]
        if activation == "relu":
            o_ref[...] = jnp.maximum(y, 0.0).astype(o_ref.dtype)
        elif activation == "log_softmax":
            # per 128-lane group log_softmax (fused multi-head emissions)
            n = y.shape[-1]
            gsz = n // ls_groups
            for g in range(ls_groups):
                yg = y[:, g * gsz:(g + 1) * gsz]
                m = jnp.max(yg, axis=-1, keepdims=True)
                yg = yg - m
                yg = yg - jnp.log(jnp.sum(jnp.exp(yg), axis=-1, keepdims=True))
                o_ref[:, g * gsz:(g + 1) * gsz] = yg.astype(o_ref.dtype)
        else:
            o_ref[...] = y.astype(o_ref.dtype)


def linear(x, w, b, activation=None, *, ls_groups=1, out_dtype=jnp.bfloat16,
           tm=None, tn=None, tk=None):
    M, K = x.shape
    _, N = w.shape
    tm = _tile(M, tm or _TM_DEF, 8)
    tk = _tile(K, tk or _TK_DEF, 128)
    tn = N if activation == "log_softmax" else _tile(N, tn or _TN_DEF, 128)
    grid = (M // tm, N // tn, K // tk)
    cost = pl.CostEstimate(
        flops=2 * M * N * K,
        transcendentals=(M * N if activation == "log_softmax" else 0),
        bytes_accessed=M * K * x.dtype.itemsize + K * N * w.dtype.itemsize
        + M * N * jnp.dtype(out_dtype).itemsize)
    return pl.pallas_call(
        functools.partial(_matmul_kernel, activation=activation, ls_groups=ls_groups),
        out_shape=jax.ShapeDtypeStruct((M, N), out_dtype),
        grid=grid,
        in_specs=[
            pl.BlockSpec((tm, tk), lambda i, j, k: (i, k)),
            pl.BlockSpec((tk, tn), lambda i, j, k: (k, j)),
            pl.BlockSpec((1, tn), lambda i, j, k: (0, j)),
        ],
        out_specs=pl.BlockSpec((tm, tn), lambda i, j, k: (i, j)),
        scratch_shapes=[pltpu.VMEM((tm, tn), jnp.float32)],
        compiler_params=pltpu.CompilerParams(
            dimension_semantics=("parallel", "parallel", "arbitrary"),
            vmem_limit_bytes=VMEM_LIMIT),
        cost_estimate=cost,
    )(x, w, b)


# ----------------------------------------------------------------------------
# Fused: y = x @ w + b ; z = residual + y ; LayerNorm(z)   (post-norm, eps=1e-5)
# grid = (M/tm, K/tk); N kept whole (LayerNorm needs the full feature row).
# ----------------------------------------------------------------------------
def _matmul_res_ln_kernel(x_ref, w_ref, b_ref, r_ref, g_ref, beta_ref, o_ref, acc_ref):
    @pl.when(pl.program_id(1) == 0)
    def _():
        acc_ref[...] = jnp.zeros_like(acc_ref)

    acc_ref[...] += jnp.dot(x_ref[...].astype(jnp.bfloat16),
                            w_ref[...].astype(jnp.bfloat16),
                            preferred_element_type=jnp.float32)

    @pl.when(pl.program_id(1) == pl.num_programs(1) - 1)
    def _():
        z = acc_ref[...] + b_ref[...] + r_ref[...].astype(jnp.float32)
        mu = jnp.mean(z, axis=-1, keepdims=True)
        var = jnp.mean((z - mu) ** 2, axis=-1, keepdims=True)
        zn = (z - mu) * lax.rsqrt(var + 1e-5)
        o_ref[...] = (zn * g_ref[...] + beta_ref[...]).astype(o_ref.dtype)


def linear_residual_layernorm(x, w, b, res, gamma, beta, *, out_dtype=jnp.bfloat16,
                              tm=None, tk=None):
    M, K = x.shape
    _, N = w.shape
    tm = _tile(M, tm or _TM_DEF, 8)
    tk = _tile(K, tk or _TK_DEF, 128)
    grid = (M // tm, K // tk)
    cost = pl.CostEstimate(
        flops=2 * M * N * K + 10 * M * N, transcendentals=M,
        bytes_accessed=M * K * x.dtype.itemsize + K * N * w.dtype.itemsize
        + M * N * (res.dtype.itemsize + jnp.dtype(out_dtype).itemsize))
    return pl.pallas_call(
        _matmul_res_ln_kernel,
        out_shape=jax.ShapeDtypeStruct((M, N), out_dtype),
        grid=grid,
        in_specs=[
            pl.BlockSpec((tm, tk), lambda i, k: (i, k)),
            pl.BlockSpec((tk, N), lambda i, k: (k, 0)),
            pl.BlockSpec((1, N), lambda i, k: (0, 0)),
            pl.BlockSpec((tm, N), lambda i, k: (i, 0)),
            pl.BlockSpec((1, N), lambda i, k: (0, 0)),
            pl.BlockSpec((1, N), lambda i, k: (0, 0)),
        ],
        out_specs=pl.BlockSpec((tm, N), lambda i, k: (i, 0)),
        scratch_shapes=[pltpu.VMEM((tm, N), jnp.float32)],
        compiler_params=pltpu.CompilerParams(
            dimension_semantics=("parallel", "arbitrary"),
            vmem_limit_bytes=VMEM_LIMIT),
        cost_estimate=cost,
    )(x, w, b, res, gamma, beta)


# ----------------------------------------------------------------------------
# Multi-head self-attention, no 1/sqrt(Dh) scaling (scale=False / adatrans approx).
# Gridded over B ("parallel" -> both TCs on v7x).  Reads fused QKV [B,S,3D] directly
# (heads sliced in-kernel on lanes) and writes the output in [B,S,D] layout, so no
# split / head-transpose HBM copies exist outside the kernel.
# ----------------------------------------------------------------------------
def _mha_kernel(qkv_ref, m_ref, o_ref, *, n_head):
    S, three_d = qkv_ref.shape
    d_model = three_d // 3
    dh = d_model // n_head
    qkv = qkv_ref[...]                                     # [S, 3D] bf16
    m = m_ref[...]                                         # [1, S] key mask
    for h in range(n_head):
        q = qkv[:, h * dh:(h + 1) * dh]
        k = qkv[:, d_model + h * dh:d_model + (h + 1) * dh]
        v = qkv[:, 2 * d_model + h * dh:2 * d_model + (h + 1) * dh]
        s = lax.dot_general(q, k, (((1,), (1,)), ((), ())),
                            preferred_element_type=jnp.float32)     # [S, S]
        s = jnp.where(m > 0.0, s, NEG)
        s = s - jnp.max(s, axis=-1, keepdims=True)
        p = jnp.exp(s)
        p = p * pl.reciprocal(jnp.sum(p, axis=-1, keepdims=True), approx=True)
        o = jnp.dot(p.astype(jnp.bfloat16), v, preferred_element_type=jnp.float32)
        o_ref[:, h * dh:(h + 1) * dh] = o.astype(o_ref.dtype)


def attention(qkv, mask, *, n_head):
    B, S, three_d = qkv.shape
    D = three_d // 3
    cost = pl.CostEstimate(flops=4 * B * S * S * D,
                           transcendentals=B * n_head * S * S,
                           bytes_accessed=B * S * (three_d + D) * 2 + B * S * 4)
    # TODO(synk): flash-style KV tiling (online softmax) for long S so SxS scores stay
    #             inside v7x's 64 MiB VMEM; fine at these sizes.
    return pl.pallas_call(
        functools.partial(_mha_kernel, n_head=n_head),
        out_shape=jax.ShapeDtypeStruct((B, S, D), jnp.bfloat16),
        grid=(B,),
        in_specs=[
            pl.BlockSpec((None, S, three_d), lambda b: (b, 0, 0)),
            pl.BlockSpec((None, 1, S), lambda b: (b, 0, 0)),
        ],
        out_specs=pl.BlockSpec((None, S, D), lambda b: (b, 0, 0)),
        compiler_params=pltpu.CompilerParams(
            dimension_semantics=("parallel",), vmem_limit_bytes=VMEM_LIMIT),
        cost_estimate=cost,
    )(qkv, mask)


# ----------------------------------------------------------------------------
# CRF negative log-likelihood (fastNLP semantics, include_start_end_trans=True).
# Both tag heads run in one pallas_call: grid=(G,) "parallel"; each program reads its
# 128-lane emission slice, its own trans/start/end, and its own tags.  The forward
# recursion is a rolled fori_loop and only touches `ts` (real tags rounded to 8)
# sublanes of the 128x128 padded transition matrix.
# ----------------------------------------------------------------------------
def _crf_kernel(logits_ref, tags_ref, mask_ref, trans_ref, transT_ref,
                start_ref, end_ref, loss_ref, *, ts):
    S, B, _ = logits_ref.shape
    trans_s = trans_ref[...][:ts, :ts]        # [ts, ts]  row = prev tag
    transT_s = transT_ref[...][:ts, :ts]      # [ts, ts]  row = next tag
    start_s = start_ref[...][:, :ts]          # [1, ts]
    end_s = end_ref[...][:, :ts]

    # ---- log partition function (forward recursion), rolled loop ----
    alpha0 = logits_ref[0][:, :ts] + start_s                         # [B, ts]

    def body(t, alpha):
        emit = logits_ref[t][:, :ts]                                 # [B, ts]
        m_t = mask_ref[t]                                            # [B, 1]
        tmp = alpha[:, None, :] + transT_s[None, :, :]               # [B, ts, ts]
        mx = jnp.max(tmp, axis=-1, keepdims=True)
        lse = jnp.log(jnp.sum(jnp.exp(tmp - mx), axis=-1)) + mx[:, :, 0]
        return jnp.where(m_t > 0.0, lse + emit, alpha)

    alpha = lax.fori_loop(1, S, body, alpha0)
    alpha = alpha + end_s
    mxa = jnp.max(alpha, axis=-1, keepdims=True)
    logz = jnp.log(jnp.sum(jnp.exp(alpha - mxa), axis=-1, keepdims=True)) + mxa  # [B, 1]

    # ---- gold path score ----
    logits_all = logits_ref[...][:, :, :ts]                          # [S, B, ts]
    tags_all = tags_ref[...]                                         # [S, B]
    mask3 = mask_ref[...]                                            # [S, B, 1]
    iota_t = lax.broadcasted_iota(jnp.int32, (S, B, ts), 2)
    oh = (tags_all[:, :, None] == iota_t).astype(jnp.float32)        # [S, B, ts]

    emit_score = jnp.sum(jnp.sum(oh * logits_all, axis=-1, keepdims=True) * mask3, axis=0)

    prev_oh = oh[:-1]                                                # [S-1, B, ts]
    next_oh = oh[1:]
    row = jnp.sum(prev_oh[:, :, :, None] * trans_s[None, None, :, :], axis=2)
    trans_score = jnp.sum(jnp.sum(row * next_oh, axis=-1, keepdims=True) * mask3[1:], axis=0)

    st_score = jnp.sum(oh[0] * start_s, axis=-1, keepdims=True)      # [B, 1]

    last_idx = jnp.sum(mask3, axis=0).astype(jnp.int32) - 1          # [B, 1]
    iota_s = lax.broadcasted_iota(jnp.int32, (S, B, 1), 0)
    oh_last = (iota_s == last_idx[None, :, :]).astype(jnp.float32)
    tag_last_oh = jnp.sum(oh_last * oh, axis=0)                      # [B, ts]
    ed_score = jnp.sum(tag_last_oh * end_s, axis=-1, keepdims=True)

    gold = emit_score + trans_score + st_score + ed_score
    loss_ref[...] = logz - gold


def crf_nll_multi(logp, tags, maskf, trans, transT, start, end, *, tag_sizes):
    """logp [B,S,G*T_PAD] f32; tags [G,B,S] int32; maskf [B,S] -> summed loss [B]."""
    B, S, GT = logp.shape
    G = GT // T_PAD
    ts = min(T_PAD, max(8, ((max(tag_sizes) + 7) // 8) * 8))
    # TODO(synk): emit the emission matmul output time-major to drop these transposes.
    logits_sf = jnp.transpose(logp, (1, 0, 2))                       # [S, B, G*T_PAD]
    tags_sf = jnp.transpose(tags, (0, 2, 1)).astype(jnp.int32)       # [G, S, B]
    mask_sf = jnp.transpose(maskf, (1, 0))[:, :, None].astype(jnp.float32)  # [S, B, 1]
    out = pl.pallas_call(
        functools.partial(_crf_kernel, ts=ts),
        out_shape=jax.ShapeDtypeStruct((G, B, 1), jnp.float32),
        grid=(G,),
        in_specs=[
            pl.BlockSpec((S, B, T_PAD), lambda g: (0, 0, g)),
            pl.BlockSpec((None, S, B), lambda g: (g, 0, 0)),
            pl.BlockSpec((S, B, 1), lambda g: (0, 0, 0)),
            pl.BlockSpec((None, T_PAD, T_PAD), lambda g: (g, 0, 0)),
            pl.BlockSpec((None, T_PAD, T_PAD), lambda g: (g, 0, 0)),
            pl.BlockSpec((None, 1, T_PAD), lambda g: (g, 0, 0)),
            pl.BlockSpec((None, 1, T_PAD), lambda g: (g, 0, 0)),
        ],
        out_specs=pl.BlockSpec((None, B, 1), lambda g: (g, 0, 0)),
        compiler_params=pltpu.CompilerParams(
            dimension_semantics=("parallel",), vmem_limit_bytes=VMEM_LIMIT),
    )(logits_sf, tags_sf, mask_sf, trans, transT, start, end)
    return jnp.sum(out[:, :, 0], axis=0)                             # sum over heads -> [B]


# ----------------------------------------------------------------------------
# Parameters (deterministic, synthetic).  Matmul weights stored in bf16 (MXU inputs),
# biases / LayerNorm / CRF params in f32.  Emission heads are fused into one [D, G*128]
# matmul: padded columns get weight 0 / bias NEG so the per-group log_softmax output is
# already the NEG-padded emission the CRF expects.
# NOTE: the original hard-codes nn.Linear(1536, n_tags); here in-features == d_model.
# ----------------------------------------------------------------------------
def init_params(key, V, E, D, H, FF, L, tag_sizes):
    f32, bf16 = jnp.float32, jnp.bfloat16
    G = len(tag_sizes)

    def nrm(k, shape, scale=0.1):
        return scale * jax.random.normal(k, shape, dtype=f32)

    keys = iter(jax.random.split(key, 16 + 8 * L + 8 * G))
    params = {
        "embed": nrm(next(keys), (V, E), 0.5),
        "in_fc_w": nrm(next(keys), (E, D)).astype(bf16),
        "in_fc_b": jnp.zeros((1, D), f32),
        "layers": [],
    }
    for _ in range(L):
        wq = nrm(next(keys), (D, D))
        wk = nrm(next(keys), (D, D))
        wv = nrm(next(keys), (D, D))
        params["layers"].append({
            "wqkv": jnp.concatenate([wq, wk, wv], axis=1).astype(bf16),
            "bqkv": jnp.zeros((1, 3 * D), f32),
            "wo": nrm(next(keys), (D, D)).astype(bf16), "bo": jnp.zeros((1, D), f32),
            "w1": nrm(next(keys), (D, FF)).astype(bf16), "b1": jnp.zeros((1, FF), f32),
            "w2": nrm(next(keys), (FF, D)).astype(bf16), "b2": jnp.zeros((1, D), f32),
            "ln1_g": jnp.ones((1, D), f32), "ln1_b": jnp.zeros((1, D), f32),
            "ln2_g": jnp.ones((1, D), f32), "ln2_b": jnp.zeros((1, D), f32),
        })
    w_cat = jnp.zeros((D, G * T_PAD), f32)
    b_cat = jnp.full((1, G * T_PAD), NEG, f32)
    trans_st = jnp.full((G, T_PAD, T_PAD), NEG, f32)
    start_st = jnp.full((G, 1, T_PAD), NEG, f32)
    end_st = jnp.full((G, 1, T_PAD), NEG, f32)
    for g, T in enumerate(tag_sizes):
        w_cat = w_cat.at[:, g * T_PAD:g * T_PAD + T].set(nrm(next(keys), (D, T)))
        b_cat = b_cat.at[:, g * T_PAD:g * T_PAD + T].set(0.0)
        trans_st = trans_st.at[g, :T, :T].set(nrm(next(keys), (T, T)))
        start_st = start_st.at[g, :, :T].set(nrm(next(keys), (1, T)))
        end_st = end_st.at[g, :, :T].set(nrm(next(keys), (1, T)))
    params["out_fc_w_cat"] = w_cat.astype(bf16)
    params["out_fc_b_cat"] = b_cat
    params["crf_trans"] = trans_st
    params["crf_transT"] = jnp.transpose(trans_st, (0, 2, 1))
    params["crf_start"] = start_st
    params["crf_end"] = end_st
    return params


# ----------------------------------------------------------------------------
# Full forward pass (training branch of StackedTransformersCRF._forward)
# ----------------------------------------------------------------------------
def stacked_transformers_crf_forward(params, words, targets, *, n_head, tag_sizes):
    B, S = words.shape
    maskf = (words != 0).astype(jnp.float32)               # words.ne(0)

    x = jnp.take(params["embed"], words, axis=0)           # embedding lookup (XLA glue)
    D = params["in_fc_w"].shape[1]
    h = linear(x.reshape(B * S, -1), params["in_fc_w"], params["in_fc_b"])  # bf16 [B*S, D]

    mask_b = maskf[:, None, :]                              # [B, 1, S] key mask

    # TODO(synk): adatrans relative-position attention approximated by un-scaled MHA;
    #             transformer / fc dropout are identity (eval mode).
    for layer in params["layers"]:
        qkv = linear(h, layer["wqkv"], layer["bqkv"])                     # bf16 [B*S, 3D]
        a = attention(qkv.reshape(B, S, 3 * D), mask_b, n_head=n_head)    # bf16 [B, S, D]
        h = linear_residual_layernorm(a.reshape(B * S, D), layer["wo"], layer["bo"],
                                      h, layer["ln1_g"], layer["ln1_b"])
        f = linear(h, layer["w1"], layer["b1"], activation="relu")
        h = linear_residual_layernorm(f, layer["w2"], layer["b2"],
                                      h, layer["ln2_g"], layer["ln2_b"])

    G = len(targets)
    logp = linear(h, params["out_fc_w_cat"], params["out_fc_b_cat"],
                  activation="log_softmax", ls_groups=G, out_dtype=jnp.float32)
    loss = crf_nll_multi(logp.reshape(B, S, G * T_PAD),
                         jnp.stack(targets, axis=0), maskf,
                         params["crf_trans"], params["crf_transT"],
                         params["crf_start"], params["crf_end"],
                         tag_sizes=tag_sizes)
    return {"loss": loss}


if __name__ == "__main__":
    B, S = 2, 8
    V, E, D, H, FF, L = 50, 48, 32, 4, 64, 2
    TAG_SIZES = (9, 5)

    key = jax.random.PRNGKey(0)
    kp, kw, kt0, kt1 = jax.random.split(key, 4)

    params = init_params(kp, V, E, D, H, FF, L, TAG_SIZES)

    words = jax.random.randint(kw, (B, S), 1, V, dtype=jnp.int32)
    words = words.at[0, 6:].set(0).at[1, 7:].set(0)         # trailing pads -> mask = words.ne(0)
    target0 = jax.random.randint(kt0, (B, S), 0, TAG_SIZES[0], dtype=jnp.int32)
    target1 = jax.random.randint(kt1, (B, S), 0, TAG_SIZES[1], dtype=jnp.int32)

    fwd = jax.jit(functools.partial(stacked_transformers_crf_forward,
                                    n_head=H, tag_sizes=TAG_SIZES))
    out = fwd(params, words, (target0, target1))
    loss = jax.block_until_ready(out["loss"])
    assert loss.shape == (B,) and bool(jnp.all(jnp.isfinite(loss)))
    print("KERNEL_OK")
</pallas_src>

<mosaic_0001>
module attributes {stable_mosaic.version = 11 : i64} {
  func.func @_matmul_kernel(%arg0: i32, %arg1: i32, %arg2: i32, %arg3: memref<16x48xf32, #tpu.memory_space<vmem>>, %arg4: memref<48x32xbf16, #tpu.memory_space<vmem>>, %arg5: memref<1x32xf32, #tpu.memory_space<vmem>>, %arg6: memref<16x32xbf16, #tpu.memory_space<vmem>>, %arg7: memref<16x32xf32, #tpu.memory_space<vmem>>) attributes {dimension_semantics = [#tpu.dimension_semantics<parallel>, #tpu.dimension_semantics<parallel>, #tpu.dimension_semantics<arbitrary>], iteration_bounds = array<i64: 1, 1, 1>, scalar_prefetch = 0 : i64, scratch_operands = 1 : i64, tpu.core_type = #tpu.core_type<tc>, window_params = [{transform_indices = @transform_0, window_bounds = array<i64: 16, 48>}, {transform_indices = @transform_1, window_bounds = array<i64: 48, 32>}, {transform_indices = @transform_2, window_bounds = array<i64: 1, 32>}, {transform_indices = @transform_3, window_bounds = array<i64: 16, 32>}]} {
    %c0_i32 = arith.constant 0 : i32
    %0 = arith.cmpi eq, %arg2, %c0_i32 : i32
    %1 = arith.extui %0 : i1 to i32
    %c0_i32_0 = arith.constant 0 : i32
    %2 = arith.cmpi ne, %1, %c0_i32_0 : i32
    scf.if %2 {
      %cst_10 = arith.constant 0.000000e+00 : f32
      %13 = vector.broadcast %cst_10 : f32 to vector<16x32xf32>
      %c0_11 = arith.constant 0 : index
      %c0_12 = arith.constant 0 : index
      %14 = vector.load %arg7[%c0_11, %c0_12] : memref<16x32xf32, #tpu.memory_space<vmem>>, vector<16x32xf32>
      tpu.vector_store %arg7[%c0_11, %c0_12], %13 {strides = array<i32>} : memref<16x32xf32, #tpu.memory_space<vmem>>, vector<16x32xf32>,
    } else {
    }
    %c0 = arith.constant 0 : index
    %c0_1 = arith.constant 0 : index
    %3 = vector.load %arg7[%c0, %c0_1] : memref<16x32xf32, #tpu.memory_space<vmem>>, vector<16x32xf32>
    %c0_2 = arith.constant 0 : index
    %c0_3 = arith.constant 0 : index
    %4 = vector.load %arg3[%c0_2, %c0_3] : memref<16x48xf32, #tpu.memory_space<vmem>>, vector<16x48xf32>
    %5 = arith.truncf %4 : vector<16x48xf32> to vector<16x48xbf16>
    %c0_4 = arith.constant 0 : index
    %c0_5 = arith.constant 0 : index
    %6 = vector.load %arg4[%c0_4, %c0_5] : memref<48x32xbf16, #tpu.memory_space<vmem>>, vector<48x32xbf16>
    %cst = arith.constant dense<0.000000e+00> : vector<16x32xf32>
    %7 = tpu.matmul %5, %6, %cst {dimension_numbers = #tpu.dot_dimension_numbers<[1], [0], [0], [1], [0, 0, 1, 1], [], []>} : vector<16x48xbf16>, vector<48x32xbf16>, vector<16x32xf32> -> vector<16x32xf32>
    %8 = arith.addf %3, %7 : vector<16x32xf32>
    %c0_6 = arith.constant 0 : index
    %c0_7 = arith.constant 0 : index
    %9 = vector.load %arg7[%c0_6, %c0_7] : memref<16x32xf32, #tpu.memory_space<vmem>>, vector<16x32xf32>
    tpu.vector_store %arg7[%c0_6, %c0_7], %8 {strides = array<i32>} : memref<16x32xf32, #tpu.memory_space<vmem>>, vector<16x32xf32>,
    %c0_i32_8 = arith.constant 0 : i32
    %10 = arith.cmpi eq, %arg2, %c0_i32_8 : i32
    %11 = arith.extui %10 : i1 to i32
    %c0_i32_9 = arith.constant 0 : i32
    %12 = arith.cmpi ne, %11, %c0_i32_9 : i32
    scf.if %12 {
      %c0_10 = arith.constant 0 : index
      %c0_11 = arith.constant 0 : index
      %13 = vector.load %arg7[%c0_10, %c0_11] : memref<16x32xf32, #tpu.memory_space<vmem>>, vector<16x32xf32>
      %c0_12 = arith.constant 0 : index
      %c0_13 = arith.constant 0 : index
      %14 = vector.load %arg5[%c0_12, %c0_13] : memref<1x32xf32, #tpu.memory_space<vmem>>, vector<1x32xf32>
      %15 = vector.broadcast %14 : vector<1x32xf32> to vector<16x32xf32>
      %16 = arith.addf %13, %15 : vector<16x32xf32>
      %17 = arith.truncf %16 : vector<16x32xf32> to vector<16x32xbf16>
      %c0_14 = arith.constant 0 : index
      %c0_15 = arith.constant 0 : index
      %18 = vector.load %arg6[%c0_14, %c0_15] : memref<16x32xbf16, #tpu.memory_space<vmem>>, vector<16x32xbf16>
      tpu.vector_store %arg6[%c0_14, %c0_15], %17 {strides = array<i32>} : memref<16x32xbf16, #tpu.memory_space<vmem>>, vector<16x32xbf16>,
    } else {
    }
    return
  }
  func.func @transform_0(%arg0: i32, %arg1: i32, %arg2: i32) -> (i32, i32) {
    %c0_i32 = arith.constant 0 : i32
    return %arg0, %arg2 : i32, i32
  }
  func.func @transform_1(%arg0: i32, %arg1: i32, %arg2: i32) -> (i32, i32) {
    %c0_i32 = arith.constant 0 : i32
    return %arg2, %arg1 : i32, i32
  }
  func.func @transform_2(%arg0: i32, %arg1: i32, %arg2: i32) -> (i32, i32) {
    %c0_i32 = arith.constant 0 : i32
    %c0_i32_0 = arith.constant 0 : i32
    return %c0_i32, %arg1 : i32, i32
  }
  func.func @transform_3(%arg0: i32, %arg1: i32, %arg2: i32) -> (i32, i32) {
    %c0_i32 = arith.constant 0 : i32
    return %arg0, %arg1 : i32, i32
  }
}

module attributes {stable_mosaic.version = 11 : i64} {
  func.func @_matmul_kernel(%arg0: i32, %arg1: i32, %arg2: i32, %arg3: memref<16x32xbf16, #tpu.memory_space<vmem>>, %arg4: memref<32x96xbf16, #tpu.memory_space<vmem>>, %arg5: memref<1x96xf32, #tpu.memory_space<vmem>>, %arg6: memref<16x96xbf16, #tpu.memory_space<vmem>>, %arg7: memref<16x96xf32, #tpu.memory_space<vmem>>) attributes {dimension_semantics = [#tpu.dimension_semantics<parallel>, #tpu.dimension_semantics<parallel>, #tpu.dimension_semantics<arbitrary>], iteration_bounds = array<i64: 1, 1, 1>, scalar_prefetch = 0 : i64, scratch_operands = 1 : i64, tpu.core_type = #tpu.core_type<tc>, window_params = [{transform_indices = @transform_0, window_bounds = array<i64: 16, 32>}, {transform_indices = @transform_1, window_bounds = array<i64: 32, 96>}, {transform_indices = @transform_2, window_bounds = array<i64: 1, 96>}, {transform_indices = @transform_3, window_bounds = array<i64: 16, 96>}]} {
    %c0_i32 = arith.constant 0 : i32
    %0 = arith.cmpi eq, %arg2, %c0_i32 : i32
    %1 = arith.extui %0 : i1 to i32
    %c0_i32_0 = arith.constant 0 : i32
    %2 = arith.cmpi ne, %1, %c0_i32_0 : i32
    scf.if %2 {
      %cst_10 = arith.constant 0.000000e+00 : f32
      %12 = vector.broadcast %cst_10 : f32 to vector<16x96xf32>
      %c0_11 = arith.constant 0 : index
      %c0_12 = arith.constant 0 : index
      %13 = vector.load %arg7[%c0_11, %c0_12] : memref<16x96xf32, #tpu.memory_space<vmem>>, vector<16x96xf32>
      tpu.vector_store %arg7[%c0_11, %c0_12], %12 {strides = array<i32>} : memref<16x96xf32, #tpu.memory_space<vmem>>, vector<16x96xf32>,
    } else {
    }
    %c0 = arith.constant 0 : index
    %c0_1 = arith.constant 0 : index
    %3 = vector.load %arg7[%c0, %c0_1] : memref<16x96xf32, #tpu.memory_space<vmem>>, vector<16x96xf32>
    %c0_2 = arith.constant 0 : index
    %c0_3 = arith.constant 0 : index
    %4 = vector.load %arg3[%c0_2, %c0_3] : memref<16x32xbf16, #tpu.memory_space<vmem>>, vector<16x32xbf16>
    %c0_4 = arith.constant 0 : index
    %c0_5 = arith.constant 0 : index
    %5 = vector.load %arg4[%c0_4, %c0_5] : memref<32x96xbf16, #tpu.memory_space<vmem>>, vector<32x96xbf16>
    %cst = arith.constant dense<0.000000e+00> : vector<16x96xf32>
    %6 = tpu.matmul %4, %5, %cst {dimension_numbers = #tpu.dot_dimension_numbers<[1], [0], [0], [1], [0, 0, 1, 1], [], []>} : vector<16x32xbf16>, vector<32x96xbf16>, vector<16x96xf32> -> vector<16x96xf32>
    %7 = arith.addf %3, %6 : vector<16x96xf32>
    %c0_6 = arith.constant 0 : index
    %c0_7 = arith.constant 0 : index
    %8 = vector.load %arg7[%c0_6, %c0_7] : memref<16x96xf32, #tpu.memory_space<vmem>>, vector<16x96xf32>
    tpu.vector_store %arg7[%c0_6, %c0_7], %7 {strides = array<i32>} : memref<16x96xf32, #tpu.memory_space<vmem>>, vector<16x96xf32>,
    %c0_i32_8 = arith.constant 0 : i32
    %9 = arith.cmpi eq, %arg2, %c0_i32_8 : i32
    %10 = arith.extui %9 : i1 to i32
    %c0_i32_9 = arith.constant 0 : i32
    %11 = arith.cmpi ne, %10, %c0_i32_9 : i32
    scf.if %11 {
      %c0_10 = arith.constant 0 : index
      %c0_11 = arith.constant 0 : index
      %12 = vector.load %arg7[%c0_10, %c0_11] : memref<16x96xf32, #tpu.memory_space<vmem>>, vector<16x96xf32>
      %c0_12 = arith.constant 0 : index
      %c0_13 = arith.constant 0 : index
      %13 = vector.load %arg5[%c0_12, %c0_13] : memref<1x96xf32, #tpu.memory_space<vmem>>, vector<1x96xf32>
      %14 = vector.broadcast %13 : vector<1x96xf32> to vector<16x96xf32>
      %15 = arith.addf %12, %14 : vector<16x96xf32>
      %16 = arith.truncf %15 : vector<16x96xf32> to vector<16x96xbf16>
      %c0_14 = arith.constant 0 : index
      %c0_15 = arith.constant 0 : index
      %17 = vector.load %arg6[%c0_14, %c0_15] : memref<16x96xbf16, #tpu.memory_space<vmem>>, vector<16x96xbf16>
      tpu.vector_store %arg6[%c0_14, %c0_15], %16 {strides = array<i32>} : memref<16x96xbf16, #tpu.memory_space<vmem>>, vector<16x96xbf16>,
    } else {
    }
    return
  }
  func.func @transform_0(%arg0: i32, %arg1: i32, %arg2: i32) -> (i32, i32) {
    %c0_i32 = arith.constant 0 : i32
    return %arg0, %arg2 : i32, i32
  }
  func.func @transform_1(%arg0: i32, %arg1: i32, %arg2: i32) -> (i32, i32) {
    %c0_i32 = arith.constant 0 : i32
    return %arg2, %arg1 : i32, i32
  }
  func.func @transform_2(%arg0: i32, %arg1: i32, %arg2: i32) -> (i32, i32) {
    %c0_i32 = arith.constant 0 : i32
    %c0_i32_0 = arith.constant 0 : i32
    return %c0_i32, %arg1 : i32, i32
  }
  func.func @transform_3(%arg0: i32, %arg1: i32, %arg2: i32) -> (i32, i32) {
    %c0_i32 = arith.constant 0 : i32
    return %arg0, %arg1 : i32, i32
  }
}

module attributes {stable_mosaic.version = 11 : i64} {
  func.func @_matmul_res_ln_kernel(%arg0: i32, %arg1: i32, %arg2: memref<16x32xbf16, #tpu.memory_space<vmem>>, %arg3: memref<32x32xbf16, #tpu.memory_space<vmem>>, %arg4: memref<1x32xf32, #tpu.memory_space<vmem>>, %arg5: memref<16x32xbf16, #tpu.memory_space<vmem>>, %arg6: memref<1x32xf32, #tpu.memory_space<vmem>>, %arg7: memref<1x32xf32, #tpu.memory_space<vmem>>, %arg8: memref<16x32xbf16, #tpu.memory_space<vmem>>, %arg9: memref<16x32xf32, #tpu.memory_space<vmem>>) attributes {dimension_semantics = [#tpu.dimension_semantics<parallel>, #tpu.dimension_semantics<arbitrary>], iteration_bounds = array<i64: 1, 1>, scalar_prefetch = 0 : i64, scratch_operands = 1 : i64, tpu.core_type = #tpu.core_type<tc>, window_params = [{transform_indices = @transform_0, window_bounds = array<i64: 16, 32>}, {transform_indices = @transform_1, window_bounds = array<i64: 32, 32>}, {pipeline_mode = #tpu.pipeline_mode<synchronous>, transform_indices = @transform_2, window_bounds = array<i64: 1, 32>}, {transform_indices = @transform_3, window_bounds = array<i64: 16, 32>}, {pipeline_mode = #tpu.pipeline_mode<synchronous>, transform_indices = @transform_4, window_bounds = array<i64: 1, 32>}, {pipeline_mode = #tpu.pipeline_mode<synchronous>, transform_indices = @transform_5, window_bounds = array<i64: 1, 32>}, {transform_indices = @transform_6, window_bounds = array<i64: 16, 32>}]} {
    %c0_i32 = arith.constant 0 : i32
    %0 = arith.cmpi eq, %arg1, %c0_i32 : i32
    %1 = arith.extui %0 : i1 to i32
    %c0_i32_0 = arith.constant 0 : i32
    %2 = arith.cmpi ne, %1, %c0_i32_0 : i32
    scf.if %2 {
      %cst_10 = arith.constant 0.000000e+00 : f32
      %12 = vector.broadcast %cst_10 : f32 to vector<16x32xf32>
      %c0_11 = arith.constant 0 : index
      %c0_12 = arith.constant 0 : index
      %13 = vector.load %arg9[%c0_11, %c0_12] : memref<16x32xf32, #tpu.memory_space<vmem>>, vector<16x32xf32>
      tpu.vector_store %arg9[%c0_11, %c0_12], %12 {strides = array<i32>} : memref<16x32xf32, #tpu.memory_space<vmem>>, vector<16x32xf32>,
    } else {
    }
    %c0 = arith.constant 0 : index
    %c0_1 = arith.constant 0 : index
    %3 = vector.load %arg9[%c0, %c0_1] : memref<16x32xf32, #tpu.memory_space<vmem>>, vector<16x32xf32>
    %c0_2 = arith.constant 0 : index
    %c0_3 = arith.constant 0 : index
    %4 = vector.load %arg2[%c0_2, %c0_3] : memref<16x32xbf16, #tpu.memory_space<vmem>>, vector<16x32xbf16>
    %c0_4 = arith.constant 0 : index
    %c0_5 = arith.constant 0 : index
    %5 = vector.load %arg3[%c0_4, %c0_5] : memref<32x32xbf16, #tpu.memory_space<vmem>>, vector<32x32xbf16>
    %cst = arith.constant dense<0.000000e+00> : vector<16x32xf32>
    %6 = tpu.matmul %4, %5, %cst {dimension_numbers = #tpu.dot_dimension_numbers<[1], [0], [0], [1], [0, 0, 1, 1], [], []>} : vector<16x32xbf16>, vector<32x32xbf16>, vector<16x32xf32> -> vector<16x32xf32>
    %7 = arith.addf %3, %6 : vector<16x32xf32>
    %c0_6 = arith.constant 0 : index
    %c0_7 = arith.constant 0 : index
    %8 = vector.load %arg9[%c0_6, %c0_7] : memref<16x32xf32, #tpu.memory_space<vmem>>, vector<16x32xf32>
    tpu.vector_store %arg9[%c0_6, %c0_7], %7 {strides = array<i32>} : memref<16x32xf32, #tpu.memory_space<vmem>>, vector<16x32xf32>,
    %c0_i32_8 = arith.constant 0 : i32
    %9 = arith.cmpi eq, %arg1, %c0_i32_8 : i32
    %10 = arith.extui %9 : i1 to i32
    %c0_i32_9 = arith.constant 0 : i32
    %11 = arith.cmpi ne, %10, %c0_i32_9 : i32
    scf.if %11 {
      %c0_10 = arith.constant 0 : index
      %c0_11 = arith.constant 0 : index
      %12 = vector.load %arg9[%c0_10, %c0_11] : memref<16x32xf32, #tpu.memory_space<vmem>>, vector<16x32xf32>
      %c0_12 = arith.constant 0 : index
      %c0_13 = arith.constant 0 : index
      %13 = vector.load %arg4[%c0_12, %c0_13] : memref<1x32xf32, #tpu.memory_space<vmem>>, vector<1x32xf32>
      %14 = vector.broadcast %13 : vector<1x32xf32> to vector<16x32xf32>
      %15 = arith.addf %12, %14 : vector<16x32xf32>
      %c0_14 = arith.constant 0 : index
      %c0_15 = arith.constant 0 : index
      %16 = vector.load %arg5[%c0_14, %c0_15] : memref<16x32xbf16, #tpu.memory_space<vmem>>, vector<16x32xbf16>
      %17 = arith.extf %16 : vector<16x32xbf16> to vector<16x32xf32>
      %18 = arith.addf %15, %17 : vector<16x32xf32>
      %cst_16 = arith.constant dense<0.000000e+00> : vector<16xf32>
      %19 = vector.multi_reduction <add>, %18, %cst_16 [1] : vector<16x32xf32> to vector<16xf32>
      %20 = vector.shape_cast %19 : vector<16xf32> to vector<16x1xf32>
      %cst_17 = arith.constant 3.200000e+01 : f32
      %21 = vector.broadcast %cst_17 : f32 to vector<16x1xf32>
      %22 = arith.divf %20, %21 : vector<16x1xf32>
      %23 = vector.broadcast %22 : vector<16x1xf32> to vector<16x32xf32>
      %24 = arith.subf %18, %23 : vector<16x32xf32>
      %25 = arith.mulf %24, %24 : vector<16x32xf32>
      %cst_18 = arith.constant dense<0.000000e+00> : vector<16xf32>
      %26 = vector.multi_reduction <add>, %25, %cst_18 [1] : vector<16x32xf32> to vector<16xf32>
      %27 = vector.shape_cast %26 : vector<16xf32> to vector<16x1xf32>
      %cst_19 = arith.constant 3.200000e+01 : f32
      %28 = vector.broadcast %cst_19 : f32 to vector<16x1xf32>
      %29 = arith.divf %27, %28 : vector<16x1xf32>
      %30 = vector.broadcast %22 : vector<16x1xf32> to vector<16x32xf32>
      %31 = arith.subf %18, %30 : vector<16x32xf32>
      %cst_20 = arith.constant 9.99999974E-6 : f32
      %32 = vector.broadcast %cst_20 : f32 to vector<16x1xf32>
      %33 = arith.addf %29, %32 : vector<16x1xf32>
      %34 = math.rsqrt %33 : vector<16x1xf32>
      %35 = vector.broadcast %34 : vector<16x1xf32> to vector<16x32xf32>
      %36 = arith.mulf %31, %35 : vector<16x32xf32>
      %c0_21 = arith.constant 0 : index
      %c0_22 = arith.constant 0 : index
      %37 = vector.load %arg6[%c0_21, %c0_22] : memref<1x32xf32, #tpu.memory_space<vmem>>, vector<1x32xf32>
      %38 = vector.broadcast %37 : vector<1x32xf32> to vector<16x32xf32>
      %39 = arith.mulf %36, %38 : vector<16x32xf32>
      %c0_23 = arith.constant 0 : index
      %c0_24 = arith.constant 0 : index
      %40 = vector.load %arg7[%c0_23, %c0_24] : memref<1x32xf32, #tpu.memory_space<vmem>>, vector<1x32xf32>
      %41 = vector.broadcast %40 : vector<1x32xf32> to vector<16x32xf32>
      %42 = arith.addf %39, %41 : vector<16x32xf32>
      %43 = arith.truncf %42 : vector<16x32xf32> to vector<16x32xbf16>
      %c0_25 = arith.constant 0 : index
      %c0_26 = arith.constant 0 : index
      %44 = vector.load %arg8[%c0_25, %c0_26] : memref<16x32xbf16, #tpu.memory_space<vmem>>, vector<16x32xbf16>
      tpu.vector_store %arg8[%c0_25, %c0_26], %43 {strides = array<i32>} : memref<16x32xbf16, #tpu.memory_space<vmem>>, vector<16x32xbf16>,
    } else {
    }
    return
  }
  func.func @transform_0(%arg0: i32, %arg1: i32) -> (i32, i32) {
    %c0_i32 = arith.constant 0 : i32
    return %arg0, %arg1 : i32, i32
  }
  func.func @transform_1(%arg0: i32, %arg1: i32) -> (i32, i32) {
    %c0_i32 = arith.constant 0 : i32
    %c0_i32_0 = arith.constant 0 : i32
    return %arg1, %c0_i32 : i32, i32
  }
  func.func @transform_2(%arg0: i32, %arg1: i32) -> (i32, i32) {
    %c0_i32 = arith.constant 0 : i32
    %c0_i32_0 = arith.constant 0 : i32
    %c0_i32_1 = arith.constant 0 : i32
    return %c0_i32, %c0_i32_0 : i32, i32
  }
  func.func @transform_3(%arg0: i32, %arg1: i32) -> (i32, i32) {
    %c0_i32 = arith.constant 0 : i32
    %c0_i32_0 = arith.constant 0 : i32
    return %arg0, %c0_i32 : i32, i32
  }
  func.func @transform_4(%arg0: i32, %arg1: i32) -> (i32, i32) {
    %c0_i32 = arith.constant 0 : i32
    %c0_i32_0 = arith.constant 0 : i32
    %c0_i32_1 = arith.constant 0 : i32
    return %c0_i32, %c0_i32_0 : i32, i32
  }
  func.func @transform_5(%arg0: i32, %arg1: i32) -> (i32, i32) {
    %c0_i32 = arith.constant 0 : i32
    %c0_i32_0 = arith.constant 0 : i32
    %c0_i32_1 = arith.constant 0 : i32
    return %c0_i32, %c0_i32_0 : i32, i32
  }
  func.func @transform_6(%arg0: i32, %arg1: i32) -> (i32, i32) {
    %c0_i32 = arith.constant 0 : i32
    %c0_i32_0 = arith.constant 0 : i32
    return %arg0, %c0_i32 : i32, i32
  }
}

module attributes {stable_mosaic.version = 11 : i64} {
  func.func @_mha_kernel(%arg0: i32, %arg1: memref<1x8x96xbf16, #tpu.memory_space<vmem>>, %arg2: memref<1x1x8xf32, #tpu.memory_space<vmem>>, %arg3: memref<1x8x32xbf16, #tpu.memory_space<vmem>>) attributes {dimension_semantics = [#tpu.dimension_semantics<parallel>], iteration_bounds = array<i64: 2>, scalar_prefetch = 0 : i64, scratch_operands = 0 : i64, tpu.core_type = #tpu.core_type<tc>, window_params = [{transform_indices = @transform_0, window_bounds = array<i64: 1, 8, 96>}, {transform_indices = @transform_1, window_bounds = array<i64: 1, 1, 8>}, {transform_indices = @transform_2, window_bounds = array<i64: 1, 8, 32>}]} {
    %c0 = arith.constant 0 : index
    %c0_0 = arith.constant 0 : index
    %c0_1 = arith.constant 0 : index
    %0 = vector.load %arg1[%c0, %c0_0, %c0_1] : memref<1x8x96xbf16, #tpu.memory_space<vmem>>, vector<1x8x96xbf16>
    %1 = vector.shape_cast %0 : vector<1x8x96xbf16> to vector<8x96xbf16>
    %c0_2 = arith.constant 0 : index
    %c0_3 = arith.constant 0 : index
    %c0_4 = arith.constant 0 : index
    %2 = vector.load %arg2[%c0_2, %c0_3, %c0_4] : memref<1x1x8xf32, #tpu.memory_space<vmem>>, vector<1x1x8xf32>
    %3 = vector.shape_cast %2 : vector<1x1x8xf32> to vector<1x8xf32>
    %4 = vector.extract_strided_slice %1 {offsets = [0, 0], sizes = [8, 8], strides = [1, 1]} : vector<8x96xbf16> to vector<8x8xbf16>
    %5 = vector.extract_strided_slice %1 {offsets = [0, 32], sizes = [8, 8], strides = [1, 1]} : vector<8x96xbf16> to vector<8x8xbf16>
    %6 = vector.extract_strided_slice %1 {offsets = [0, 64], sizes = [8, 8], strides = [1, 1]} : vector<8x96xbf16> to vector<8x8xbf16>
    %cst = arith.constant dense<0.000000e+00> : vector<8x8xf32>
    %7 = tpu.matmul %4, %5, %cst {dimension_numbers = #tpu.dot_dimension_numbers<[1], [1], [0], [0], [0, 0, 1, 0], [], []>} : vector<8x8xbf16>, vector<8x8xbf16>, vector<8x8xf32> -> vector<8x8xf32>
    %cst_5 = arith.constant 0.000000e+00 : f32
    %8 = vector.broadcast %cst_5 : f32 to vector<1x8xf32>
    %9 = arith.cmpf ogt, %3, %8 : vector<1x8xf32>
    %cst_6 = arith.constant -1.000000e+30 : f32
    %10 = vector.shape_cast %9 : vector<1x8xi1> to vector<1x8xi1>
    %11 = vector.broadcast %10 : vector<1x8xi1> to vector<8x8xi1>
    %12 = vector.broadcast %cst_6 : f32 to vector<8x8xf32>
    %13 = arith.select %11, %7, %12 : vector<8x8xi1>, vector<8x8xf32>
    %cst_7 = arith.constant dense<0xFF800000> : vector<8xf32>
    %14 = vector.multi_reduction <maximumf>, %13, %cst_7 [1] : vector<8x8xf32> to vector<8xf32>
    %15 = vector.shape_cast %14 : vector<8xf32> to vector<8x1xf32>
    %16 = vector.broadcast %15 : vector<8x1xf32> to vector<8x8xf32>
    %17 = arith.subf %13, %16 : vector<8x8xf32>
    %18 = math.exp %17 : vector<8x8xf32>
    %cst_8 = arith.constant dense<0.000000e+00> : vector<8xf32>
    %19 = vector.multi_reduction <add>, %18, %cst_8 [1] : vector<8x8xf32> to vector<8xf32>
    %20 = vector.shape_cast %19 : vector<8xf32> to vector<8x1xf32>
    %21 = tpu.reciprocal %20 {approx = true} : vector<8x1xf32> -> vector<8x1xf32>
    %22 = vector.broadcast %21 : vector<8x1xf32> to vector<8x8xf32>
    %23 = arith.mulf %18, %22 : vector<8x8xf32>
    %24 = arith.truncf %23 : vector<8x8xf32> to vector<8x8xbf16>
    %cst_9 = arith.constant dense<0.000000e+00> : vector<8x8xf32>
    %25 = tpu.matmul %24, %6, %cst_9 {dimension_numbers = #tpu.dot_dimension_numbers<[1], [0], [0], [1], [0, 0, 1, 1], [], []>} : vector<8x8xbf16>, vector<8x8xbf16>, vector<8x8xf32> -> vector<8x8xf32>
    %26 = arith.truncf %25 : vector<8x8xf32> to vector<8x8xbf16>
    %c0_10 = arith.constant 0 : index
    %c0_11 = arith.constant 0 : index
    %c0_12 = arith.constant 0 : index
    %27 = vector.load %arg3[%c0_10, %c0_11, %c0_12] : memref<1x8x32xbf16, #tpu.memory_space<vmem>>, vector<1x8x8xbf16>
    %28 = vector.shape_cast %27 : vector<1x8x8xbf16> to vector<8x8xbf16>
    %29 = vector.shape_cast %26 : vector<8x8xbf16> to vector<1x8x8xbf16>
    tpu.vector_store %arg3[%c0_10, %c0_11, %c0_12], %29 {strides = array<i32>} : memref<1x8x32xbf16, #tpu.memory_space<vmem>>, vector<1x8x8xbf16>,
    %30 = vector.extract_strided_slice %1 {offsets = [0, 8], sizes = [8, 8], strides = [1, 1]} : vector<8x96xbf16> to vector<8x8xbf16>
    %31 = vector.extract_strided_slice %1 {offsets = [0, 40], sizes = [8, 8], strides = [1, 1]} : vector<8x96xbf16> to vector<8x8xbf16>
    %32 = vector.extract_strided_slice %1 {offsets = [0, 72], sizes = [8, 8], strides = [1, 1]} : vector<8x96xbf16> to vector<8x8xbf16>
    %cst_13 = arith.constant dense<0.000000e+00> : vector<8x8xf32>
    %33 = tpu.matmul %30, %31, %cst_13 {dimension_numbers = #tpu.dot_dimension_numbers<[1], [1], [0], [0], [0, 0, 1, 0], [], []>} : vector<8x8xbf16>, vector<8x8xbf16>, vector<8x8xf32> -> vector<8x8xf32>
    %cst_14 = arith.constant 0.000000e+00 : f32
    %34 = vector.broadcast %cst_14 : f32 to vector<1x8xf32>
    %35 = arith.cmpf ogt, %3, %34 : vector<1x8xf32>
    %cst_15 = arith.constant -1.000000e+30 : f32
    %36 = vector.shape_cast %35 : vector<1x8xi1> to vector<1x8xi1>
    %37 = vector.broadcast %36 : vector<1x8xi1> to vector<8x8xi1>
    %38 = vector.broadcast %cst_15 : f32 to vector<8x8xf32>
    %39 = arith.select %37, %33, %38 : vector<8x8xi1>, vector<8x8xf32>
    %cst_16 = arith.constant dense<0xFF800000> : vector<8xf32>
    %40 = vector.multi_reduction <maximumf>, %39, %cst_16 [1] : vector<8x8xf32> to vector<8xf32>
    %41 = vector.shape_cast %40 : vector<8xf32> to vector<8x1xf32>
    %42 = vector.broadcast %41 : vector<8x1xf32> to vector<8x8xf32>
    %43 = arith.subf %39, %42 : vector<8x8xf32>
    %44 = math.exp %43 : vector<8x8xf32>
    %cst_17 = arith.constant dense<0.000000e+00> : vector<8xf32>
    %45 = vector.multi_reduction <add>, %44, %cst_17 [1] : vector<8x8xf32> to vector<8xf32>
    %46 = vector.shape_cast %45 : vector<8xf32> to vector<8x1xf32>
    %47 = tpu.reciprocal %46 {approx = true} : vector<8x1xf32> -> vector<8x1xf32>
    %48 = vector.broadcast %47 : vector<8x1xf32> to vector<8x8xf32>
    %49 = arith.mulf %44, %48 : vector<8x8xf32>
    %50 = arith.truncf %49 : vector<8x8xf32> to vector<8x8xbf16>
    %cst_18 = arith.constant dense<0.000000e+00> : vector<8x8xf32>
    %51 = tpu.matmul %50, %32, %cst_18 {dimension_numbers = #tpu.dot_dimension_numbers<[1], [0], [0], [1], [0, 0, 1, 1], [], []>} : vector<8x8xbf16>, vector<8x8xbf16>, vector<8x8xf32> -> vector<8x8xf32>
    %52 = arith.truncf %51 : vector<8x8xf32> to vector<8x8xbf16>
    %c0_19 = arith.constant 0 : index
    %c0_20 = arith.constant 0 : index
    %c8 = arith.constant 8 : index
    %53 = vector.load %arg3[%c0_19, %c0_20, %c8] : memref<1x8x32xbf16, #tpu.memory_space<vmem>>, vector<1x8x8xbf16>
    %54 = vector.shape_cast %53 : vector<1x8x8xbf16> to vector<8x8xbf16>
    %55 = vector.shape_cast %52 : vector<8x8xbf16> to vector<1x8x8xbf16>
    tpu.vector_store %arg3[%c0_19, %c0_20, %c8], %55 {strides = array<i32>} : memref<1x8x32xbf16, #tpu.memory_space<vmem>>, vector<1x8x8xbf16>,
    %56 = vector.extract_strided_slice %1 {offsets = [0, 16], sizes = [8, 8], strides = [1, 1]} : vector<8x96xbf16> to vector<8x8xbf16>
    %57 = vector.extract_strided_slice %1 {offsets = [0, 48], sizes = [8, 8], strides = [1, 1]} : vector<8x96xbf16> to vector<8x8xbf16>
    %58 = vector.extract_strided_slice %1 {offsets = [0, 80], sizes = [8, 8], strides = [1, 1]} : vector<8x96xbf16> to vector<8x8xbf16>
    %cst_21 = arith.constant dense<0.000000e+00> : vector<8x8xf32>
    %59 = tpu.matmul %56, %57, %cst_21 {dimension_numbers = #tpu.dot_dimension_numbers<[1], [1], [0], [0], [0, 0, 1, 0], [], []>} : vector<8x8xbf16>, vector<8x8xbf16>, vector<8x8xf32> -> vector<8x8xf32>
    %cst_22 = arith.constant 0.000000e+00 : f32
    %60 = vector.broadcast %cst_22 : f32 to vector<1x8xf32>
    %61 = arith.cmpf ogt, %3, %60 : vector<1x8xf32>
    %cst_23 = arith.constant -1.000000e+30 : f32
    %62 = vector.shape_cast %61 : vector<1x8xi1> to vector<1x8xi1>
    %63 = vector.broadcast %62 : vector<1x8xi1> to vector<8x8xi1>
    %64 = vector.broadcast %cst_23 : f32 to vector<8x8xf32>
    %65 = arith.select %63, %59, %64 : vector<8x8xi1>, vector<8x8xf32>
    %cst_24 = arith.constant dense<0xFF800000> : vector<8xf32>
    %66 = vector.multi_reduction <maximumf>, %65, %cst_24 [1] : vector<8x8xf32> to vector<8xf32>
    %67 = vector.shape_cast %66 : vector<8xf32> to vector<8x1xf32>
    %68 = vector.broadcast %67 : vector<8x1xf32> to vector<8x8xf32>
    %69 = arith.subf %65, %68 : vector<8x8xf32>
    %70 = math.exp %69 : vector<8x8xf32>
    %cst_25 = arith.constant dense<0.000000e+00> : vector<8xf32>
    %71 = vector.multi_reduction <add>, %70, %cst_25 [1] : vector<8x8xf32> to vector<8xf32>
    %72 = vector.shape_cast %71 : vector<8xf32> to vector<8x1xf32>
    %73 = tpu.reciprocal %72 {approx = true} : vector<8x1xf32> -> vector<8x1xf32>
    %74 = vector.broadcast %73 : vector<8x1xf32> to vector<8x8xf32>
    %75 = arith.mulf %70, %74 : vector<8x8xf32>
    %76 = arith.truncf %75 : vector<8x8xf32> to vector<8x8xbf16>
    %cst_26 = arith.constant dense<0.000000e+00> : vector<8x8xf32>
    %77 = tpu.matmul %76, %58, %cst_26 {dimension_numbers = #tpu.dot_dimension_numbers<[1], [0], [0], [1], [0, 0, 1, 1], [], []>} : vector<8x8xbf16>, vector<8x8xbf16>, vector<8x8xf32> -> vector<8x8xf32>
    %78 = arith.truncf %77 : vector<8x8xf32> to vector<8x8xbf16>
    %c0_27 = arith.constant 0 : index
    %c0_28 = arith.constant 0 : index
    %c16 = arith.constant 16 : index
    %79 = vector.load %arg3[%c0_27, %c0_28, %c16] : memref<1x8x32xbf16, #tpu.memory_space<vmem>>, vector<1x8x8xbf16>
    %80 = vector.shape_cast %79 : vector<1x8x8xbf16> to vector<8x8xbf16>
    %81 = vector.shape_cast %78 : vector<8x8xbf16> to vector<1x8x8xbf16>
    tpu.vector_store %arg3[%c0_27, %c0_28, %c16], %81 {strides = array<i32>} : memref<1x8x32xbf16, #tpu.memory_space<vmem>>, vector<1x8x8xbf16>,
    %82 = vector.extract_strided_slice %1 {offsets = [0, 24], sizes = [8, 8], strides = [1, 1]} : vector<8x96xbf16> to vector<8x8xbf16>
    %83 = vector.extract_strided_slice %1 {offsets = [0, 56], sizes = [8, 8], strides = [1, 1]} : vector<8x96xbf16> to vector<8x8xbf16>
    %84 = vector.extract_strided_slice %1 {offsets = [0, 88], sizes = [8, 8], strides = [1, 1]} : vector<8x96xbf16> to vector<8x8xbf16>
    %cst_29 = arith.constant dense<0.000000e+00> : vector<8x8xf32>
    %85 = tpu.matmul %82, %83, %cst_29 {dimension_numbers = #tpu.dot_dimension_numbers<[1], [1], [0], [0], [0, 0, 1, 0], [], []>} : vector<8x8xbf16>, vector<8x8xbf16>, vector<8x8xf32> -> vector<8x8xf32>
    %cst_30 = arith.constant 0.000000e+00 : f32
    %86 = vector.broadcast %cst_30 : f32 to vector<1x8xf32>
    %87 = arith.cmpf ogt, %3, %86 : vector<1x8xf32>
    %cst_31 = arith.constant -1.000000e+30 : f32
    %88 = vector.shape_cast %87 : vector<1x8xi1> to vector<1x8xi1>
    %89 = vector.broadcast %88 : vector<1x8xi1> to vector<8x8xi1>
    %90 = vector.broadcast %cst_31 : f32 to vector<8x8xf32>
    %91 = arith.select %89, %85, %90 : vector<8x8xi1>, vector<8x8xf32>
    %cst_32 = arith.constant dense<0xFF800000> : vector<8xf32>
    %92 = vector.multi_reduction <maximumf>, %91, %cst_32 [1] : vector<8x8xf32> to vector<8xf32>
    %93 = vector.shape_cast %92 : vector<8xf32> to vector<8x1xf32>
    %94 = vector.broadcast %93 : vector<8x1xf32> to vector<8x8xf32>
    %95 = arith.subf %91, %94 : vector<8x8xf32>
    %96 = math.exp %95 : vector<8x8xf32>
    %cst_33 = arith.constant dense<0.000000e+00> : vector<8xf32>
    %97 = vector.multi_reduction <add>, %96, %cst_33 [1] : vector<8x8xf32> to vector<8xf32>
    %98 = vector.shape_cast %97 : vector<8xf32> to vector<8x1xf32>
    %99 = tpu.reciprocal %98 {approx = true} : vector<8x1xf32> -> vector<8x1xf32>
    %100 = vector.broadcast %99 : vector<8x1xf32> to vector<8x8xf32>
    %101 = arith.mulf %96, %100 : vector<8x8xf32>
    %102 = arith.truncf %101 : vector<8x8xf32> to vector<8x8xbf16>
    %cst_34 = arith.constant dense<0.000000e+00> : vector<8x8xf32>
    %103 = tpu.matmul %102, %84, %cst_34 {dimension_numbers = #tpu.dot_dimension_numbers<[1], [0], [0], [1], [0, 0, 1, 1], [], []>} : vector<8x8xbf16>, vector<8x8xbf16>, vector<8x8xf32> -> vector<8x8xf32>
    %104 = arith.truncf %103 : vector<8x8xf32> to vector<8x8xbf16>
    %c0_35 = arith.constant 0 : index
    %c0_36 = arith.constant 0 : index
    %c24 = arith.constant 24 : index
    %105 = vector.load %arg3[%c0_35, %c0_36, %c24] : memref<1x8x32xbf16, #tpu.memory_space<vmem>>, vector<1x8x8xbf16>
    %106 = vector.shape_cast %105 : vector<1x8x8xbf16> to vector<8x8xbf16>
    %107 = vector.shape_cast %104 : vector<8x8xbf16> to vector<1x8x8xbf16>
    tpu.vector_store %arg3[%c0_35, %c0_36, %c24], %107 {strides = array<i32>} : memref<1x8x32xbf16, #tpu.memory_space<vmem>>, vector<1x8x8xbf16>,
    return
  }
  func.func @transform_0(%arg0: i32) -> (i32, i32, i32) {
    %c0_i32 = arith.constant 0 : i32
    %c0_i32_0 = arith.constant 0 : i32
    %c0_i32_1 = arith.constant 0 : i32
    return %arg0, %c0_i32, %c0_i32_0 : i32, i32, i32
  }
  func.func @transform_1(%arg0: i32) -> (i32, i32, i32) {
    %c0_i32 = arith.constant 0 : i32
    %c0_i32_0 = arith.constant 0 : i32
    %c0_i32_1 = arith.constant 0 : i32
    return %arg0, %c0_i32, %c0_i32_0 : i32, i32, i32
  }
  func.func @transform_2(%arg0: i32) -> (i32, i32, i32) {
    %c0_i32 = arith.constant 0 : i32
    %c0_i32_0 = arith.constant 0 : i32
    %c0_i32_1 = arith.constant 0 : i32
    return %arg0, %c0_i32, %c0_i32_0 : i32, i32, i32
  }
}

module attributes {stable_mosaic.version = 11 : i64} {
  func.func @_matmul_kernel(%arg0: i32, %arg1: i32, %arg2: i32, %arg3: memref<16x32xbf16, #tpu.memory_space<vmem>>, %arg4: memref<32x64xbf16, #tpu.memory_space<vmem>>, %arg5: memref<1x64xf32, #tpu.memory_space<vmem>>, %arg6: memref<16x64xbf16, #tpu.memory_space<vmem>>, %arg7: memref<16x64xf32, #tpu.memory_space<vmem>>) attributes {dimension_semantics = [#tpu.dimension_semantics<parallel>, #tpu.dimension_semantics<parallel>, #tpu.dimension_semantics<arbitrary>], iteration_bounds = array<i64: 1, 1, 1>, scalar_prefetch = 0 : i64, scratch_operands = 1 : i64, tpu.core_type = #tpu.core_type<tc>, window_params = [{transform_indices = @transform_0, window_bounds = array<i64: 16, 32>}, {transform_indices = @transform_1, window_bounds = array<i64: 32, 64>}, {transform_indices = @transform_2, window_bounds = array<i64: 1, 64>}, {transform_indices = @transform_3, window_bounds = array<i64: 16, 64>}]} {
    %c0_i32 = arith.constant 0 : i32
    %0 = arith.cmpi eq, %arg2, %c0_i32 : i32
    %1 = arith.extui %0 : i1 to i32
    %c0_i32_0 = arith.constant 0 : i32
    %2 = arith.cmpi ne, %1, %c0_i32_0 : i32
    scf.if %2 {
      %cst_10 = arith.constant 0.000000e+00 : f32
      %12 = vector.broadcast %cst_10 : f32 to vector<16x64xf32>
      %c0_11 = arith.constant 0 : index
      %c0_12 = arith.constant 0 : index
      %13 = vector.load %arg7[%c0_11, %c0_12] : memref<16x64xf32, #tpu.memory_space<vmem>>, vector<16x64xf32>
      tpu.vector_store %arg7[%c0_11, %c0_12], %12 {strides = array<i32>} : memref<16x64xf32, #tpu.memory_space<vmem>>, vector<16x64xf32>,
    } else {
    }
    %c0 = arith.constant 0 : index
    %c0_1 = arith.constant 0 : index
    %3 = vector.load %arg7[%c0, %c0_1] : memref<16x64xf32, #tpu.memory_space<vmem>>, vector<16x64xf32>
    %c0_2 = arith.constant 0 : index
    %c0_3 = arith.constant 0 : index
    %4 = vector.load %arg3[%c0_2, %c0_3] : memref<16x32xbf16, #tpu.memory_space<vmem>>, vector<16x32xbf16>
    %c0_4 = arith.constant 0 : index
    %c0_5 = arith.constant 0 : index
    %5 = vector.load %arg4[%c0_4, %c0_5] : memref<32x64xbf16, #tpu.memory_space<vmem>>, vector<32x64xbf16>
    %cst = arith.constant dense<0.000000e+00> : vector<16x64xf32>
    %6 = tpu.matmul %4, %5, %cst {dimension_numbers = #tpu.dot_dimension_numbers<[1], [0], [0], [1], [0, 0, 1, 1], [], []>} : vector<16x32xbf16>, vector<32x64xbf16>, vector<16x64xf32> -> vector<16x64xf32>
    %7 = arith.addf %3, %6 : vector<16x64xf32>
    %c0_6 = arith.constant 0 : index
    %c0_7 = arith.constant 0 : index
    %8 = vector.load %arg7[%c0_6, %c0_7] : memref<16x64xf32, #tpu.memory_space<vmem>>, vector<16x64xf32>
    tpu.vector_store %arg7[%c0_6, %c0_7], %7 {strides = array<i32>} : memref<16x64xf32, #tpu.memory_space<vmem>>, vector<16x64xf32>,
    %c0_i32_8 = arith.constant 0 : i32
    %9 = arith.cmpi eq, %arg2, %c0_i32_8 : i32
    %10 = arith.extui %9 : i1 to i32
    %c0_i32_9 = arith.constant 0 : i32
    %11 = arith.cmpi ne, %10, %c0_i32_9 : i32
    scf.if %11 {
      %c0_10 = arith.constant 0 : index
      %c0_11 = arith.constant 0 : index
      %12 = vector.load %arg7[%c0_10, %c0_11] : memref<16x64xf32, #tpu.memory_space<vmem>>, vector<16x64xf32>
      %c0_12 = arith.constant 0 : index
      %c0_13 = arith.constant 0 : index
      %13 = vector.load %arg5[%c0_12, %c0_13] : memref<1x64xf32, #tpu.memory_space<vmem>>, vector<1x64xf32>
      %14 = vector.broadcast %13 : vector<1x64xf32> to vector<16x64xf32>
      %15 = arith.addf %12, %14 : vector<16x64xf32>
      %cst_14 = arith.constant 0.000000e+00 : f32
      %16 = vector.broadcast %cst_14 : f32 to vector<16x64xf32>
      %17 = arith.maximumf %15, %16 : vector<16x64xf32>
      %18 = arith.truncf %17 : vector<16x64xf32> to vector<16x64xbf16>
      %c0_15 = arith.constant 0 : index
      %c0_16 = arith.constant 0 : index
      %19 = vector.load %arg6[%c0_15, %c0_16] : memref<16x64xbf16, #tpu.memory_space<vmem>>, vector<16x64xbf16>
      tpu.vector_store %arg6[%c0_15, %c0_16], %18 {strides = array<i32>} : memref<16x64xbf16, #tpu.memory_space<vmem>>, vector<16x64xbf16>,
    } else {
    }
    return
  }
  func.func @transform_0(%arg0: i32, %arg1: i32, %arg2: i32) -> (i32, i32) {
    %c0_i32 = arith.constant 0 : i32
    return %arg0, %arg2 : i32, i32
  }
  func.func @transform_1(%arg0: i32, %arg1: i32, %arg2: i32) -> (i32, i32) {
    %c0_i32 = arith.constant 0 : i32
    return %arg2, %arg1 : i32, i32
  }
  func.func @transform_2(%arg0: i32, %arg1: i32, %arg2: i32) -> (i32, i32) {
    %c0_i32 = arith.constant 0 : i32
    %c0_i32_0 = arith.constant 0 : i32
    return %c0_i32, %arg1 : i32, i32
  }
  func.func @transform_3(%arg0: i32, %arg1: i32, %arg2: i32) -> (i32, i32) {
    %c0_i32 = arith.constant 0 : i32
    return %arg0, %arg1 : i32, i32
  }
}

module attributes {stable_mosaic.version = 11 : i64} {
  func.func @_matmul_kernel(%arg0: i32, %arg1: i32, %arg2: i32, %arg3: memref<16x32xbf16, #tpu.memory_space<vmem>>, %arg4: memref<32x256xbf16, #tpu.memory_space<vmem>>, %arg5: memref<1x256xf32, #tpu.memory_space<vmem>>, %arg6: memref<16x256xf32, #tpu.memory_space<vmem>>, %arg7: memref<16x256xf32, #tpu.memory_space<vmem>>) attributes {dimension_semantics = [#tpu.dimension_semantics<parallel>, #tpu.dimension_semantics<parallel>, #tpu.dimension_semantics<arbitrary>], iteration_bounds = array<i64: 1, 1, 1>, scalar_prefetch = 0 : i64, scratch_operands = 1 : i64, tpu.core_type = #tpu.core_type<tc>, window_params = [{transform_indices = @transform_0, window_bounds = array<i64: 16, 32>}, {transform_indices = @transform_1, window_bounds = array<i64: 32, 256>}, {transform_indices = @transform_2, window_bounds = array<i64: 1, 256>}, {transform_indices = @transform_3, window_bounds = array<i64: 16, 256>}]} {
    %c0_i32 = arith.constant 0 : i32
    %0 = arith.cmpi eq, %arg2, %c0_i32 : i32
    %1 = arith.extui %0 : i1 to i32
    %c0_i32_0 = arith.constant 0 : i32
    %2 = arith.cmpi ne, %1, %c0_i32_0 : i32
    scf.if %2 {
      %cst_10 = arith.constant 0.000000e+00 : f32
      %12 = vector.broadcast %cst_10 : f32 to vector<16x256xf32>
      %c0_11 = arith.constant 0 : index
      %c0_12 = arith.constant 0 : index
      %13 = vector.load %arg7[%c0_11, %c0_12] : memref<16x256xf32, #tpu.memory_space<vmem>>, vector<16x256xf32>
      tpu.vector_store %arg7[%c0_11, %c0_12], %12 {strides = array<i32>} : memref<16x256xf32, #tpu.memory_space<vmem>>, vector<16x256xf32>,
    } else {
    }
    %c0 = arith.constant 0 : index
    %c0_1 = arith.constant 0 : index
    %3 = vector.load %arg7[%c0, %c0_1] : memref<16x256xf32, #tpu.memory_space<vmem>>, vector<16x256xf32>
    %c0_2 = arith.constant 0 : index
    %c0_3 = arith.constant 0 : index
    %4 = vector.load %arg3[%c0_2, %c0_3] : memref<16x32xbf16, #tpu.memory_space<vmem>>, vector<16x32xbf16>
    %c0_4 = arith.constant 0 : index
    %c0_5 = arith.constant 0 : index
    %5 = vector.load %arg4[%c0_4, %c0_5] : memref<32x256xbf16, #tpu.memory_space<vmem>>, vector<32x256xbf16>
    %cst = arith.constant dense<0.000000e+00> : vector<16x256xf32>
    %6 = tpu.matmul %4, %5, %cst {dimension_numbers = #tpu.dot_dimension_numbers<[1], [0], [0], [1], [0, 0, 1, 1], [], []>} : vector<16x32xbf16>, vector<32x256xbf16>, vector<16x256xf32> -> vector<16x256xf32>
    %7 = arith.addf %3, %6 : vector<16x256xf32>
    %c0_6 = arith.constant 0 : index
    %c0_7 = arith.constant 0 : index
    %8 = vector.load %arg7[%c0_6, %c0_7] : memref<16x256xf32, #tpu.memory_space<vmem>>, vector<16x256xf32>
    tpu.vector_store %arg7[%c0_6, %c0_7], %7 {strides = array<i32>} : memref<16x256xf32, #tpu.memory_space<vmem>>, vector<16x256xf32>,
    %c0_i32_8 = arith.constant 0 : i32
    %9 = arith.cmpi eq, %arg2, %c0_i32_8 : i32
    %10 = arith.extui %9 : i1 to i32
    %c0_i32_9 = arith.constant 0 : i32
    %11 = arith.cmpi ne, %10, %c0_i32_9 : i32
    scf.if %11 {
      %c0_10 = arith.constant 0 : index
      %c0_11 = arith.constant 0 : index
      %12 = vector.load %arg7[%c0_10, %c0_11] : memref<16x256xf32, #tpu.memory_space<vmem>>, vector<16x256xf32>
      %c0_12 = arith.constant 0 : index
      %c0_13 = arith.constant 0 : index
      %13 = vector.load %arg5[%c0_12, %c0_13] : memref<1x256xf32, #tpu.memory_space<vmem>>, vector<1x256xf32>
      %14 = vector.broadcast %13 : vector<1x256xf32> to vector<16x256xf32>
      %15 = arith.addf %12, %14 : vector<16x256xf32>
      %16 = vector.extract_strided_slice %15 {offsets = [0, 0], sizes = [16, 128], strides = [1, 1]} : vector<16x256xf32> to vector<16x128xf32>
      %cst_14 = arith.constant dense<0xFF800000> : vector<16xf32>
      %17 = vector.multi_reduction <maximumf>, %16, %cst_14 [1] : vector<16x128xf32> to vector<16xf32>
      %18 = vector.shape_cast %17 : vector<16xf32> to vector<16x1xf32>
      %19 = vector.broadcast %18 : vector<16x1xf32> to vector<16x128xf32>
      %20 = arith.subf %16, %19 : vector<16x128xf32>
      %21 = math.exp %20 : vector<16x128xf32>
      %cst_15 = arith.constant dense<0.000000e+00> : vector<16xf32>
      %22 = vector.multi_reduction <add>, %21, %cst_15 [1] : vector<16x128xf32> to vector<16xf32>
      %23 = vector.shape_cast %22 : vector<16xf32> to vector<16x1xf32>
      %24 = math.log %23 : vector<16x1xf32>
      %25 = vector.broadcast %24 : vector<16x1xf32> to vector<16x128xf32>
      %26 = arith.subf %20, %25 : vector<16x128xf32>
      %c0_16 = arith.constant 0 : index
      %c0_17 = arith.constant 0 : index
      %27 = vector.load %arg6[%c0_16, %c0_17] : memref<16x256xf32, #tpu.memory_space<vmem>>, vector<16x128xf32>
      tpu.vector_store %arg6[%c0_16, %c0_17], %26 {strides = array<i32>} : memref<16x256xf32, #tpu.memory_space<vmem>>, vector<16x128xf32>,
      %28 = vector.extract_strided_slice %15 {offsets = [0, 128], sizes = [16, 128], strides = [1, 1]} : vector<16x256xf32> to vector<16x128xf32>
      %cst_18 = arith.constant dense<0xFF800000> : vector<16xf32>
      %29 = vector.multi_reduction <maximumf>, %28, %cst_18 [1] : vector<16x128xf32> to vector<16xf32>
      %30 = vector.shape_cast %29 : vector<16xf32> to vector<16x1xf32>
      %31 = vector.broadcast %30 : vector<16x1xf32> to vector<16x128xf32>
      %32 = arith.subf %28, %31 : vector<16x128xf32>
      %33 = math.exp %32 : vector<16x128xf32>
      %cst_19 = arith.constant dense<0.000000e+00> : vector<16xf32>
      %34 = vector.multi_reduction <add>, %33, %cst_19 [1] : vector<16x128xf32> to vector<16xf32>
      %35 = vector.shape_cast %34 : vector<16xf32> to vector<16x1xf32>
      %36 = math.log %35 : vector<16x1xf32>
      %37 = vector.broadcast %36 : vector<16x1xf32> to vector<16x128xf32>
      %38 = arith.subf %32, %37 : vector<16x128xf32>
      %c0_20 = arith.constant 0 : index
      %c128 = arith.constant 128 : index
      %39 = vector.load %arg6[%c0_20, %c128] : memref<16x256xf32, #tpu.memory_space<vmem>>, vector<16x128xf32>
      tpu.vector_store %arg6[%c0_20, %c128], %38 {strides = array<i32>} : memref<16x256xf32, #tpu.memory_space<vmem>>, vector<16x128xf32>,
    } else {
    }
    return
  }
  func.func @transform_0(%arg0: i32, %arg1: i32, %arg2: i32) -> (i32, i32) {
    %c0_i32 = arith.constant 0 : i32
    return %arg0, %arg2 : i32, i32
  }
  func.func @transform_1(%arg0: i32, %arg1: i32, %arg2: i32) -> (i32, i32) {
    %c0_i32 = arith.constant 0 : i32
    return %arg2, %arg1 : i32, i32
  }
  func.func @transform_2(%arg0: i32, %arg1: i32, %arg2: i32) -> (i32, i32) {
    %c0_i32 = arith.constant 0 : i32
    %c0_i32_0 = arith.constant 0 : i32
    return %c0_i32, %arg1 : i32, i32
  }
  func.func @transform_3(%arg0: i32, %arg1: i32, %arg2: i32) -> (i32, i32) {
    %c0_i32 = arith.constant 0 : i32
    return %arg0, %arg1 : i32, i32
  }
}

module attributes {stable_mosaic.version = 11 : i64} {
  func.func @_matmul_res_ln_kernel(%arg0: i32, %arg1: i32, %arg2: memref<16x64xbf16, #tpu.memory_space<vmem>>, %arg3: memref<64x32xbf16, #tpu.memory_space<vmem>>, %arg4: memref<1x32xf32, #tpu.memory_space<vmem>>, %arg5: memref<16x32xbf16, #tpu.memory_space<vmem>>, %arg6: memref<1x32xf32, #tpu.memory_space<vmem>>, %arg7: memref<1x32xf32, #tpu.memory_space<vmem>>, %arg8: memref<16x32xbf16, #tpu.memory_space<vmem>>, %arg9: memref<16x32xf32, #tpu.memory_space<vmem>>) attributes {dimension_semantics = [#tpu.dimension_semantics<parallel>, #tpu.dimension_semantics<arbitrary>], iteration_bounds = array<i64: 1, 1>, scalar_prefetch = 0 : i64, scratch_operands = 1 : i64, tpu.core_type = #tpu.core_type<tc>, window_params = [{transform_indices = @transform_0, window_bounds = array<i64: 16, 64>}, {transform_indices = @transform_1, window_bounds = array<i64: 64, 32>}, {pipeline_mode = #tpu.pipeline_mode<synchronous>, transform_indices = @transform_2, window_bounds = array<i64: 1, 32>}, {transform_indices = @transform_3, window_bounds = array<i64: 16, 32>}, {pipeline_mode = #tpu.pipeline_mode<synchronous>, transform_indices = @transform_4, window_bounds = array<i64: 1, 32>}, {pipeline_mode = #tpu.pipeline_mode<synchronous>, transform_indices = @transform_5, window_bounds = array<i64: 1, 32>}, {transform_indices = @transform_6, window_bounds = array<i64: 16, 32>}]} {
    %c0_i32 = arith.constant 0 : i32
    %0 = arith.cmpi eq, %arg1, %c0_i32 : i32
    %1 = arith.extui %0 : i1 to i32
    %c0_i32_0 = arith.constant 0 : i32
    %2 = arith.cmpi ne, %1, %c0_i32_0 : i32
    scf.if %2 {
      %cst_10 = arith.constant 0.000000e+00 : f32
      %12 = vector.broadcast %cst_10 : f32 to vector<16x32xf32>
      %c0_11 = arith.constant 0 : index
      %c0_12 = arith.constant 0 : index
      %13 = vector.load %arg9[%c0_11, %c0_12] : memref<16x32xf32, #tpu.memory_space<vmem>>, vector<16x32xf32>
      tpu.vector_store %arg9[%c0_11, %c0_12], %12 {strides = array<i32>} : memref<16x32xf32, #tpu.memory_space<vmem>>, vector<16x32xf32>,
    } else {
    }
    %c0 = arith.constant 0 : index
    %c0_1 = arith.constant 0 : index
    %3 = vector.load %arg9[%c0, %c0_1] : memref<16x32xf32, #tpu.memory_space<vmem>>, vector<16x32xf32>
    %c0_2 = arith.constant 0 : index
    %c0_3 = arith.constant 0 : index
    %4 = vector.load %arg2[%c0_2, %c0_3] : memref<16x64xbf16, #tpu.memory_space<vmem>>, vector<16x64xbf16>
    %c0_4 = arith.constant 0 : index
    %c0_5 = arith.constant 0 : index
    %5 = vector.load %arg3[%c0_4, %c0_5] : memref<64x32xbf16, #tpu.memory_space<vmem>>, vector<64x32xbf16>
    %cst = arith.constant dense<0.000000e+00> : vector<16x32xf32>
    %6 = tpu.matmul %4, %5, %cst {dimension_numbers = #tpu.dot_dimension_numbers<[1], [0], [0], [1], [0, 0, 1, 1], [], []>} : vector<16x64xbf16>, vector<64x32xbf16>, vector<16x32xf32> -> vector<16x32xf32>
    %7 = arith.addf %3, %6 : vector<16x32xf32>
    %c0_6 = arith.constant 0 : index
    %c0_7 = arith.constant 0 : index
    %8 = vector.load %arg9[%c0_6, %c0_7] : memref<16x32xf32, #tpu.memory_space<vmem>>, vector<16x32xf32>
    tpu.vector_store %arg9[%c0_6, %c0_7], %7 {strides = array<i32>} : memref<16x32xf32, #tpu.memory_space<vmem>>, vector<16x32xf32>,
    %c0_i32_8 = arith.constant 0 : i32
    %9 = arith.cmpi eq, %arg1, %c0_i32_8 : i32
    %10 = arith.extui %9 : i1 to i32
    %c0_i32_9 = arith.constant 0 : i32
    %11 = arith.cmpi ne, %10, %c0_i32_9 : i32
    scf.if %11 {
      %c0_10 = arith.constant 0 : index
      %c0_11 = arith.constant 0 : index
      %12 = vector.load %arg9[%c0_10, %c0_11] : memref<16x32xf32, #tpu.memory_space<vmem>>, vector<16x32xf32>
      %c0_12 = arith.constant 0 : index
      %c0_13 = arith.constant 0 : index
      %13 = vector.load %arg4[%c0_12, %c0_13] : memref<1x32xf32, #tpu.memory_space<vmem>>, vector<1x32xf32>
      %14 = vector.broadcast %13 : vector<1x32xf32> to vector<16x32xf32>
      %15 = arith.addf %12, %14 : vector<16x32xf32>
      %c0_14 = arith.constant 0 : index
      %c0_15 = arith.constant 0 : index
      %16 = vector.load %arg5[%c0_14, %c0_15] : memref<16x32xbf16, #tpu.memory_space<vmem>>, vector<16x32xbf16>
      %17 = arith.extf %16 : vector<16x32xbf16> to vector<16x32xf32>
      %18 = arith.addf %15, %17 : vector<16x32xf32>
      %cst_16 = arith.constant dense<0.000000e+00> : vector<16xf32>
      %19 = vector.multi_reduction <add>, %18, %cst_16 [1] : vector<16x32xf32> to vector<16xf32>
      %20 = vector.shape_cast %19 : vector<16xf32> to vector<16x1xf32>
      %cst_17 = arith.constant 3.200000e+01 : f32
      %21 = vector.broadcast %cst_17 : f32 to vector<16x1xf32>
      %22 = arith.divf %20, %21 : vector<16x1xf32>
      %23 = vector.broadcast %22 : vector<16x1xf32> to vector<16x32xf32>
      %24 = arith.subf %18, %23 : vector<16x32xf32>
      %25 = arith.mulf %24, %24 : vector<16x32xf32>
      %cst_18 = arith.constant dense<0.000000e+00> : vector<16xf32>
      %26 = vector.multi_reduction <add>, %25, %cst_18 [1] : vector<16x32xf32> to vector<16xf32>
      %27 = vector.shape_cast %26 : vector<16xf32> to vector<16x1xf32>
      %cst_19 = arith.constant 3.200000e+01 : f32
      %28 = vector.broadcast %cst_19 : f32 to vector<16x1xf32>
      %29 = arith.divf %27, %28 : vector<16x1xf32>
      %30 = vector.broadcast %22 : vector<16x1xf32> to vector<16x32xf32>
      %31 = arith.subf %18, %30 : vector<16x32xf32>
      %cst_20 = arith.constant 9.99999974E-6 : f32
      %32 = vector.broadcast %cst_20 : f32 to vector<16x1xf32>
      %33 = arith.addf %29, %32 : vector<16x1xf32>
      %34 = math.rsqrt %33 : vector<16x1xf32>
      %35 = vector.broadcast %34 : vector<16x1xf32> to vector<16x32xf32>
      %36 = arith.mulf %31, %35 : vector<16x32xf32>
      %c0_21 = arith.constant 0 : index
      %c0_22 = arith.constant 0 : index
      %37 = vector.load %arg6[%c0_21, %c0_22] : memref<1x32xf32, #tpu.memory_space<vmem>>, vector<1x32xf32>
      %38 = vector.broadcast %37 : vector<1x32xf32> to vector<16x32xf32>
      %39 = arith.mulf %36, %38 : vector<16x32xf32>
      %c0_23 = arith.constant 0 : index
      %c0_24 = arith.constant 0 : index
      %40 = vector.load %arg7[%c0_23, %c0_24] : memref<1x32xf32, #tpu.memory_space<vmem>>, vector<1x32xf32>
      %41 = vector.broadcast %40 : vector<1x32xf32> to vector<16x32xf32>
      %42 = arith.addf %39, %41 : vector<16x32xf32>
      %43 = arith.truncf %42 : vector<16x32xf32> to vector<16x32xbf16>
      %c0_25 = arith.constant 0 : index
      %c0_26 = arith.constant 0 : index
      %44 = vector.load %arg8[%c0_25, %c0_26] : memref<16x32xbf16, #tpu.memory_space<vmem>>, vector<16x32xbf16>
      tpu.vector_store %arg8[%c0_25, %c0_26], %43 {strides = array<i32>} : memref<16x32xbf16, #tpu.memory_space<vmem>>, vector<16x32xbf16>,
    } else {
    }
    return
  }
  func.func @transform_0(%arg0: i32, %arg1: i32) -> (i32, i32) {
    %c0_i32 = arith.constant 0 : i32
    return %arg0, %arg1 : i32, i32
  }
  func.func @transform_1(%arg0: i32, %arg1: i32) -> (i32, i32) {
    %c0_i32 = arith.constant 0 : i32
    %c0_i32_0 = arith.constant 0 : i32
    return %arg1, %c0_i32 : i32, i32
  }
  func.func @transform_2(%arg0: i32, %arg1: i32) -> (i32, i32) {
    %c0_i32 = arith.constant 0 : i32
    %c0_i32_0 = arith.constant 0 : i32
    %c0_i32_1 = arith.constant 0 : i32
    return %c0_i32, %c0_i32_0 : i32, i32
  }
  func.func @transform_3(%arg0: i32, %arg1: i32) -> (i32, i32) {
    %c0_i32 = arith.constant 0 : i32
    %c0_i32_0 = arith.constant 0 : i32
    return %arg0, %c0_i32 : i32, i32
  }
  func.func @transform_4(%arg0: i32, %arg1: i32) -> (i32, i32) {
    %c0_i32 = arith.constant 0 : i32
    %c0_i32_0 = arith.constant 0 : i32
    %c0_i32_1 = arith.constant 0 : i32
    return %c0_i32, %c0_i32_0 : i32, i32
  }
  func.func @transform_5(%arg0: i32, %arg1: i32) -> (i32, i32) {
    %c0_i32 = arith.constant 0 : i32
    %c0_i32_0 = arith.constant 0 : i32
    %c0_i32_1 = arith.constant 0 : i32
    return %c0_i32, %c0_i32_0 : i32, i32
  }
  func.func @transform_6(%arg0: i32, %arg1: i32) -> (i32, i32) {
    %c0_i32 = arith.constant 0 : i32
    %c0_i32_0 = arith.constant 0 : i32
    return %arg0, %c0_i32 : i32, i32
  }
}

module attributes {stable_mosaic.version = 11 : i64} {
  func.func @_crf_kernel(%arg0: i32, %arg1: memref<8x2x128xf32, #tpu.memory_space<vmem>>, %arg2: memref<1x8x2xi32, #tpu.memory_space<vmem>>, %arg3: memref<8x2x1xf32, #tpu.memory_space<vmem>>, %arg4: memref<1x128x128xf32, #tpu.memory_space<vmem>>, %arg5: memref<1x128x128xf32, #tpu.memory_space<vmem>>, %arg6: memref<1x1x128xf32, #tpu.memory_space<vmem>>, %arg7: memref<1x1x128xf32, #tpu.memory_space<vmem>>, %arg8: memref<1x2x1xf32, #tpu.memory_space<vmem>>) attributes {dimension_semantics = [#tpu.dimension_semantics<parallel>], iteration_bounds = array<i64: 2>, scalar_prefetch = 0 : i64, scratch_operands = 0 : i64, tpu.core_type = #tpu.core_type<tc>, window_params = [{transform_indices = @transform_0, window_bounds = array<i64: 8, 2, 128>}, {transform_indices = @transform_1, window_bounds = array<i64: 1, 8, 2>}, {pipeline_mode = #tpu.pipeline_mode<synchronous>, transform_indices = @transform_2, window_bounds = array<i64: 8, 2, 1>}, {transform_indices = @transform_3, window_bounds = array<i64: 1, 128, 128>}, {transform_indices = @transform_4, window_bounds = array<i64: 1, 128, 128>}, {transform_indices = @transform_5, window_bounds = array<i64: 1, 1, 128>}, {transform_indices = @transform_6, window_bounds = array<i64: 1, 1, 128>}, {transform_indices = @transform_7, window_bounds = array<i64: 1, 2, 1>}]} {
    %c0 = arith.constant 0 : index
    %c0_0 = arith.constant 0 : index
    %c0_1 = arith.constant 0 : index
    %0 = vector.load %arg4[%c0, %c0_0, %c0_1] : memref<1x128x128xf32, #tpu.memory_space<vmem>>, vector<1x128x128xf32>
    %1 = vector.shape_cast %0 : vector<1x128x128xf32> to vector<128x128xf32>
    %2 = vector.extract_strided_slice %1 {offsets = [0, 0], sizes = [16, 16], strides = [1, 1]} : vector<128x128xf32> to vector<16x16xf32>
    %c0_2 = arith.constant 0 : index
    %c0_3 = arith.constant 0 : index
    %c0_4 = arith.constant 0 : index
    %3 = vector.load %arg5[%c0_2, %c0_3, %c0_4] : memref<1x128x128xf32, #tpu.memory_space<vmem>>, vector<1x128x128xf32>
    %4 = vector.shape_cast %3 : vector<1x128x128xf32> to vector<128x128xf32>
    %5 = vector.extract_strided_slice %4 {offsets = [0, 0], sizes = [16, 16], strides = [1, 1]} : vector<128x128xf32> to vector<16x16xf32>
    %c0_5 = arith.constant 0 : index
    %c0_6 = arith.constant 0 : index
    %c0_7 = arith.constant 0 : index
    %6 = vector.load %arg6[%c0_5, %c0_6, %c0_7] : memref<1x1x128xf32, #tpu.memory_space<vmem>>, vector<1x1x128xf32>
    %7 = vector.shape_cast %6 : vector<1x1x128xf32> to vector<1x128xf32>
    %8 = vector.extract_strided_slice %7 {offsets = [0, 0], sizes = [1, 16], strides = [1, 1]} : vector<1x128xf32> to vector<1x16xf32>
    %c0_8 = arith.constant 0 : index
    %c0_9 = arith.constant 0 : index
    %c0_10 = arith.constant 0 : index
    %9 = vector.load %arg7[%c0_8, %c0_9, %c0_10] : memref<1x1x128xf32, #tpu.memory_space<vmem>>, vector<1x1x128xf32>
    %10 = vector.shape_cast %9 : vector<1x1x128xf32> to vector<1x128xf32>
    %11 = vector.extract_strided_slice %10 {offsets = [0, 0], sizes = [1, 16], strides = [1, 1]} : vector<1x128xf32> to vector<1x16xf32>
    %c0_11 = arith.constant 0 : index
    %c0_12 = arith.constant 0 : index
    %c0_13 = arith.constant 0 : index
    %12 = vector.load %arg1[%c0_11, %c0_12, %c0_13] : memref<8x2x128xf32, #tpu.memory_space<vmem>>, vector<1x2x128xf32>
    %13 = vector.shape_cast %12 : vector<1x2x128xf32> to vector<2x128xf32>
    %14 = vector.extract_strided_slice %13 {offsets = [0, 0], sizes = [2, 16], strides = [1, 1]} : vector<2x128xf32> to vector<2x16xf32>
    %15 = vector.broadcast %8 : vector<1x16xf32> to vector<2x16xf32>
    %16 = arith.addf %14, %15 : vector<2x16xf32>
    %c1_i32 = arith.constant 1 : i32
    %c7_i32 = arith.constant 7 : i32
    %17 = arith.addi %c1_i32, %c7_i32 : i32
    %c1_i32_14 = arith.constant 1 : i32
    %18 = scf.for %arg9 = %c1_i32 to %17 step %c1_i32_14 iter_args(%arg10 = %16) -> (vector<2x16xf32>)  : i32 {
      %90 = arith.index_cast %arg9 : i32 to index
      %c0_39 = arith.constant 0 : index
      %c0_40 = arith.constant 0 : index
      %91 = vector.load %arg1[%90, %c0_39, %c0_40] : memref<8x2x128xf32, #tpu.memory_space<vmem>>, vector<1x2x128xf32>
      %92 = vector.shape_cast %91 : vector<1x2x128xf32> to vector<2x128xf32>
      %93 = vector.extract_strided_slice %92 {offsets = [0, 0], sizes = [2, 16], strides = [1, 1]} : vector<2x128xf32> to vector<2x16xf32>
      %94 = arith.index_cast %arg9 : i32 to index
      %c0_41 = arith.constant 0 : index
      %c0_42 = arith.constant 0 : index
      %95 = vector.load %arg3[%94, %c0_41, %c0_42] : memref<8x2x1xf32, #tpu.memory_space<vmem>>, vector<1x2x1xf32>
      %96 = vector.shape_cast %95 : vector<1x2x1xf32> to vector<2x1xf32>
      %97 = vector.shape_cast %arg10 : vector<2x16xf32> to vector<2x1x16xf32>
      %98 = vector.shape_cast %5 : vector<16x16xf32> to vector<1x16x16xf32>
      %99 = vector.broadcast %97 : vector<2x1x16xf32> to vector<2x16x16xf32>
      %100 = vector.broadcast %98 : vector<1x16x16xf32> to vector<2x16x16xf32>
      %101 = arith.addf %99, %100 : vector<2x16x16xf32>
      %cst_43 = arith.constant dense<0xFF800000> : vector<2x16xf32>
      %102 = vector.multi_reduction <maximumf>, %101, %cst_43 [2] : vector<2x16x16xf32> to vector<2x16xf32>
      %103 = vector.shape_cast %102 : vector<2x16xf32> to vector<2x16x1xf32>
      %104 = vector.broadcast %103 : vector<2x16x1xf32> to vector<2x16x16xf32>
      %105 = arith.subf %101, %104 : vector<2x16x16xf32>
      %106 = math.exp %105 : vector<2x16x16xf32>
      %cst_44 = arith.constant dense<0.000000e+00> : vector<2x16xf32>
      %107 = vector.multi_reduction <add>, %106, %cst_44 [2] : vector<2x16x16xf32> to vector<2x16xf32>
      %108 = math.log %107 : vector<2x16xf32>
      %109 = vector.shape_cast %103 : vector<2x16x1xf32> to vector<2x16xf32>
      %110 = arith.addf %108, %109 : vector<2x16xf32>
      %cst_45 = arith.constant 0.000000e+00 : f32
      %111 = vector.broadcast %cst_45 : f32 to vector<2x1xf32>
      %112 = arith.cmpf ogt, %96, %111 : vector<2x1xf32>
      %113 = arith.addf %110, %93 : vector<2x16xf32>
      %114 = vector.shape_cast %112 : vector<2x1xi1> to vector<2x1xi1>
      %115 = vector.broadcast %114 : vector<2x1xi1> to vector<2x16xi1>
      %116 = arith.select %115, %113, %arg10 : vector<2x16xi1>, vector<2x16xf32>
      scf.yield %116 : vector<2x16xf32>
    }
    %c7_i32_15 = arith.constant 7 : i32
    %19 = vector.broadcast %11 : vector<1x16xf32> to vector<2x16xf32>
    %20 = arith.addf %18, %19 : vector<2x16xf32>
    %cst = arith.constant dense<0xFF800000> : vector<2xf32>
    %21 = vector.multi_reduction <maximumf>, %20, %cst [1] : vector<2x16xf32> to vector<2xf32>
    %22 = vector.shape_cast %21 : vector<2xf32> to vector<2x1xf32>
    %23 = vector.broadcast %22 : vector<2x1xf32> to vector<2x16xf32>
    %24 = arith.subf %20, %23 : vector<2x16xf32>
    %25 = math.exp %24 : vector<2x16xf32>
    %cst_16 = arith.constant dense<0.000000e+00> : vector<2xf32>
    %26 = vector.multi_reduction <add>, %25, %cst_16 [1] : vector<2x16xf32> to vector<2xf32>
    %27 = vector.shape_cast %26 : vector<2xf32> to vector<2x1xf32>
    %28 = math.log %27 : vector<2x1xf32>
    %29 = arith.addf %28, %22 : vector<2x1xf32>
    %c0_17 = arith.constant 0 : index
    %c0_18 = arith.constant 0 : index
    %c0_19 = arith.constant 0 : index
    %30 = vector.load %arg1[%c0_17, %c0_18, %c0_19] : memref<8x2x128xf32, #tpu.memory_space<vmem>>, vector<8x2x128xf32>
    %31 = vector.extract_strided_slice %30 {offsets = [0, 0, 0], sizes = [8, 2, 16], strides = [1, 1, 1]} : vector<8x2x128xf32> to vector<8x2x16xf32>
    %c0_20 = arith.constant 0 : index
    %c0_21 = arith.constant 0 : index
    %c0_22 = arith.constant 0 : index
    %32 = vector.load %arg2[%c0_20, %c0_21, %c0_22] : memref<1x8x2xi32, #tpu.memory_space<vmem>>, vector<1x8x2xi32>
    %33 = vector.shape_cast %32 : vector<1x8x2xi32> to vector<8x2xi32>
    %c0_23 = arith.constant 0 : index
    %c0_24 = arith.constant 0 : index
    %c0_25 = arith.constant 0 : index
    %34 = vector.load %arg3[%c0_23, %c0_24, %c0_25] : memref<8x2x1xf32, #tpu.memory_space<vmem>>, vector<8x2x1xf32>
    %35 = tpu.iota {dimensions = array<i32: 2>} : vector<8x2x16xi32>
    %36 = vector.shape_cast %33 : vector<8x2xi32> to vector<8x2x1xi32>
    %37 = vector.broadcast %36 : vector<8x2x1xi32> to vector<8x2x16xi32>
    %38 = arith.cmpi eq, %37, %35 : vector<8x2x16xi32>
    %39 = arith.extui %38 : vector<8x2x16xi1> to vector<8x2x16xi32>
    %40 = arith.sitofp %39 : vector<8x2x16xi32> to vector<8x2x16xf32>
    %41 = arith.mulf %40, %31 : vector<8x2x16xf32>
    %cst_26 = arith.constant dense<0.000000e+00> : vector<8x2xf32>
    %42 = vector.multi_reduction <add>, %41, %cst_26 [2] : vector<8x2x16xf32> to vector<8x2xf32>
    %43 = vector.shape_cast %42 : vector<8x2xf32> to vector<8x2x1xf32>
    %44 = arith.mulf %43, %34 : vector<8x2x1xf32>
    %cst_27 = arith.constant dense<0.000000e+00> : vector<2x1xf32>
    %45 = vector.multi_reduction <add>, %44, %cst_27 [0] : vector<8x2x1xf32> to vector<2x1xf32>
    %46 = vector.extract_strided_slice %40 {offsets = [0, 0, 0], sizes = [7, 2, 16], strides = [1, 1, 1]} : vector<8x2x16xf32> to vector<7x2x16xf32>
    %47 = vector.extract_strided_slice %40 {offsets = [1, 0, 0], sizes = [7, 2, 16], strides = [1, 1, 1]} : vector<8x2x16xf32> to vector<7x2x16xf32>
    %48 = vector.shape_cast %46 : vector<7x2x16xf32> to vector<7x2x16x1xf32>
    %49 = vector.shape_cast %2 : vector<16x16xf32> to vector<1x1x16x16xf32>
    %50 = vector.broadcast %48 : vector<7x2x16x1xf32> to vector<7x2x16x16xf32>
    %51 = vector.broadcast %49 : vector<1x1x16x16xf32> to vector<7x2x16x16xf32>
    %52 = arith.mulf %50, %51 : vector<7x2x16x16xf32>
    %cst_28 = arith.constant dense<0.000000e+00> : vector<7x2x16xf32>
    %53 = vector.multi_reduction <add>, %52, %cst_28 [2] : vector<7x2x16x16xf32> to vector<7x2x16xf32>
    %54 = arith.mulf %53, %47 : vector<7x2x16xf32>
    %cst_29 = arith.constant dense<0.000000e+00> : vector<7x2xf32>
    %55 = vector.multi_reduction <add>, %54, %cst_29 [2] : vector<7x2x16xf32> to vector<7x2xf32>
    %56 = vector.shape_cast %55 : vector<7x2xf32> to vector<7x2x1xf32>
    %57 = vector.extract_strided_slice %34 {offsets = [1, 0, 0], sizes = [7, 2, 1], strides = [1, 1, 1]} : vector<8x2x1xf32> to vector<7x2x1xf32>
    %58 = arith.mulf %56, %57 : vector<7x2x1xf32>
    %cst_30 = arith.constant dense<0.000000e+00> : vector<2x1xf32>
    %59 = vector.multi_reduction <add>, %58, %cst_30 [0] : vector<7x2x1xf32> to vector<2x1xf32>
    %60 = vector.extract_strided_slice %40 {offsets = [0, 0, 0], sizes = [1, 2, 16], strides = [1, 1, 1]} : vector<8x2x16xf32> to vector<1x2x16xf32>
    %61 = vector.shape_cast %60 : vector<1x2x16xf32> to vector<2x16xf32>
    %62 = vector.broadcast %8 : vector<1x16xf32> to vector<2x16xf32>
    %63 = arith.mulf %61, %62 : vector<2x16xf32>
    %cst_31 = arith.constant dense<0.000000e+00> : vector<2xf32>
    %64 = vector.multi_reduction <add>, %63, %cst_31 [1] : vector<2x16xf32> to vector<2xf32>
    %65 = vector.shape_cast %64 : vector<2xf32> to vector<2x1xf32>
    %cst_32 = arith.constant dense<0.000000e+00> : vector<2x1xf32>
    %66 = vector.multi_reduction <add>, %34, %cst_32 [0] : vector<8x2x1xf32> to vector<2x1xf32>
    %67 = arith.fptosi %66 : vector<2x1xf32> to vector<2x1xi32>
    %c1_i32_33 = arith.constant 1 : i32
    %68 = vector.broadcast %c1_i32_33 : i32 to vector<2x1xi32>
    %69 = arith.subi %67, %68 : vector<2x1xi32>
    %70 = tpu.iota {dimensions = array<i32: 0>} : vector<8x2x1xi32>
    %71 = vector.shape_cast %69 : vector<2x1xi32> to vector<1x2x1xi32>
    %72 = vector.broadcast %71 : vector<1x2x1xi32> to vector<8x2x1xi32>
    %73 = arith.cmpi eq, %70, %72 : vector<8x2x1xi32>
    %74 = arith.extui %73 : vector<8x2x1xi1> to vector<8x2x1xi32>
    %75 = arith.sitofp %74 : vector<8x2x1xi32> to vector<8x2x1xf32>
    %76 = vector.broadcast %75 : vector<8x2x1xf32> to vector<8x2x16xf32>
    %77 = arith.mulf %76, %40 : vector<8x2x16xf32>
    %cst_34 = arith.constant dense<0.000000e+00> : vector<2x16xf32>
    %78 = vector.multi_reduction <add>, %77, %cst_34 [0] : vector<8x2x16xf32> to vector<2x16xf32>
    %79 = vector.broadcast %11 : vector<1x16xf32> to vector<2x16xf32>
    %80 = arith.mulf %78, %79 : vector<2x16xf32>
    %cst_35 = arith.constant dense<0.000000e+00> : vector<2xf32>
    %81 = vector.multi_reduction <add>, %80, %cst_35 [1] : vector<2x16xf32> to vector<2xf32>
    %82 = vector.shape_cast %81 : vector<2xf32> to vector<2x1xf32>
    %83 = arith.addf %45, %59 : vector<2x1xf32>
    %84 = arith.addf %83, %65 : vector<2x1xf32>
    %85 = arith.addf %84, %82 : vector<2x1xf32>
    %86 = arith.subf %29, %85 : vector<2x1xf32>
    %c0_36 = arith.constant 0 : index
    %c0_37 = arith.constant 0 : index
    %c0_38 = arith.constant 0 : index
    %87 = vector.load %arg8[%c0_36, %c0_37, %c0_38] : memref<1x2x1xf32, #tpu.memory_space<vmem>>, vector<1x2x1xf32>
    %88 = vector.shape_cast %87 : vector<1x2x1xf32> to vector<2x1xf32>
    %89 = vector.shape_cast %86 : vector<2x1xf32> to vector<1x2x1xf32>
    tpu.vector_store %arg8[%c0_36, %c0_37, %c0_38], %89 {strides = array<i32>} : memref<1x2x1xf32, #tpu.memory_space<vmem>>, vector<1x2x1xf32>,
    return
  }
  func.func @transform_0(%arg0: i32) -> (i32, i32, i32) {
    %c0_i32 = arith.constant 0 : i32
    %c0_i32_0 = arith.constant 0 : i32
    %c0_i32_1 = arith.constant 0 : i32
    return %c0_i32, %c0_i32_0, %arg0 : i32, i32, i32
  }
  func.func @transform_1(%arg0: i32) -> (i32, i32, i32) {
    %c0_i32 = arith.constant 0 : i32
    %c0_i32_0 = arith.constant 0 : i32
    %c0_i32_1 = arith.constant 0 : i32
    return %arg0, %c0_i32, %c0_i32_0 : i32, i32, i32
  }
  func.func @transform_2(%arg0: i32) -> (i32, i32, i32) {
    %c0_i32 = arith.constant 0 : i32
    %c0_i32_0 = arith.constant 0 : i32
    %c0_i32_1 = arith.constant 0 : i32
    %c0_i32_2 = arith.constant 0 : i32
    return %c0_i32, %c0_i32_0, %c0_i32_1 : i32, i32, i32
  }
  func.func @transform_3(%arg0: i32) -> (i32, i32, i32) {
    %c0_i32 = arith.constant 0 : i32
    %c0_i32_0 = arith.constant 0 : i32
    %c0_i32_1 = arith.constant 0 : i32
    return %arg0, %c0_i32, %c0_i32_0 : i32, i32, i32
  }
  func.func @transform_4(%arg0: i32) -> (i32, i32, i32) {
    %c0_i32 = arith.constant 0 : i32
    %c0_i32_0 = arith.constant 0 : i32
    %c0_i32_1 = arith.constant 0 : i32
    return %arg0, %c0_i32, %c0_i32_0 : i32, i32, i32
  }
  func.func @transform_5(%arg0: i32) -> (i32, i32, i32) {
    %c0_i32 = arith.constant 0 : i32
    %c0_i32_0 = arith.constant 0 : i32
    %c0_i32_1 = arith.constant 0 : i32
    return %arg0, %c0_i32, %c0_i32_0 : i32, i32, i32
  }
  func.func @transform_6(%arg0: i32) -> (i32, i32, i32) {
    %c0_i32 = arith.constant 0 : i32
    %c0_i32_0 = arith.constant 0 : i32
    %c0_i32_1 = arith.constant 0 : i32
    return %arg0, %c0_i32, %c0_i32_0 : i32, i32, i32
  }
  func.func @transform_7(%arg0: i32) -> (i32, i32, i32) {
    %c0_i32 = arith.constant 0 : i32
    %c0_i32_0 = arith.constant 0 : i32
    %c0_i32_1 = arith.constant 0 : i32
    return %arg0, %c0_i32, %c0_i32_0 : i32, i32, i32
  }
}

</mosaic_0001>

<llo_original>
// kernel: stacked_transformers_crf_forward.13
$region0: #{stacked_transformers_crf_forward.13}
  #allocation0 [shape = 'u32[]', space=smem, size = 0x4, offset = 0x4, fixed_abs, tag = 'smem constant byte address 0x4 - core index']
  #allocation1 [shape = 'u32[72,128]{1,0:T(1,128)}', space=vmem, size = 0x9000, scoped, tag = 'internal scratch']
  #allocation2 [shape = 'f32[16,32]{1,0:T(8,128)}', space=vmem, size = 0x2000, scoped, tag = 'scratch operand']
  %s0 = inlined_call_operand.vmem [shape: f32[16,48], index: 0, kind: input, shape index: {}]
  %s1 = inlined_call_operand.vmem [shape: bf16[48,32], index: 1, kind: input, shape index: {}]
  %s2 = inlined_call_operand.vmem [shape: f32[1,32], index: 2, kind: input, shape index: {}]
  %s3 = inlined_call_operand.vmem [shape: bf16[16,32], index: 3, kind: output, shape index: {}]
  %s4 = sld [smem:[#allocation0]]
  $region30: #{stacked_transformers_crf_forward.13} parent=0
    _
  %s6 = ssub.s32 1, %s4
  %s7 = scalar_select 0, %s6, %s4
  // Predicated region
  $region2: #{stacked_transformers_crf_forward.13} parent=0 // pred_check
    _
  $region3: #{stacked_transformers_crf_forward.13} parent=0 // pred_check_branch
    %9 = sbr.rel (0) target = $region5
  $region4: #{stacked_transformers_crf_forward.13} parent=0 // pred_region
    _
  $region5: #{stacked_transformers_crf_forward.13} parent=0 // pred_fallthru
    _
  // Predicated region
  $region6: #{stacked_transformers_crf_forward.13} parent=0 // pred_check
    _
  $region7: #{stacked_transformers_crf_forward.13} parent=0 // pred_check_branch
    %11 = sbr.rel (0) target = $region9
  $region8: #{stacked_transformers_crf_forward.13} parent=0 // pred_region
    _
  $region9: #{stacked_transformers_crf_forward.13} parent=0 // pred_fallthru
    _
  // Predicated region
  $region10: #{stacked_transformers_crf_forward.13} parent=0 // pred_check
    _
  $region11: #{stacked_transformers_crf_forward.13} parent=0 // pred_check_branch
    %13 = sbr.rel (0) target = $region13
  $region12: #{stacked_transformers_crf_forward.13} parent=0 // pred_region
    _
  $region13: #{stacked_transformers_crf_forward.13} parent=0 // pred_fallthru
    _
  %p15 = scmp.eq.s32.totalorder 0, 0
  // Predicated region
  $region14: #{stacked_transformers_crf_forward.13} parent=0 // pred_check
    %p16 = pneg %p15
  $region15: #{stacked_transformers_crf_forward.13} parent=0 // pred_check_branch
    %18 = sbr.rel (%p16) target = $region17
  $region16: #{stacked_transformers_crf_forward.13} parent=0 // pred_region
    %vm19 = vcmask 261120
    %20 = vst.msk [vmem:[#allocation2] sm:$0xff] %vm19, 0.0
    %21 = vst.msk [vmem:[#allocation2 + $0x8] sm:$0xff] %vm19, 0.0
  $region17: #{stacked_transformers_crf_forward.13} parent=0 // pred_fallthru
    _
  %v22 = vld [vmem:[#allocation2] sm:$0xff]
  %v23 = vld [vmem:[#allocation2 + $0x8] sm:$0xff]
  %v24 = vld [vmem:[%s0] sm:$0xff]
  %v25 = vld [vmem:[%s0 + $0x8] sm:$0xff]
  %v26 = vpack.c.bf16 %v25, %v24
  %v27 = vld [vmem:[%s1] sm:$0xf]
  %v28 = vld [vmem:[%s1 + $0x4] sm:$0xf]
  %v29 = vld [vmem:[%s1 + $0x8] sm:$0xf]
  %v30 = vld [vmem:[%s1 + $0xc] sm:$0xf]
  %v31 = vld [vmem:[%s1 + $0x10] sm:$0xf]
  %v32 = vld [vmem:[%s1 + $0x14] sm:$0xf]
  %v39 = vunpack.c.l.b16 %v27
  %v40 = vunpack.c.l.b16 %v28
  %v41 = vunpack.c.l.b16 %v29
  %v42 = vunpack.c.l.b16 %v30
  %v43 = vunpack.c.l.b16 %v31
  %v44 = vunpack.c.l.b16 %v32
  %v45 = vpack.c.b16 %v40, %v39
  %v46 = vpack.c.b16 %v42, %v41
  %v47 = vpack.c.b16 %v44, %v43
  %vm51 = vcmask 392192
  %v53 = vsel %vm51, %v26, 0
  %55 = vmatpush.bf16.msra.mxu0 0
  %56 = vmatpush.bf16.msra.mxu0 0
  %57 = vmatpush.bf16.msra.mxu0 0
  %58 = vmatpush.bf16.msra.mxu0 0
  %59 = vmatpush.bf16.msra.mxu0 0
  %60 = vmatpush.bf16.msra.mxu0 %v47
  %61 = vmatpush.bf16.msra.mxu0 %v46
  %62 = vmatpush.bf16.msra.mxu0 %v45
  %63 = vmatmul.bf16.gmra.mxu0 %v53
  %v64 = vpop.f32.mrf.mxu0
  %v65 = vadd.f32 0.0, %v64
  %v66 = vpop.f32.mrf.mxu0
  %v67 = vadd.f32 0.0, %v66
  %68 = vdwg.mxu0
  %v69 = vadd.f32 %v22, %v65
  %v70 = vadd.f32 %v23, %v67
  %vm71 = vcmask 261120
  %72 = vst.msk [vmem:[#allocation2] sm:$0xff] %vm71, %v69
  %73 = vst.msk [vmem:[#allocation2 + $0x8] sm:$0xff] %vm71, %v70
  // Predicated region
  $region18: #{stacked_transformers_crf_forward.13} parent=0 // pred_check
    %p74 = pneg %p15
  $region19: #{stacked_transformers_crf_forward.13} parent=0 // pred_check_branch
    %76 = sbr.rel (%p74) target = $region21
  $region20: #{stacked_transformers_crf_forward.13} parent=0 // pred_region
    %v77 = vld [vmem:[#allocation2] sm:$0xff]
    %v78 = vld [vmem:[#allocation2 + $0x8] sm:$0xff]
    %v79 = vld [vmem:[%s2] sm:$0x1]
    %v81 = vperm.slane %v79, 0
    %v83 = vadd.f32 %v77, %v81
    %v84 = vadd.f32 %v78, %v81
    %v85 = vpack.c.bf16 %v83, %v83
    %v86 = vpack.c.bf16 %v84, %v84
    %vm87 = vcmask 257024
    %88 = vst.msk [vmem:[%s3] sm:$0xf] %vm87, %v85
    %89 = vst.msk [vmem:[%s3 + $0x4] sm:$0xf] %vm87, %v86
  $region21: #{stacked_transformers_crf_forward.13} parent=0 // pred_fallthru
    _
  // Predicated region
  $region22: #{stacked_transformers_crf_forward.13} parent=0 // pred_check
    _
  $region23: #{stacked_transformers_crf_forward.13} parent=0 // pred_check_branch
    %91 = sbr.rel (0) target = $region25
  $region24: #{stacked_transformers_crf_forward.13} parent=0 // pred_region
    _
  $region25: #{stacked_transformers_crf_forward.13} parent=0 // pred_fallthru
    _
  // Predicated region
  $region26: #{stacked_transformers_crf_forward.13} parent=0 // pred_check
    _
  $region27: #{stacked_transformers_crf_forward.13} parent=0 // pred_check_branch
    %93 = sbr.rel (0) target = $region29
  $region28: #{stacked_transformers_crf_forward.13} parent=0 // pred_region
    _
  $region29: #{stacked_transformers_crf_forward.13} parent=0 // pred_fallthru
    _

// kernel: stacked_transformers_crf_forward.14
$region0: #{stacked_transformers_crf_forward.14}
  #allocation0 [shape = 'u32[]', space=smem, size = 0x4, offset = 0x4, fixed_abs, tag = 'smem constant byte address 0x4 - core index']
  #allocation1 [shape = 'u32[72,128]{1,0:T(1,128)}', space=vmem, size = 0x9000, scoped, tag = 'internal scratch']
  #allocation2 [shape = 'f32[16,96]{1,0:T(8,128)}', space=vmem, size = 0x2000, scoped, tag = 'scratch operand']
  %s0 = inlined_call_operand.vmem [shape: bf16[16,32], index: 0, kind: input, shape index: {}]
  %s1 = inlined_call_operand.vmem [shape: bf16[32,96], index: 1, kind: input, shape index: {}]
  %s2 = inlined_call_operand.vmem [shape: f32[1,96], index: 2, kind: input, shape index: {}]
  %s3 = inlined_call_operand.vmem [shape: bf16[16,96], index: 3, kind: output, shape index: {}]
  %s4 = sld [smem:[#allocation0]]
  $region30: #{stacked_transformers_crf_forward.14} parent=0
    _
  %s6 = ssub.s32 1, %s4
  %s7 = scalar_select 0, %s6, %s4
  // Predicated region
  $region2: #{stacked_transformers_crf_forward.14} parent=0 // pred_check
    _
  $region3: #{stacked_transformers_crf_forward.14} parent=0 // pred_check_branch
    %9 = sbr.rel (0) target = $region5
  $region4: #{stacked_transformers_crf_forward.14} parent=0 // pred_region
    _
  $region5: #{stacked_transformers_crf_forward.14} parent=0 // pred_fallthru
    _
  // Predicated region
  $region6: #{stacked_transformers_crf_forward.14} parent=0 // pred_check
    _
  $region7: #{stacked_transformers_crf_forward.14} parent=0 // pred_check_branch
    %11 = sbr.rel (0) target = $region9
  $region8: #{stacked_transformers_crf_forward.14} parent=0 // pred_region
    _
  $region9: #{stacked_transformers_crf_forward.14} parent=0 // pred_fallthru
    _
  // Predicated region
  $region10: #{stacked_transformers_crf_forward.14} parent=0 // pred_check
    _
  $region11: #{stacked_transformers_crf_forward.14} parent=0 // pred_check_branch
    %13 = sbr.rel (0) target = $region13
  $region12: #{stacked_transformers_crf_forward.14} parent=0 // pred_region
    _
  $region13: #{stacked_transformers_crf_forward.14} parent=0 // pred_fallthru
    _
  %p15 = scmp.eq.s32.totalorder 0, 0
  // Predicated region
  $region14: #{stacked_transformers_crf_forward.14} parent=0 // pred_check
    %p16 = pneg %p15
  $region15: #{stacked_transformers_crf_forward.14} parent=0 // pred_check_branch
    %18 = sbr.rel (%p16) target = $region17
  $region16: #{stacked_transformers_crf_forward.14} parent=0 // pred_region
    %vm19 = vcmask 785408
    %20 = vst.msk [vmem:[#allocation2] sm:$0xff] %vm19, 0.0
    %21 = vst.msk [vmem:[#allocation2 + $0x8] sm:$0xff] %vm19, 0.0
  $region17: #{stacked_transformers_crf_forward.14} parent=0 // pred_fallthru
    _
  %v22 = vld [vmem:[#allocation2] sm:$0xff]
  %v23 = vld [vmem:[#allocation2 + $0x8] sm:$0xff]
  %v24 = vld [vmem:[%s0] sm:$0xf]
  %v25 = vld [vmem:[%s0 + $0x4] sm:$0xf]
  %v26 = vld [vmem:[%s1] sm:$0xf]
  %v27 = vld [vmem:[%s1 + $0x4] sm:$0xf]
  %v28 = vld [vmem:[%s1 + $0x8] sm:$0xf]
  %v29 = vld [vmem:[%s1 + $0xc] sm:$0xf]
  %v32 = vunpack.c.l.b16 %v24
  %v33 = vunpack.c.l.b16 %v25
  %v34 = vpack.c.b16 %v33, %v32
  %v39 = vunpack.c.l.b16 %v26
  %v40 = vunpack.c.l.b16 %v27
  %v41 = vunpack.c.l.b16 %v28
  %v42 = vunpack.c.l.b16 %v29
  %v43 = vpack.c.b16 %v40, %v39
  %v44 = vpack.c.b16 %v42, %v41
  %vm47 = vcmask 261120
  %v49 = vsel %vm47, %v34, 0
  %51 = vmatpush.bf16.msra.mxu0 0
  %52 = vmatpush.bf16.msra.mxu0 0
  %53 = vmatpush.bf16.msra.mxu0 0
  %54 = vmatpush.bf16.msra.mxu0 0
  %55 = vmatpush.bf16.msra.mxu0 0
  %56 = vmatpush.bf16.msra.mxu0 0
  %57 = vmatpush.bf16.msra.mxu0 %v44
  %58 = vmatpush.bf16.msra.mxu0 %v43
  %59 = vmatmul.bf16.gmra.mxu0 %v49
  %v60 = vpop.f32.mrf.mxu0
  %v61 = vadd.f32 0.0, %v60
  %v62 = vpop.f32.mrf.mxu0
  %v63 = vadd.f32 0.0, %v62
  %64 = vdwg.mxu0
  %v65 = vadd.f32 %v22, %v61
  %v66 = vadd.f32 %v23, %v63
  %vm67 = vcmask 785408
  %68 = vst.msk [vmem:[#allocation2] sm:$0xff] %vm67, %v65
  %69 = vst.msk [vmem:[#allocation2 + $0x8] sm:$0xff] %vm67, %v66
  // Predicated region
  $region18: #{stacked_transformers_crf_forward.14} parent=0 // pred_check
    %p70 = pneg %p15
  $region19: #{stacked_transformers_crf_forward.14} parent=0 // pred_check_branch
    %72 = sbr.rel (%p70) target = $region21
  $region20: #{stacked_transformers_crf_forward.14} parent=0 // pred_region
    %v73 = vld [vmem:[#allocation2] sm:$0xff]
    %v74 = vld [vmem:[#allocation2 + $0x8] sm:$0xff]
    %v75 = vld [vmem:[%s2] sm:$0x1]
    %v77 = vperm.slane %v75, 0
    %v79 = vadd.f32 %v73, %v77
    %v80 = vadd.f32 %v74, %v77
    %v81 = vpack.c.bf16 %v79, %v79
    %v82 = vpack.c.bf16 %v80, %v80
    %vm83 = vcmask 781312
    %84 = vst.msk [vmem:[%s3] sm:$0xf] %vm83, %v81
    %85 = vst.msk [vmem:[%s3 + $0x4] sm:$0xf] %vm83, %v82
  $region21: #{stacked_transformers_crf_forward.14} parent=0 // pred_fallthru
    _
  // Predicated region
  $region22: #{stacked_transformers_crf_forward.14} parent=0 // pred_check
    _
  $region23: #{stacked_transformers_crf_forward.14} parent=0 // pred_check_branch
    %87 = sbr.rel (0) target = $region25
  $region24: #{stacked_transformers_crf_forward.14} parent=0 // pred_region
    _
  $region25: #{stacked_transformers_crf_forward.14} parent=0 // pred_fallthru
    _
  // Predicated region
  $region26: #{stacked_transformers_crf_forward.14} parent=0 // pred_check
    _
  $region27: #{stacked_transformers_crf_forward.14} parent=0 // pred_check_branch
    %89 = sbr.rel (0) target = $region29
  $region28: #{stacked_transformers_crf_forward.14} parent=0 // pred_region
    _
  $region29: #{stacked_transformers_crf_forward.14} parent=0 // pred_fallthru
    _

// kernel: stacked_transformers_crf_forward.16
$region0: #{stacked_transformers_crf_forward.16}
  #allocation0 [shape = 'u32[]', space=smem, size = 0x4, offset = 0x4, fixed_abs, tag = 'smem constant byte address 0x4 - core index']
  #allocation1 [shape = 'u32[72,128]{1,0:T(1,128)}', space=vmem, size = 0x9000, scoped, tag = 'internal scratch']
  #allocation2 [shape = 'f32[16,32]{1,0:T(8,128)}', space=vmem, size = 0x2000, scoped, tag = 'scratch operand']
  %s0 = inlined_call_operand.vmem [shape: bf16[16,32], index: 0, kind: input, shape index: {}]
  %s1 = inlined_call_operand.vmem [shape: bf16[32,32], index: 1, kind: input, shape index: {}]
  %s2 = inlined_call_operand.vmem [shape: f32[1,32], index: 2, kind: input, shape index: {}]
  %s3 = inlined_call_operand.vmem [shape: bf16[16,32], index: 3, kind: input, shape index: {}]
  %s4 = inlined_call_operand.vmem [shape: f32[1,32], index: 4, kind: input, shape index: {}]
  %s5 = inlined_call_operand.vmem [shape: f32[1,32], index: 5, kind: input, shape index: {}]
  %s6 = inlined_call_operand.vmem [shape: bf16[16,32], index: 6, kind: output, shape index: {}]
  %s7 = sld [smem:[#allocation0]]
  $region42: #{stacked_transformers_crf_forward.16} parent=0
    _
  %s9 = ssub.s32 1, %s7
  %s10 = scalar_select 0, %s9, %s7
  // Predicated region
  $region2: #{stacked_transformers_crf_forward.16} parent=0 // pred_check
    _
  $region3: #{stacked_transformers_crf_forward.16} parent=0 // pred_check_branch
    %12 = sbr.rel (0) target = $region5
  $region4: #{stacked_transformers_crf_forward.16} parent=0 // pred_region
    _
  $region5: #{stacked_transformers_crf_forward.16} parent=0 // pred_fallthru
    _
  // Predicated region
  $region6: #{stacked_transformers_crf_forward.16} parent=0 // pred_check
    _
  $region7: #{stacked_transformers_crf_forward.16} parent=0 // pred_check_branch
    %14 = sbr.rel (0) target = $region9
  $region8: #{stacked_transformers_crf_forward.16} parent=0 // pred_region
    _
  $region9: #{stacked_transformers_crf_forward.16} parent=0 // pred_fallthru
    _
  // Predicated region
  $region10: #{stacked_transformers_crf_forward.16} parent=0 // pred_check
    _
  $region11: #{stacked_transformers_crf_forward.16} parent=0 // pred_check_branch
    %16 = sbr.rel (0) target = $region13
  $region12: #{stacked_transformers_crf_forward.16} parent=0 // pred_region
    _
  $region13: #{stacked_transformers_crf_forward.16} parent=0 // pred_fallthru
    _
  // Predicated region
  $region14: #{stacked_transformers_crf_forward.16} parent=0 // pred_check
    _
  $region15: #{stacked_transformers_crf_forward.16} parent=0 // pred_check_branch
    %18 = sbr.rel (0) target = $region17
  $region16: #{stacked_transformers_crf_forward.16} parent=0 // pred_region
    _
  $region17: #{stacked_transformers_crf_forward.16} parent=0 // pred_fallthru
    _
  // Predicated region
  $region18: #{stacked_transformers_crf_forward.16} parent=0 // pred_check
    _
  $region19: #{stacked_transformers_crf_forward.16} parent=0 // pred_check_branch
    %20 = sbr.rel (0) target = $region21
  $region20: #{stacked_transformers_crf_forward.16} parent=0 // pred_region
    _
  $region21: #{stacked_transformers_crf_forward.16} parent=0 // pred_fallthru
    _
  // Predicated region
  $region22: #{stacked_transformers_crf_forward.16} parent=0 // pred_check
    _
  $region23: #{stacked_transformers_crf_forward.16} parent=0 // pred_check_branch
    %22 = sbr.rel (0) target = $region25
  $region24: #{stacked_transformers_crf_forward.16} parent=0 // pred_region
    _
  $region25: #{stacked_transformers_crf_forward.16} parent=0 // pred_fallthru
    _
  %p24 = scmp.eq.s32.totalorder 0, 0
  // Predicated region
  $region26: #{stacked_transformers_crf_forward.16} parent=0 // pred_check
    %p25 = pneg %p24
  $region27: #{stacked_transformers_crf_forward.16} parent=0 // pred_check_branch
    %27 = sbr.rel (%p25) target = $region29
  $region28: #{stacked_transformers_crf_forward.16} parent=0 // pred_region
    %vm28 = vcmask 261120
    %29 = vst.msk [vmem:[#allocation2] sm:$0xff] %vm28, 0.0
    %30 = vst.msk [vmem:[#allocation2 + $0x8] sm:$0xff] %vm28, 0.0
  $region29: #{stacked_transformers_crf_forward.16} parent=0 // pred_fallthru
    _
  %v31 = vld [vmem:[#allocation2] sm:$0xff]
  %v32 = vld [vmem:[#allocation2 + $0x8] sm:$0xff]
  %v33 = vld [vmem:[%s0] sm:$0xf]
  %v34 = vld [vmem:[%s0 + $0x4] sm:$0xf]
  %v35 = vld [vmem:[%s1] sm:$0xf]
  %v36 = vld [vmem:[%s1 + $0x4] sm:$0xf]
  %v37 = vld [vmem:[%s1 + $0x8] sm:$0xf]
  %v38 = vld [vmem:[%s1 + $0xc] sm:$0xf]
  %v41 = vunpack.c.l.b16 %v33
  %v42 = vunpack.c.l.b16 %v34
  %v43 = vpack.c.b16 %v42, %v41
  %v48 = vunpack.c.l.b16 %v35
  %v49 = vunpack.c.l.b16 %v36
  %v50 = vunpack.c.l.b16 %v37
  %v51 = vunpack.c.l.b16 %v38
  %v52 = vpack.c.b16 %v49, %v48
  %v53 = vpack.c.b16 %v51, %v50
  %vm56 = vcmask 261120
  %v58 = vsel %vm56, %v43, 0
  %60 = vmatpush.bf16.msra.mxu0 0
  %61 = vmatpush.bf16.msra.mxu0 0
  %62 = vmatpush.bf16.msra.mxu0 0
  %63 = vmatpush.bf16.msra.mxu0 0
  %64 = vmatpush.bf16.msra.mxu0 0
  %65 = vmatpush.bf16.msra.mxu0 0
  %66 = vmatpush.bf16.msra.mxu0 %v53
  %67 = vmatpush.bf16.msra.mxu0 %v52
  %68 = vmatmul.bf16.gmra.mxu0 %v58
  %v69 = vpop.f32.mrf.mxu0
  %v70 = vadd.f32 0.0, %v69
  %v71 = vpop.f32.mrf.mxu0
  %v72 = vadd.f32 0.0, %v71
  %73 = vdwg.mxu0
  %v74 = vadd.f32 %v31, %v70
  %v75 = vadd.f32 %v32, %v72
  %76 = vst.msk [vmem:[#allocation2] sm:$0xff] %vm56, %v74
  %77 = vst.msk [vmem:[#allocation2 + $0x8] sm:$0xff] %vm56, %v75
  // Predicated region
  $region30: #{stacked_transformers_crf_forward.16} parent=0 // pred_check
    %p78 = pneg %p24
  $region31: #{stacked_transformers_crf_forward.16} parent=0 // pred_check_branch
    %80 = sbr.rel (%p78) target = $region33
  $region32: #{stacked_transformers_crf_forward.16} parent=0 // pred_region
    %v81 = vld [vmem:[#allocation2] sm:$0xff]
    %v82 = vld [vmem:[#allocation2 + $0x8] sm:$0xff]
    %v83 = vld [vmem:[%s2] sm:$0x1]
    %v85 = vperm.slane %v83, 0
    %v87 = vadd.f32 %v81, %v85
    %v88 = vadd.f32 %v82, %v85
    %v89 = vld [vmem:[%s3] sm:$0xf]
    %v90 = vld [vmem:[%s3 + $0x4] sm:$0xf]
    %v91 = vunpack.c.l.bf16 %v89
    %v92 = vunpack.c.l.bf16 %v90
    %v93 = vadd.f32 %v87, %v91
    %v94 = vadd.f32 %v88, %v92
    %v95 = vsel %vm56, %v93, 0.0
    %96 = vadd.xlane.f32.xlu0 %v95
    %v97 = vpop.xlane.xlu0 %96
    %v98 = vsel %vm56, %v94, 0.0
    %99 = vadd.xlane.f32.xlu0 %v98
    %v100 = vpop.xlane.xlu0 %99
    %v101 = vrcp.pop 32.0
    %v102 = vmul.f32 32.0, %v101
    %v103 = vsub.f32 1.0, %v102
    %v104 = vmul.f32 %v101, %v103
    %v105 = vadd.f32 %v101, %v104
    %vm106 = vweird.f32 %v101
    %v107 = vsel %vm106, %v101, %v105
    %v108 = vmul.f32 %v97, %v107
    %v109 = vmul.f32 %v100, %v107
    %v110 = vsub.f32 %v93, %v108
    %v111 = vsub.f32 %v94, %v109
    %v112 = vmul.f32 %v110, %v110
    %v113 = vmul.f32 %v111, %v111
    %v114 = vsel %vm56, %v112, 0.0
    %115 = vadd.xlane.f32.xlu0 %v114
    %v116 = vpop.xlane.xlu0 %115
    %v117 = vsel %vm56, %v113, 0.0
    %118 = vadd.xlane.f32.xlu0 %v117
    %v119 = vpop.xlane.xlu0 %118
    %v120 = vmul.f32 %v116, %v107
    %v121 = vmul.f32 %v119, %v107
    %v122 = vadd.f32 %v120, 1e-05
    %v123 = vadd.f32 %v121, 1e-05
    %v124 = vrsqrt.pop %v122
    %v125 = vmul.f32 %v124, %v122
    %v126 = vmul.f32 %v125, %v124
    %v127 = vmul.f32 0.5, %v126
    %v128 = vsub.f32 1.5, %v127
    %v129 = vmul.f32 %v124, %v128
    %vm130 = vweird.f32 %v122
    %vm131 = vweird.f32 %v124
    %vm132 = vmor %vm130, %vm131
    %v133 = vsel %vm132, %v124, %v129
    %v134 = vrsqrt.pop %v123
    %v135 = vmul.f32 %v134, %v123
    %v136 = vmul.f32 %v135, %v134
    %v137 = vmul.f32 0.5, %v136
    %v138 = vsub.f32 1.5, %v137
    %v139 = vmul.f32 %v134, %v138
    %vm140 = vweird.f32 %v123
    %vm141 = vweird.f32 %v134
    %vm142 = vmor %vm140, %vm141
    %v143 = vsel %vm142, %v134, %v139
    %v144 = vmul.f32 %v110, %v133
    %v145 = vmul.f32 %v111, %v143
    %v146 = vld [vmem:[%s4] sm:$0x1]
    %v148 = vperm.slane %v146, 0
    %v150 = vmul.f32 %v144, %v148
    %v151 = vmul.f32 %v145, %v148
    %v152 = vld [vmem:[%s5] sm:$0x1]
    %v154 = vperm.slane %v152, 0
    %v156 = vadd.f32 %v150, %v154
    %v157 = vadd.f32 %v151, %v154
    %v158 = vpack.c.bf16 %v156, %v156
    %v159 = vpack.c.bf16 %v157, %v157
    %vm160 = vcmask 257024
    %161 = vst.msk [vmem:[%s6] sm:$0xf] %vm160, %v158
    %162 = vst.msk [vmem:[%s6 + $0x4] sm:$0xf] %vm160, %v159
  $region33: #{stacked_transformers_crf_forward.16} parent=0 // pred_fallthru
    _
  // Predicated region
  $region34: #{stacked_transformers_crf_forward.16} parent=0 // pred_check
    _
  $region35: #{stacked_transformers_crf_forward.16} parent=0 // pred_check_branch
    %164 = sbr.rel (0) target = $region37
  $region36: #{stacked_transformers_crf_forward.16} parent=0 // pred_region
    _
  $region37: #{stacked_transformers_crf_forward.16} parent=0 // pred_fallthru
    _
  // Predicated region
  $region38: #{stacked_transformers_crf_forward.16} parent=0 // pred_check
    _
  $region39: #{stacked_transformers_crf_forward.16} parent=0 // pred_check_branch
    %166 = sbr.rel (0) target = $region41
  $region40: #{stacked_transformers_crf_forward.16} parent=0 // pred_region
    _
  $region41: #{stacked_transformers_crf_forward.16} parent=0 // pred_fallthru
    _

// kernel: stacked_transformers_crf_forward.15
$region0: #{stacked_transformers_crf_forward.15}
  #allocation0 [shape = 'u32[]', space=smem, size = 0x4, offset = 0x4, fixed_abs, tag = 'smem constant byte address 0x4 - core index']
  #allocation1 [shape = 'u32[72,128]{1,0:T(1,128)}', space=vmem, size = 0x9000, scoped, tag = 'internal scratch']
  %s0 = inlined_call_operand.vmem [shape: bf16[2,8,96], index: 0, kind: input, shape index: {}]
  %s1 = inlined_call_operand.vmem [shape: f32[2,1,8], index: 1, kind: input, shape index: {}]
  %s2 = inlined_call_operand.vmem [shape: bf16[2,8,32], index: 2, kind: output, shape index: {}]
  %s3 = sld [smem:[#allocation0]]
  $region41: #{stacked_transformers_crf_forward.15} parent=0
    _
  %s5 = ssub.s32 1, %s3
  %s6 = scalar_select 0, %s5, %s3
  loop: start=0, step=1, limit=4
  $region2: #{stacked_transformers_crf_forward.15} parent=0 // loop_pre_header
    _
  $region3: #{stacked_transformers_crf_forward.15} parent=0 // loop_header
    %s8 = sphi 0, %s12
    %p9 = scmp.ge.s32.totalorder %s8, 4
    %s18 = sphi 0, %s20
    %s21 = sphi 0, %s18
    %s22 = sphi 0, %s21
    %s38 = sphi 0, %s22
    %s44 = sphi 0, %s46
    %s47 = sphi 0, %s44
    %s48 = sphi 0, %s47
    %s64 = sphi 0, %s48
    %s70 = sphi 0, %s72
    %s73 = sphi 0, %s70
    %s74 = sphi 0, %s73
    %s90 = sphi 0, %s74
  $region4: #{stacked_transformers_crf_forward.15} parent=0 // loop_header_branch
    %11 = sbr.rel (%p9) target = $region8
  $region5: #{stacked_transformers_crf_forward.15} parent=0 // loop_body
    %s13 = ssub.s32 %s8, 1
    %s14 = ssub.s32 %s8, 2
    %s15 = sadd.s32 %s8, 1
    %s16 = ssub.s32 %s8, %s15
    %p17 = scmp.eq.s32.totalorder %s16, 0
    %s19 = sadd.s32 %s18, 1
    %s20 = scalar_select %p17, %s18, %s19
    %p23 = pneg %p17
    %p24 = scmp.eq.s32.totalorder %s8, 1
    %p25 = por %p23, %p24
    %p26 = scmp.ne.s32.totalorder %s18, %s21
    %p27 = scmp.eq.s32.totalorder %s8, 0
    %p28 = por %p26, %p27
    %p29 = scmp.ne.s32.totalorder %s18, %s21
    %p30 = scmp.eq.s32.totalorder %s13, 1
    %p31 = por %p29, %p30
    %p32 = scmp.ne.s32.totalorder %s21, %s22
    %p33 = scmp.eq.s32.totalorder %s13, 0
    %p34 = por %p32, %p33
    %p35 = scmp.ne.s32.totalorder %s21, %s22
    %p36 = scmp.eq.s32.totalorder %s14, 1
    %p37 = por %p35, %p36
    %p39 = scmp.ne.s32.totalorder %s22, %s38
    %p40 = scmp.eq.s32.totalorder %s14, 0
    %p41 = por %p39, %p40
    %s42 = ssub.s32 %s8, %s15
    %p43 = scmp.eq.s32.totalorder %s42, 0
    %s45 = sadd.s32 %s44, 1
    %s46 = scalar_select %p43, %s44, %s45
    %p49 = pneg %p43
    %p50 = scmp.eq.s32.totalorder %s8, 1
    %p51 = por %p49, %p50
    %p52 = scmp.ne.s32.totalorder %s44, %s47
    %p53 = scmp.eq.s32.totalorder %s8, 0
    %p54 = por %p52, %p53
    %p55 = scmp.ne.s32.totalorder %s44, %s47
    %p56 = scmp.eq.s32.totalorder %s13, 1
    %p57 = por %p55, %p56
    %p58 = scmp.ne.s32.totalorder %s47, %s48
    %p59 = scmp.eq.s32.totalorder %s13, 0
    %p60 = por %p58, %p59
    %p61 = scmp.ne.s32.totalorder %s47, %s48
    %p62 = scmp.eq.s32.totalorder %s14, 1
    %p63 = por %p61, %p62
    %p65 = scmp.ne.s32.totalorder %s48, %s64
    %p66 = scmp.eq.s32.totalorder %s14, 0
    %p67 = por %p65, %p66
    %s68 = ssub.s32 %s8, %s15
    %p69 = scmp.eq.s32.totalorder %s68, 0
    %s71 = sadd.s32 %s70, 1
    %s72 = scalar_select %p69, %s70, %s71
    %p75 = pneg %p69
    %p76 = scmp.eq.s32.totalorder %s8, 1
    %p77 = por %p75, %p76
    %p78 = scmp.ne.s32.totalorder %s70, %s73
    %p79 = scmp.eq.s32.totalorder %s8, 0
    %p80 = por %p78, %p79
    %p81 = scmp.ne.s32.totalorder %s70, %s73
    %p82 = scmp.eq.s32.totalorder %s13, 1
    %p83 = por %p81, %p82
    %p84 = scmp.ne.s32.totalorder %s73, %s74
    %p85 = scmp.eq.s32.totalorder %s13, 0
    %p86 = por %p84, %p85
    %p87 = scmp.ne.s32.totalorder %s73, %s74
    %p88 = scmp.eq.s32.totalorder %s14, 1
    %p89 = por %p87, %p88
    %p91 = scmp.ne.s32.totalorder %s74, %s90
    %p92 = scmp.eq.s32.totalorder %s14, 0
    %p93 = por %p91, %p92
    %p94 = scmp.le.s32.totalorder 1, %s8
    %p95 = scmp.lt.s32.totalorder %s8, 3
    %p96 = pnand %p94, %p95
    %p97 = pneg %p96
    // Predicated region
    $region9: #{stacked_transformers_crf_forward.15} parent=5 // pred_check
      _
    $region10: #{stacked_transformers_crf_forward.15} parent=5 // pred_check_branch
      %99 = sbr.rel (%p96) target = $region12
    $region11: #{stacked_transformers_crf_forward.15} parent=5 // pred_region
      %s100 = ssub.s32 %s8, 1
    $region12: #{stacked_transformers_crf_forward.15} parent=5 // pred_fallthru
      _
    %p101 = scmp.lt.s32.totalorder %s8, 2
    // Predicated region
    $region13: #{stacked_transformers_crf_forward.15} parent=5 // pred_check
      %p102 = pneg %p101
    $region14: #{stacked_transformers_crf_forward.15} parent=5 // pred_check_branch
      %104 = sbr.rel (%p102) target = $region16
    $region15: #{stacked_transformers_crf_forward.15} parent=5 // pred_region
      // Predicated region
      $region17: #{stacked_transformers_crf_forward.15} parent=15 // pred_check
        %p105 = pneg %p28
      $region18: #{stacked_transformers_crf_forward.15} parent=15 // pred_check_branch
        %107 = sbr.rel (%p105) target = $region20
      $region19: #{stacked_transformers_crf_forward.15} parent=15 // pred_region
        %p108 = scmp.lt.s32.totalorder %s8, 1
        %s109 = scalar_select %p108, %s8, 1
        %s110 = smul.addr %s109, 4
        %s111 = scalar_lea.vmem %s0, %s110
      $region20: #{stacked_transformers_crf_forward.15} parent=15 // pred_fallthru
        _
      // Predicated region
      $region21: #{stacked_transformers_crf_forward.15} parent=15 // pred_check
        %p112 = pneg %p54
      $region22: #{stacked_transformers_crf_forward.15} parent=15 // pred_check_branch
        %114 = sbr.rel (%p112) target = $region24
      $region23: #{stacked_transformers_crf_forward.15} parent=15 // pred_region
        %p115 = scmp.lt.s32.totalorder %s8, 1
        %s116 = scalar_select %p115, %s8, 1
        %s117 = scalar_lea.vmem %s1, %s116
      $region24: #{stacked_transformers_crf_forward.15} parent=15 // pred_fallthru
        _
    $region16: #{stacked_transformers_crf_forward.15} parent=5 // pred_fallthru
      _
    %p118 = scmp.le.s32.totalorder 1, %s8
    %p119 = scmp.lt.s32.totalorder %s8, 3
    %p120 = pnand %p118, %p119
    %p121 = pneg %p120
    // Predicated region
    $region25: #{stacked_transformers_crf_forward.15} parent=5 // pred_check
      _
    $region26: #{stacked_transformers_crf_forward.15} parent=5 // pred_check_branch
      %123 = sbr.rel (%p120) target = $region28
    $region27: #{stacked_transformers_crf_forward.15} parent=5 // pred_region
      %s124 = ssub.s32 %s8, 1
      %p125 = scmp.lt.s32.totalorder %s13, 1
      %s126 = scalar_select %p125, %s13, 1
      %s127 = smul.addr %s126, 4
      %s128 = scalar_lea.vmem %s0, %s127
      %p129 = pneg %p34
      %p130 = pneg %p31
      %p131 = scmp.lt.s32.totalorder %s13, 1
      %s132 = scalar_select %p131, %s13, 1
      %s133 = scalar_lea.vmem %s1, %s132
      %p134 = pneg %p60
      %p135 = pneg %p57
      %p136 = pneg %p86
      %p137 = pneg %p83
      %p138 = scmp.lt.s32.totalorder %s13, 1
      %s139 = scalar_select %p138, %s13, 1
      %s140 = smul.addr %s139, 4
      %s141 = scalar_lea.vmem %s2, %s140
      %p142 = scmp.lt.s32.totalorder %s13, 1
      %s143 = scalar_select %p142, %s13, 1
      %s144 = smul.addr %s143, 4
      %s145 = scalar_lea.vmem %s0, %s144
      %p146 = scmp.lt.s32.totalorder %s13, 1
      %s147 = scalar_select %p146, %s13, 1
      %s148 = scalar_lea.vmem %s1, %s147
      %p149 = scmp.lt.s32.totalorder %s13, 1
      %s150 = scalar_select %p149, %s13, 1
      %s151 = smul.addr %s150, 4
      %s152 = scalar_lea.vmem %s2, %s151
      %v154 = vld [vmem:[%s145] sm:$0xf]
      %v155 = vld [vmem:[%s148] sm:$0x1]
      %v157 = vunpack.c.l.b16 %v154
      %v158 = vpack.c.b16 %v157, %v157
      %159 = vrot.lane.b32.xlu0 %v158, 96
      %v160 = vpop.permute.xlu0 %159
      %vm161 = vcmask 64512
      %v163 = vsel %vm161, %v154, 0
      %v166 = vsel %vm161, %v160, 0
      %168 = vmatpush.bf16.xpose.msra.mxu0 0
      %169 = vmatpush.bf16.xpose.msra.mxu0 0
      %170 = vmatpush.bf16.xpose.msra.mxu0 0
      %171 = vmatpush.bf16.xpose.msra.mxu0 0
      %172 = vmatpush.bf16.xpose.msra.mxu0 0
      %173 = vmatpush.bf16.xpose.msra.mxu0 0
      %174 = vmatpush.bf16.xpose.msra.mxu0 0
      %175 = vmatpush.bf16.xpose.msra.mxu0 %v166
      %176 = vmatmul.bf16.gmra.mxu0 %v163
      %v177 = vpop.f32.mrf.mxu0
      %v178 = vadd.f32 0.0, %v177
      %v179 = vpop.f32.mrf.mxu0
      %180 = vdwg.mxu0
      %vm181 = vcmp.gt.f32.partialorder %v155, 0.0
      %v182 = vsel %vm181, 1, 0
      %v183 = vperm.slane %v182, 0
      %vm184 = vcmp.eq.s32.totalorder %v183, 1
      %v185 = vsel %vm184, %v178, -1e+30
      %v186 = vsel %vm161, %v185, -inf
      %187 = vmax.xlane.f32.xlu0 %v186
      %v188 = vpop.xlane.xlu0 %187
      %v189 = vsub.f32 %v185, %v188
      %v190 = vmul.f32 %v189, 1.442695
      %v191 = vpow.pop %v190
      %v192 = vsel %vm161, %v191, 0.0
      %193 = vadd.xlane.f32.xlu0 %v192
      %v194 = vpop.xlane.xlu0 %193
      %v195 = vrcp.pop %v194
      %v196 = vmul.f32 %v191, %v195
      %v197 = vpack.c.bf16 %v196, %v196
      %198 = vrot.lane.b32.xlu0 %v158, 64
      %v199 = vpop.permute.xlu0 %198
      %v201 = vsel %vm161, %v197, 0
      %vm203 = vcmask 1043456
      %v205 = vsel %vm203, %v199, 0
      %207 = vmatpush.bf16.msra.mxu0 0
      %208 = vmatpush.bf16.msra.mxu0 0
      %209 = vmatpush.bf16.msra.mxu0 0
      %210 = vmatpush.bf16.msra.mxu0 0
      %211 = vmatpush.bf16.msra.mxu0 0
      %212 = vmatpush.bf16.msra.mxu0 0
      %213 = vmatpush.bf16.msra.mxu0 0
      %214 = vmatpush.bf16.msra.mxu0 %v205
      %215 = vmatmul.bf16.gmra.mxu0 %v201
      %v216 = vpop.f32.mrf.mxu0
      %v217 = vadd.f32 0.0, %v216
      %v218 = vpop.f32.mrf.mxu0
      %219 = vdwg.mxu0
      %v220 = vpack.c.bf16 %v217, %v217
      %vm221 = vcmask 60416
      %222 = vst.msk [vmem:[%s152] sm:$0xf] %vm221, %v220
      %223 = vrot.lane.b32.xlu0 %v158, 120
      %v224 = vpop.permute.xlu0 %223
      %225 = vrot.lane.b32.xlu0 %v158, 88
      %v226 = vpop.permute.xlu0 %225
      %v228 = vsel %vm161, %v224, 0
      %v231 = vsel %vm161, %v226, 0
      %233 = vmatpush.bf16.xpose.msra.mxu0 0
      %234 = vmatpush.bf16.xpose.msra.mxu0 0
      %235 = vmatpush.bf16.xpose.msra.mxu0 0
      %236 = vmatpush.bf16.xpose.msra.mxu0 0
      %237 = vmatpush.bf16.xpose.msra.mxu0 0
      %238 = vmatpush.bf16.xpose.msra.mxu0 0
      %239 = vmatpush.bf16.xpose.msra.mxu0 0
      %240 = vmatpush.bf16.xpose.msra.mxu0 %v231
      %241 = vmatmul.bf16.gmra.mxu0 %v228
      %v242 = vpop.f32.mrf.mxu0
      %v243 = vadd.f32 0.0, %v242
      %v244 = vpop.f32.mrf.mxu0
      %245 = vdwg.mxu0
      %v246 = vsel %vm184, %v243, -1e+30
      %v247 = vsel %vm161, %v246, -inf
      %248 = vmax.xlane.f32.xlu0 %v247
      %v249 = vpop.xlane.xlu0 %248
      %v250 = vsub.f32 %v246, %v249
      %v251 = vmul.f32 %v250, 1.442695
      %v252 = vpow.pop %v251
      %v253 = vsel %vm161, %v252, 0.0
      %254 = vadd.xlane.f32.xlu0 %v253
      %v255 = vpop.xlane.xlu0 %254
      %v256 = vrcp.pop %v255
      %v257 = vmul.f32 %v252, %v256
      %v258 = vpack.c.bf16 %v257, %v257
      %259 = vrot.lane.b32.xlu0 %v158, 56
      %v260 = vpop.permute.xlu0 %259
      %v262 = vsel %vm161, %v258, 0
      %v265 = vsel %vm203, %v260, 0
      %267 = vmatpush.bf16.msra.mxu0 0
      %268 = vmatpush.bf16.msra.mxu0 0
      %269 = vmatpush.bf16.msra.mxu0 0
      %270 = vmatpush.bf16.msra.mxu0 0
      %271 = vmatpush.bf16.msra.mxu0 0
      %272 = vmatpush.bf16.msra.mxu0 0
      %273 = vmatpush.bf16.msra.mxu0 0
      %274 = vmatpush.bf16.msra.mxu0 %v265
      %275 = vmatmul.bf16.gmra.mxu0 %v262
      %v276 = vpop.f32.mrf.mxu0
      %v277 = vadd.f32 0.0, %v276
      %v278 = vpop.f32.mrf.mxu0
      %279 = vdwg.mxu0
      %v280 = vpack.c.bf16 %v277, %v277
      %282 = vrot.lane.b32.xlu0 %v280, 8
      %v283 = vpop.permute.xlu0 %282
      %vm285 = vcmask 126016
      %286 = vst.msk [vmem:[%s152] sm:$0xf] %vm285, %v283
      %287 = vrot.lane.b32.xlu0 %v158, 112
      %v288 = vpop.permute.xlu0 %287
      %289 = vrot.lane.b32.xlu0 %v158, 80
      %v290 = vpop.permute.xlu0 %289
      %v292 = vsel %vm161, %v288, 0
      %v295 = vsel %vm161, %v290, 0
      %297 = vmatpush.bf16.xpose.msra.mxu0 0
      %298 = vmatpush.bf16.xpose.msra.mxu0 0
      %299 = vmatpush.bf16.xpose.msra.mxu0 0
      %300 = vmatpush.bf16.xpose.msra.mxu0 0
      %301 = vmatpush.bf16.xpose.msra.mxu0 0
      %302 = vmatpush.bf16.xpose.msra.mxu0 0
      %303 = vmatpush.bf16.xpose.msra.mxu0 0
      %304 = vmatpush.bf16.xpose.msra.mxu0 %v295
      %305 = vmatmul.bf16.gmra.mxu0 %v292
      %v306 = vpop.f32.mrf.mxu0
      %v307 = vadd.f32 0.0, %v306
      %v308 = vpop.f32.mrf.mxu0
      %309 = vdwg.mxu0
      %v310 = vsel %vm184, %v307, -1e+30
      %v311 = vsel %vm161, %v310, -inf
      %312 = vmax.xlane.f32.xlu0 %v311
      %v313 = vpop.xlane.xlu0 %312
      %v314 = vsub.f32 %v310, %v313
      %v315 = vmul.f32 %v314, 1.442695
      %v316 = vpow.pop %v315
      %v317 = vsel %vm161, %v316, 0.0
      %318 = vadd.xlane.f32.xlu0 %v317
      %v319 = vpop.xlane.xlu0 %318
      %v320 = vrcp.pop %v319
      %v321 = vmul.f32 %v316, %v320
      %v322 = vpack.c.bf16 %v321, %v321
      %323 = vrot.lane.b32.xlu0 %v158, 48
      %v324 = vpop.permute.xlu0 %323
      %v326 = vsel %vm161, %v322, 0
      %v329 = vsel %vm203, %v324, 0
      %331 = vmatpush.bf16.msra.mxu0 0
      %332 = vmatpush.bf16.msra.mxu0 0
      %333 = vmatpush.bf16.msra.mxu0 0
      %334 = vmatpush.bf16.msra.mxu0 0
      %335 = vmatpush.bf16.msra.mxu0 0
      %336 = vmatpush.bf16.msra.mxu0 0
      %337 = vmatpush.bf16.msra.mxu0 0
      %338 = vmatpush.bf16.msra.mxu0 %v329
      %339 = vmatmul.bf16.gmra.mxu0 %v326
      %v340 = vpop.f32.mrf.mxu0
      %v341 = vadd.f32 0.0, %v340
      %v342 = vpop.f32.mrf.mxu0
      %343 = vdwg.mxu0
      %v344 = vpack.c.bf16 %v341, %v341
      %346 = vrot.lane.b32.xlu0 %v344, 16
      %v347 = vpop.permute.xlu0 %346
      %vm349 = vcmask 191616
      %350 = vst.msk [vmem:[%s152] sm:$0xf] %vm349, %v347
      %351 = vrot.lane.b32.xlu0 %v158, 104
      %v352 = vpop.permute.xlu0 %351
      %353 = vrot.lane.b32.xlu0 %v158, 72
      %v354 = vpop.permute.xlu0 %353
      %v356 = vsel %vm161, %v352, 0
      %v359 = vsel %vm161, %v354, 0
      %361 = vmatpush.bf16.xpose.msra.mxu0 0
      %362 = vmatpush.bf16.xpose.msra.mxu0 0
      %363 = vmatpush.bf16.xpose.msra.mxu0 0
      %364 = vmatpush.bf16.xpose.msra.mxu0 0
      %365 = vmatpush.bf16.xpose.msra.mxu0 0
      %366 = vmatpush.bf16.xpose.msra.mxu0 0
      %367 = vmatpush.bf16.xpose.msra.mxu0 0
      %368 = vmatpush.bf16.xpose.msra.mxu0 %v359
      %369 = vmatmul.bf16.gmra.mxu0 %v356
      %v370 = vpop.f32.mrf.mxu0
      %v371 = vadd.f32 0.0, %v370
      %v372 = vpop.f32.mrf.mxu0
      %373 = vdwg.mxu0
      %v374 = vsel %vm184, %v371, -1e+30
      %v375 = vsel %vm161, %v374, -inf
      %376 = vmax.xlane.f32.xlu0 %v375
      %v377 = vpop.xlane.xlu0 %376
      %v378 = vsub.f32 %v374, %v377
      %v379 = vmul.f32 %v378, 1.442695
      %v380 = vpow.pop %v379
      %v381 = vsel %vm161, %v380, 0.0
      %382 = vadd.xlane.f32.xlu0 %v381
      %v383 = vpop.xlane.xlu0 %382
      %v384 = vrcp.pop %v383
      %v385 = vmul.f32 %v380, %v384
      %v386 = vpack.c.bf16 %v385, %v385
      %387 = vrot.lane.b32.xlu0 %v158, 40
      %v388 = vpop.permute.xlu0 %387
      %v390 = vsel %vm161, %v386, 0
      %v393 = vsel %vm203, %v388, 0
      %395 = vmatpush.bf16.msra.mxu0 0
      %396 = vmatpush.bf16.msra.mxu0 0
      %397 = vmatpush.bf16.msra.mxu0 0
      %398 = vmatpush.bf16.msra.mxu0 0
      %399 = vmatpush.bf16.msra.mxu0 0
      %400 = vmatpush.bf16.msra.mxu0 0
      %401 = vmatpush.bf16.msra.mxu0 0
      %402 = vmatpush.bf16.msra.mxu0 %v393
      %403 = vmatmul.bf16.gmra.mxu0 %v390
      %v404 = vpop.f32.mrf.mxu0
      %v405 = vadd.f32 0.0, %v404
      %v406 = vpop.f32.mrf.mxu0
      %407 = vdwg.mxu0
      %v408 = vpack.c.bf16 %v405, %v405
      %410 = vrot.lane.b32.xlu0 %v408, 24
      %v411 = vpop.permute.xlu0 %410
      %vm413 = vcmask 257216
      %414 = vst.msk [vmem:[%s152] sm:$0xf] %vm413, %v411
      %p415 = scmp.lt.s32.totalorder %s13, 1
      %s416 = scalar_select %p415, %s13, 1
      %s417 = smul.addr %s416, 4
      %s418 = scalar_lea.vmem %s2, %s417
      // Predicated region
      $region29: #{stacked_transformers_crf_forward.15} parent=27 // pred_check
        %p419 = pneg %p83
      $region30: #{stacked_transformers_crf_forward.15} parent=27 // pred_check_branch
        %421 = sbr.rel (%p419) target = $region32
      $region31: #{stacked_transformers_crf_forward.15} parent=27 // pred_region
        _
      $region32: #{stacked_transformers_crf_forward.15} parent=27 // pred_fallthru
        _
    $region28: #{stacked_transformers_crf_forward.15} parent=5 // pred_fallthru
      _
    %p422 = scmp.le.s32.totalorder 2, %s8
    // Predicated region
    $region33: #{stacked_transformers_crf_forward.15} parent=5 // pred_check
      %p423 = pneg %p422
    $region34: #{stacked_transformers_crf_forward.15} parent=5 // pred_check_branch
      %425 = sbr.rel (%p423) target = $region36
    $region35: #{stacked_transformers_crf_forward.15} parent=5 // pred_region
      %s426 = ssub.s32 %s8, 2
      // Predicated region
      $region37: #{stacked_transformers_crf_forward.15} parent=35 // pred_check
        %p427 = pneg %p89
      $region38: #{stacked_transformers_crf_forward.15} parent=35 // pred_check_branch
        %429 = sbr.rel (%p427) target = $region40
      $region39: #{stacked_transformers_crf_forward.15} parent=35 // pred_region
        %p430 = scmp.lt.s32.totalorder %s14, 1
        %s431 = scalar_select %p430, %s14, 1
        %s432 = smul.addr %s431, 4
        %s433 = scalar_lea.vmem %s2, %s432
      $region40: #{stacked_transformers_crf_forward.15} parent=35 // pred_fallthru
        _
    $region36: #{stacked_transformers_crf_forward.15} parent=5 // pred_fallthru
      _
  $region6: #{stacked_transformers_crf_forward.15} parent=0 // loop_footer
    %s12 = sadd.s32 1, %s8
  $region7: #{stacked_transformers_crf_forward.15} parent=0 // loop_footer_branch
    %7 = sbr.rel target = $region3
  $region8: #{stacked_transformers_crf_forward.15} parent=0 // loop_exit
    _

// kernel: stacked_transformers_crf_forward.17
$region0: #{stacked_transformers_crf_forward.17}
  #allocation0 [shape = 'u32[]', space=smem, size = 0x4, offset = 0x4, fixed_abs, tag = 'smem constant byte address 0x4 - core index']
  #allocation1 [shape = 'u32[72,128]{1,0:T(1,128)}', space=vmem, size = 0x9000, scoped, tag = 'internal scratch']
  #allocation2 [shape = 'f32[16,64]{1,0:T(8,128)}', space=vmem, size = 0x2000, scoped, tag = 'scratch operand']
  %s0 = inlined_call_operand.vmem [shape: bf16[16,32], index: 0, kind: input, shape index: {}]
  %s1 = inlined_call_operand.vmem [shape: bf16[32,64], index: 1, kind: input, shape index: {}]
  %s2 = inlined_call_operand.vmem [shape: f32[1,64], index: 2, kind: input, shape index: {}]
  %s3 = inlined_call_operand.vmem [shape: bf16[16,64], index: 3, kind: output, shape index: {}]
  %s4 = sld [smem:[#allocation0]]
  $region30: #{stacked_transformers_crf_forward.17} parent=0
    _
  %s6 = ssub.s32 1, %s4
  %s7 = scalar_select 0, %s6, %s4
  // Predicated region
  $region2: #{stacked_transformers_crf_forward.17} parent=0 // pred_check
    _
  $region3: #{stacked_transformers_crf_forward.17} parent=0 // pred_check_branch
    %9 = sbr.rel (0) target = $region5
  $region4: #{stacked_transformers_crf_forward.17} parent=0 // pred_region
    _
  $region5: #{stacked_transformers_crf_forward.17} parent=0 // pred_fallthru
    _
  // Predicated region
  $region6: #{stacked_transformers_crf_forward.17} parent=0 // pred_check
    _
  $region7: #{stacked_transformers_crf_forward.17} parent=0 // pred_check_branch
    %11 = sbr.rel (0) target = $region9
  $region8: #{stacked_transformers_crf_forward.17} parent=0 // pred_region
    _
  $region9: #{stacked_transformers_crf_forward.17} parent=0 // pred_fallthru
    _
  // Predicated region
  $region10: #{stacked_transformers_crf_forward.17} parent=0 // pred_check
    _
  $region11: #{stacked_transformers_crf_forward.17} parent=0 // pred_check_branch
    %13 = sbr.rel (0) target = $region13
  $region12: #{stacked_transformers_crf_forward.17} parent=0 // pred_region
    _
  $region13: #{stacked_transformers_crf_forward.17} parent=0 // pred_fallthru
    _
  %p15 = scmp.eq.s32.totalorder 0, 0
  // Predicated region
  $region14: #{stacked_transformers_crf_forward.17} parent=0 // pred_check
    %p16 = pneg %p15
  $region15: #{stacked_transformers_crf_forward.17} parent=0 // pred_check_branch
    %18 = sbr.rel (%p16) target = $region17
  $region16: #{stacked_transformers_crf_forward.17} parent=0 // pred_region
    %vm19 = vcmask 523264
    %20 = vst.msk [vmem:[#allocation2] sm:$0xff] %vm19, 0.0
    %21 = vst.msk [vmem:[#allocation2 + $0x8] sm:$0xff] %vm19, 0.0
  $region17: #{stacked_transformers_crf_forward.17} parent=0 // pred_fallthru
    _
  %v22 = vld [vmem:[#allocation2] sm:$0xff]
  %v23 = vld [vmem:[#allocation2 + $0x8] sm:$0xff]
  %v24 = vld [vmem:[%s0] sm:$0xf]
  %v25 = vld [vmem:[%s0 + $0x4] sm:$0xf]
  %v26 = vld [vmem:[%s1] sm:$0xf]
  %v27 = vld [vmem:[%s1 + $0x4] sm:$0xf]
  %v28 = vld [vmem:[%s1 + $0x8] sm:$0xf]
  %v29 = vld [vmem:[%s1 + $0xc] sm:$0xf]
  %v32 = vunpack.c.l.b16 %v24
  %v33 = vunpack.c.l.b16 %v25
  %v34 = vpack.c.b16 %v33, %v32
  %v39 = vunpack.c.l.b16 %v26
  %v40 = vunpack.c.l.b16 %v27
  %v41 = vunpack.c.l.b16 %v28
  %v42 = vunpack.c.l.b16 %v29
  %v43 = vpack.c.b16 %v40, %v39
  %v44 = vpack.c.b16 %v42, %v41
  %vm47 = vcmask 261120
  %v49 = vsel %vm47, %v34, 0
  %51 = vmatpush.bf16.msra.mxu0 0
  %52 = vmatpush.bf16.msra.mxu0 0
  %53 = vmatpush.bf16.msra.mxu0 0
  %54 = vmatpush.bf16.msra.mxu0 0
  %55 = vmatpush.bf16.msra.mxu0 0
  %56 = vmatpush.bf16.msra.mxu0 0
  %57 = vmatpush.bf16.msra.mxu0 %v44
  %58 = vmatpush.bf16.msra.mxu0 %v43
  %59 = vmatmul.bf16.gmra.mxu0 %v49
  %v60 = vpop.f32.mrf.mxu0
  %v61 = vadd.f32 0.0, %v60
  %v62 = vpop.f32.mrf.mxu0
  %v63 = vadd.f32 0.0, %v62
  %64 = vdwg.mxu0
  %v65 = vadd.f32 %v22, %v61
  %v66 = vadd.f32 %v23, %v63
  %vm67 = vcmask 523264
  %68 = vst.msk [vmem:[#allocation2] sm:$0xff] %vm67, %v65
  %69 = vst.msk [vmem:[#allocation2 + $0x8] sm:$0xff] %vm67, %v66
  // Predicated region
  $region18: #{stacked_transformers_crf_forward.17} parent=0 // pred_check
    %p70 = pneg %p15
  $region19: #{stacked_transformers_crf_forward.17} parent=0 // pred_check_branch
    %72 = sbr.rel (%p70) target = $region21
  $region20: #{stacked_transformers_crf_forward.17} parent=0 // pred_region
    %v73 = vld [vmem:[#allocation2] sm:$0xff]
    %v74 = vld [vmem:[#allocation2 + $0x8] sm:$0xff]
    %v75 = vld [vmem:[%s2] sm:$0x1]
    %v77 = vperm.slane %v75, 0
    %v79 = vadd.f32 %v73, %v77
    %v80 = vadd.f32 %v74, %v77
    %v81 = vmax.f32 %v79, 0.0
    %v82 = vmax.f32 %v80, 0.0
    %v83 = vpack.c.bf16 %v81, %v81
    %v84 = vpack.c.bf16 %v82, %v82
    %vm85 = vcmask 519168
    %86 = vst.msk [vmem:[%s3] sm:$0xf] %vm85, %v83
    %87 = vst.msk [vmem:[%s3 + $0x4] sm:$0xf] %vm85, %v84
  $region21: #{stacked_transformers_crf_forward.17} parent=0 // pred_fallthru
    _
  // Predicated region
  $region22: #{stacked_transformers_crf_forward.17} parent=0 // pred_check
    _
  $region23: #{stacked_transformers_crf_forward.17} parent=0 // pred_check_branch
    %89 = sbr.rel (0) target = $region25
  $region24: #{stacked_transformers_crf_forward.17} parent=0 // pred_region
    _
  $region25: #{stacked_transformers_crf_forward.17} parent=0 // pred_fallthru
    _
  // Predicated region
  $region26: #{stacked_transformers_crf_forward.17} parent=0 // pred_check
    _
  $region27: #{stacked_transformers_crf_forward.17} parent=0 // pred_check_branch
    %91 = sbr.rel (0) target = $region29
  $region28: #{stacked_transformers_crf_forward.17} parent=0 // pred_region
    _
  $region29: #{stacked_transformers_crf_forward.17} parent=0 // pred_fallthru
    _

// kernel: stacked_transformers_crf_forward.24
$region0: #{stacked_transformers_crf_forward.24}
  #allocation0 [shape = 'u32[]', space=smem, size = 0x4, offset = 0x4, fixed_abs, tag = 'smem constant byte address 0x4 - core index']
  #allocation1 [shape = 'u32[72,128]{1,0:T(1,128)}', space=vmem, size = 0x9000, scoped, tag = 'internal scratch']
  #allocation2 [shape = 'f32[16,256]{1,0:T(8,128)}', space=vmem, size = 0x4000, scoped, tag = 'scratch operand']
  %s0 = inlined_call_operand.vmem [shape: bf16[16,32], index: 0, kind: input, shape index: {}]
  %s1 = inlined_call_operand.vmem [shape: bf16[32,256], index: 1, kind: input, shape index: {}]
  %s2 = inlined_call_operand.vmem [shape: f32[1,256], index: 2, kind: input, shape index: {}]
  %s3 = inlined_call_operand.vmem [shape: f32[16,256], index: 3, kind: output, shape index: {}]
  %s4 = sld [smem:[#allocation0]]
  $region30: #{stacked_transformers_crf_forward.24} parent=0
    _
  %s6 = ssub.s32 1, %s4
  %s7 = scalar_select 0, %s6, %s4
  // Predicated region
  $region2: #{stacked_transformers_crf_forward.24} parent=0 // pred_check
    _
  $region3: #{stacked_transformers_crf_forward.24} parent=0 // pred_check_branch
    %9 = sbr.rel (0) target = $region5
  $region4: #{stacked_transformers_crf_forward.24} parent=0 // pred_region
    _
  $region5: #{stacked_transformers_crf_forward.24} parent=0 // pred_fallthru
    _
  // Predicated region
  $region6: #{stacked_transformers_crf_forward.24} parent=0 // pred_check
    _
  $region7: #{stacked_transformers_crf_forward.24} parent=0 // pred_check_branch
    %11 = sbr.rel (0) target = $region9
  $region8: #{stacked_transformers_crf_forward.24} parent=0 // pred_region
    _
  $region9: #{stacked_transformers_crf_forward.24} parent=0 // pred_fallthru
    _
  // Predicated region
  $region10: #{stacked_transformers_crf_forward.24} parent=0 // pred_check
    _
  $region11: #{stacked_transformers_crf_forward.24} parent=0 // pred_check_branch
    %13 = sbr.rel (0) target = $region13
  $region12: #{stacked_transformers_crf_forward.24} parent=0 // pred_region
    _
  $region13: #{stacked_transformers_crf_forward.24} parent=0 // pred_fallthru
    _
  %p15 = scmp.eq.s32.totalorder 0, 0
  // Predicated region
  $region14: #{stacked_transformers_crf_forward.24} parent=0 // pred_check
    %p16 = pneg %p15
  $region15: #{stacked_transformers_crf_forward.24} parent=0 // pred_check_branch
    %18 = sbr.rel (%p16) target = $region17
  $region16: #{stacked_transformers_crf_forward.24} parent=0 // pred_region
    %19 = vst [vmem:[#allocation2] sm:$0xff] 0.0
    %20 = vst [vmem:[#allocation2 + $0x8] sm:$0xff] 0.0
    %21 = vst [vmem:[#allocation2 + $0x10] sm:$0xff] 0.0
    %22 = vst [vmem:[#allocation2 + $0x18] sm:$0xff] 0.0
  $region17: #{stacked_transformers_crf_forward.24} parent=0 // pred_fallthru
    _
  %v23 = vld [vmem:[#allocation2] sm:$0xff]
  %v24 = vld [vmem:[#allocation2 + $0x8] sm:$0xff]
  %v25 = vld [vmem:[#allocation2 + $0x10] sm:$0xff]
  %v26 = vld [vmem:[#allocation2 + $0x18] sm:$0xff]
  %v27 = vld [vmem:[%s0] sm:$0xf]
  %v28 = vld [vmem:[%s0 + $0x4] sm:$0xf]
  %v29 = vld [vmem:[%s1] sm:$0xff]
  %v30 = vld [vmem:[%s1 + $0x8] sm:$0xff]
  %v31 = vld [vmem:[%s1 + $0x10] sm:$0xff]
  %v32 = vld [vmem:[%s1 + $0x18] sm:$0xff]
  %v35 = vunpack.c.l.b16 %v27
  %v36 = vunpack.c.l.b16 %v28
  %v37 = vpack.c.b16 %v36, %v35
  %v42 = vunpack.c.l.b16 %v29
  %v43 = vunpack.c.h.b16 %v29
  %v44 = vunpack.c.l.b16 %v30
  %v45 = vunpack.c.h.b16 %v30
  %v46 = vunpack.c.l.b16 %v31
  %v47 = vunpack.c.h.b16 %v31
  %v48 = vunpack.c.l.b16 %v32
  %v49 = vunpack.c.h.b16 %v32
  %v50 = vpack.c.b16 %v44, %v42
  %v51 = vpack.c.b16 %v45, %v43
  %v52 = vpack.c.b16 %v48, %v46
  %v53 = vpack.c.b16 %v49, %v47
  %vm58 = vcmask 261120
  %v60 = vsel %vm58, %v37, 0
  %62 = vmatpush.bf16.msra.mxu0 0
  %63 = vmatpush.bf16.msra.mxu0 0
  %64 = vmatpush.bf16.msra.mxu0 0
  %65 = vmatpush.bf16.msra.mxu0 0
  %66 = vmatpush.bf16.msra.mxu0 0
  %67 = vmatpush.bf16.msra.mxu0 0
  %68 = vmatpush.bf16.msra.mxu0 %v52
  %69 = vmatpush.bf16.msra.mxu0 %v50
  %70 = vmatmul.bf16.gmra.mxu0 %v60
  %v71 = vpop.f32.mrf.mxu0
  %v72 = vadd.f32 0.0, %v71
  %v73 = vpop.f32.mrf.mxu0
  %v74 = vadd.f32 0.0, %v73
  %75 = vdwg.mxu0
  %76 = vmatpush.bf16.msra.mxu0 0
  %77 = vmatpush.bf16.msra.mxu0 0
  %78 = vmatpush.bf16.msra.mxu0 0
  %79 = vmatpush.bf16.msra.mxu0 0
  %80 = vmatpush.bf16.msra.mxu0 0
  %81 = vmatpush.bf16.msra.mxu0 0
  %82 = vmatpush.bf16.msra.mxu0 %v53
  %83 = vmatpush.bf16.msra.mxu0 %v51
  %84 = vmatmul.bf16.gmra.mxu0 %v60
  %v85 = vpop.f32.mrf.mxu0
  %v86 = vadd.f32 0.0, %v85
  %v87 = vpop.f32.mrf.mxu0
  %v88 = vadd.f32 0.0, %v87
  %89 = vdwg.mxu0
  %v90 = vadd.f32 %v23, %v72
  %v91 = vadd.f32 %v24, %v86
  %v92 = vadd.f32 %v25, %v74
  %v93 = vadd.f32 %v26, %v88
  %94 = vst [vmem:[#allocation2] sm:$0xff] %v90
  %95 = vst [vmem:[#allocation2 + $0x8] sm:$0xff] %v91
  %96 = vst [vmem:[#allocation2 + $0x10] sm:$0xff] %v92
  %97 = vst [vmem:[#allocation2 + $0x18] sm:$0xff] %v93
  // Predicated region
  $region18: #{stacked_transformers_crf_forward.24} parent=0 // pred_check
    %p98 = pneg %p15
  $region19: #{stacked_transformers_crf_forward.24} parent=0 // pred_check_branch
    %100 = sbr.rel (%p98) target = $region21
  $region20: #{stacked_transformers_crf_forward.24} parent=0 // pred_region
    %v101 = vld [vmem:[#allocation2] sm:$0xff]
    %v102 = vld [vmem:[#allocation2 + $0x8] sm:$0xff]
    %v103 = vld [vmem:[#allocation2 + $0x10] sm:$0xff]
    %v104 = vld [vmem:[#allocation2 + $0x18] sm:$0xff]
    %v105 = vld [vmem:[%s2] sm:$0x3]
    %v107 = vperm.slane %v105, 0
    %v108 = vperm.slane %v105, 1
    %v111 = vadd.f32 %v101, %v107
    %v112 = vadd.f32 %v102, %v108
    %v113 = vadd.f32 %v103, %v107
    %v114 = vadd.f32 %v104, %v108
    %115 = vmax.xlane.f32.xlu0 %v111
    %v116 = vpop.xlane.xlu0 %115
    %117 = vmax.xlane.f32.xlu0 %v113
    %v118 = vpop.xlane.xlu0 %117
    %v119 = vsub.f32 %v111, %v116
    %v120 = vsub.f32 %v113, %v118
    %v121 = vmul.f32 %v119, 1.442695
    %v122 = vpow.pop %v121
    %v123 = vmul.f32 %v120, 1.442695
    %v124 = vpow.pop %v123
    %125 = vadd.xlane.f32.xlu0 %v122
    %v126 = vpop.xlane.xlu0 %125
    %127 = vadd.xlane.f32.xlu0 %v124
    %v128 = vpop.xlane.xlu0 %127
    %v129 = vlog2.pop %v126
    %v130 = vmul.f32 %v129, 0.6931472
    %v131 = vlog2.pop %v128
    %v132 = vmul.f32 %v131, 0.6931472
    %v133 = vsub.f32 %v119, %v130
    %v134 = vsub.f32 %v120, %v132
    %135 = vst [vmem:[%s3] sm:$0xff] %v133
    %136 = vst [vmem:[%s3 + $0x10] sm:$0xff] %v134
    %137 = vmax.xlane.f32.xlu0 %v112
    %v138 = vpop.xlane.xlu0 %137
    %139 = vmax.xlane.f32.xlu0 %v114
    %v140 = vpop.xlane.xlu0 %139
    %v141 = vsub.f32 %v112, %v138
    %v142 = vsub.f32 %v114, %v140
    %v143 = vmul.f32 %v141, 1.442695
    %v144 = vpow.pop %v143
    %v145 = vmul.f32 %v142, 1.442695
    %v146 = vpow.pop %v145
    %147 = vadd.xlane.f32.xlu0 %v144
    %v148 = vpop.xlane.xlu0 %147
    %149 = vadd.xlane.f32.xlu0 %v146
    %v150 = vpop.xlane.xlu0 %149
    %v151 = vlog2.pop %v148
    %v152 = vmul.f32 %v151, 0.6931472
    %v153 = vlog2.pop %v150
    %v154 = vmul.f32 %v153, 0.6931472
    %v155 = vsub.f32 %v141, %v152
    %v156 = vsub.f32 %v142, %v154
    %157 = vst [vmem:[%s3 + $0x8] sm:$0xff] %v155
    %158 = vst [vmem:[%s3 + $0x18] sm:$0xff] %v156
  $region21: #{stacked_transformers_crf_forward.24} parent=0 // pred_fallthru
    _
  // Predicated region
  $region22: #{stacked_transformers_crf_forward.24} parent=0 // pred_check
    _
  $region23: #{stacked_transformers_crf_forward.24} parent=0 // pred_check_branch
    %160 = sbr.rel (0) target = $region25
  $region24: #{stacked_transformers_crf_forward.24} parent=0 // pred_region
    _
  $region25: #{stacked_transformers_crf_forward.24} parent=0 // pred_fallthru
    _
  // Predicated region
  $region26: #{stacked_transformers_crf_forward.24} parent=0 // pred_check
    _
  $region27: #{stacked_transformers_crf_forward.24} parent=0 // pred_check_branch
    %162 = sbr.rel (0) target = $region29
  $region28: #{stacked_transformers_crf_forward.24} parent=0 // pred_region
    _
  $region29: #{stacked_transformers_crf_forward.24} parent=0 // pred_fallthru
    _

// kernel: stacked_transformers_crf_forward.18
$region0: #{stacked_transformers_crf_forward.18}
  #allocation0 [shape = 'u32[]', space=smem, size = 0x4, offset = 0x4, fixed_abs, tag = 'smem constant byte address 0x4 - core index']
  #allocation1 [shape = 'u32[72,128]{1,0:T(1,128)}', space=vmem, size = 0x9000, scoped, tag = 'internal scratch']
  #allocation2 [shape = 'f32[16,32]{1,0:T(8,128)}', space=vmem, size = 0x2000, scoped, tag = 'scratch operand']
  %s0 = inlined_call_operand.vmem [shape: bf16[16,64], index: 0, kind: input, shape index: {}]
  %s1 = inlined_call_operand.vmem [shape: bf16[64,32], index: 1, kind: input, shape index: {}]
  %s2 = inlined_call_operand.vmem [shape: f32[1,32], index: 2, kind: input, shape index: {}]
  %s3 = inlined_call_operand.vmem [shape: bf16[16,32], index: 3, kind: input, shape index: {}]
  %s4 = inlined_call_operand.vmem [shape: f32[1,32], index: 4, kind: input, shape index: {}]
  %s5 = inlined_call_operand.vmem [shape: f32[1,32], index: 5, kind: input, shape index: {}]
  %s6 = inlined_call_operand.vmem [shape: bf16[16,32], index: 6, kind: output, shape index: {}]
  %s7 = sld [smem:[#allocation0]]
  $region42: #{stacked_transformers_crf_forward.18} parent=0
    _
  %s9 = ssub.s32 1, %s7
  %s10 = scalar_select 0, %s9, %s7
  // Predicated region
  $region2: #{stacked_transformers_crf_forward.18} parent=0 // pred_check
    _
  $region3: #{stacked_transformers_crf_forward.18} parent=0 // pred_check_branch
    %12 = sbr.rel (0) target = $region5
  $region4: #{stacked_transformers_crf_forward.18} parent=0 // pred_region
    _
  $region5: #{stacked_transformers_crf_forward.18} parent=0 // pred_fallthru
    _
  // Predicated region
  $region6: #{stacked_transformers_crf_forward.18} parent=0 // pred_check
    _
  $region7: #{stacked_transformers_crf_forward.18} parent=0 // pred_check_branch
    %14 = sbr.rel (0) target = $region9
  $region8: #{stacked_transformers_crf_forward.18} parent=0 // pred_region
    _
  $region9: #{stacked_transformers_crf_forward.18} parent=0 // pred_fallthru
    _
  // Predicated region
  $region10: #{stacked_transformers_crf_forward.18} parent=0 // pred_check
    _
  $region11: #{stacked_transformers_crf_forward.18} parent=0 // pred_check_branch
    %16 = sbr.rel (0) target = $region13
  $region12: #{stacked_transformers_crf_forward.18} parent=0 // pred_region
    _
  $region13: #{stacked_transformers_crf_forward.18} parent=0 // pred_fallthru
    _
  // Predicated region
  $region14: #{stacked_transformers_crf_forward.18} parent=0 // pred_check
    _
  $region15: #{stacked_transformers_crf_forward.18} parent=0 // pred_check_branch
    %18 = sbr.rel (0) target = $region17
  $region16: #{stacked_transformers_crf_forward.18} parent=0 // pred_region
    _
  $region17: #{stacked_transformers_crf_forward.18} parent=0 // pred_fallthru
    _
  // Predicated region
  $region18: #{stacked_transformers_crf_forward.18} parent=0 // pred_check
    _
  $region19: #{stacked_transformers_crf_forward.18} parent=0 // pred_check_branch
    %20 = sbr.rel (0) target = $region21
  $region20: #{stacked_transformers_crf_forward.18} parent=0 // pred_region
    _
  $region21: #{stacked_transformers_crf_forward.18} parent=0 // pred_fallthru
    _
  // Predicated region
  $region22: #{stacked_transformers_crf_forward.18} parent=0 // pred_check
    _
  $region23: #{stacked_transformers_crf_forward.18} parent=0 // pred_check_branch
    %22 = sbr.rel (0) target = $region25
  $region24: #{stacked_transformers_crf_forward.18} parent=0 // pred_region
    _
  $region25: #{stacked_transformers_crf_forward.18} parent=0 // pred_fallthru
    _
  %p24 = scmp.eq.s32.totalorder 0, 0
  // Predicated region
  $region26: #{stacked_transformers_crf_forward.18} parent=0 // pred_check
    %p25 = pneg %p24
  $region27: #{stacked_transformers_crf_forward.18} parent=0 // pred_check_branch
    %27 = sbr.rel (%p25) target = $region29
  $region28: #{stacked_transformers_crf_forward.18} parent=0 // pred_region
    %vm28 = vcmask 261120
    %29 = vst.msk [vmem:[#allocation2] sm:$0xff] %vm28, 0.0
    %30 = vst.msk [vmem:[#allocation2 + $0x8] sm:$0xff] %vm28, 0.0
  $region29: #{stacked_transformers_crf_forward.18} parent=0 // pred_fallthru
    _
  %v31 = vld [vmem:[#allocation2] sm:$0xff]
  %v32 = vld [vmem:[#allocation2 + $0x8] sm:$0xff]
  %v33 = vld [vmem:[%s0] sm:$0xf]
  %v34 = vld [vmem:[%s0 + $0x4] sm:$0xf]
  %v35 = vld [vmem:[%s1] sm:$0xf]
  %v36 = vld [vmem:[%s1 + $0x4] sm:$0xf]
  %v37 = vld [vmem:[%s1 + $0x8] sm:$0xf]
  %v38 = vld [vmem:[%s1 + $0xc] sm:$0xf]
  %v39 = vld [vmem:[%s1 + $0x10] sm:$0xf]
  %v40 = vld [vmem:[%s1 + $0x14] sm:$0xf]
  %v41 = vld [vmem:[%s1 + $0x18] sm:$0xf]
  %v42 = vld [vmem:[%s1 + $0x1c] sm:$0xf]
  %v45 = vunpack.c.l.b16 %v33
  %v46 = vunpack.c.l.b16 %v34
  %v47 = vpack.c.b16 %v46, %v45
  %v56 = vunpack.c.l.b16 %v35
  %v57 = vunpack.c.l.b16 %v36
  %v58 = vunpack.c.l.b16 %v37
  %v59 = vunpack.c.l.b16 %v38
  %v60 = vunpack.c.l.b16 %v39
  %v61 = vunpack.c.l.b16 %v40
  %v62 = vunpack.c.l.b16 %v41
  %v63 = vunpack.c.l.b16 %v42
  %v64 = vpack.c.b16 %v57, %v56
  %v65 = vpack.c.b16 %v59, %v58
  %v66 = vpack.c.b16 %v61, %v60
  %v67 = vpack.c.b16 %v63, %v62
  %vm72 = vcmask 523264
  %v74 = vsel %vm72, %v47, 0
  %76 = vmatpush.bf16.msra.mxu0 0
  %77 = vmatpush.bf16.msra.mxu0 0
  %78 = vmatpush.bf16.msra.mxu0 0
  %79 = vmatpush.bf16.msra.mxu0 0
  %80 = vmatpush.bf16.msra.mxu0 %v67
  %81 = vmatpush.bf16.msra.mxu0 %v66
  %82 = vmatpush.bf16.msra.mxu0 %v65
  %83 = vmatpush.bf16.msra.mxu0 %v64
  %84 = vmatmul.bf16.gmra.mxu0 %v74
  %v85 = vpop.f32.mrf.mxu0
  %v86 = vadd.f32 0.0, %v85
  %v87 = vpop.f32.mrf.mxu0
  %v88 = vadd.f32 0.0, %v87
  %89 = vdwg.mxu0
  %v90 = vadd.f32 %v31, %v86
  %v91 = vadd.f32 %v32, %v88
  %vm92 = vcmask 261120
  %93 = vst.msk [vmem:[#allocation2] sm:$0xff] %vm92, %v90
  %94 = vst.msk [vmem:[#allocation2 + $0x8] sm:$0xff] %vm92, %v91
  // Predicated region
  $region30: #{stacked_transformers_crf_forward.18} parent=0 // pred_check
    %p95 = pneg %p24
  $region31: #{stacked_transformers_crf_forward.18} parent=0 // pred_check_branch
    %97 = sbr.rel (%p95) target = $region33
  $region32: #{stacked_transformers_crf_forward.18} parent=0 // pred_region
    %v98 = vld [vmem:[#allocation2] sm:$0xff]
    %v99 = vld [vmem:[#allocation2 + $0x8] sm:$0xff]
    %v100 = vld [vmem:[%s2] sm:$0x1]
    %v102 = vperm.slane %v100, 0
    %v104 = vadd.f32 %v98, %v102
    %v105 = vadd.f32 %v99, %v102
    %v106 = vld [vmem:[%s3] sm:$0xf]
    %v107 = vld [vmem:[%s3 + $0x4] sm:$0xf]
    %v108 = vunpack.c.l.bf16 %v106
    %v109 = vunpack.c.l.bf16 %v107
    %v110 = vadd.f32 %v104, %v108
    %v111 = vadd.f32 %v105, %v109
    %v112 = vsel %vm92, %v110, 0.0
    %113 = vadd.xlane.f32.xlu0 %v112
    %v114 = vpop.xlane.xlu0 %113
    %v115 = vsel %vm92, %v111, 0.0
    %116 = vadd.xlane.f32.xlu0 %v115
    %v117 = vpop.xlane.xlu0 %116
    %v118 = vrcp.pop 32.0
    %v119 = vmul.f32 32.0, %v118
    %v120 = vsub.f32 1.0, %v119
    %v121 = vmul.f32 %v118, %v120
    %v122 = vadd.f32 %v118, %v121
    %vm123 = vweird.f32 %v118
    %v124 = vsel %vm123, %v118, %v122
    %v125 = vmul.f32 %v114, %v124
    %v126 = vmul.f32 %v117, %v124
    %v127 = vsub.f32 %v110, %v125
    %v128 = vsub.f32 %v111, %v126
    %v129 = vmul.f32 %v127, %v127
    %v130 = vmul.f32 %v128, %v128
    %v131 = vsel %vm92, %v129, 0.0
    %132 = vadd.xlane.f32.xlu0 %v131
    %v133 = vpop.xlane.xlu0 %132
    %v134 = vsel %vm92, %v130, 0.0
    %135 = vadd.xlane.f32.xlu0 %v134
    %v136 = vpop.xlane.xlu0 %135
    %v137 = vmul.f32 %v133, %v124
    %v138 = vmul.f32 %v136, %v124
    %v139 = vadd.f32 %v137, 1e-05
    %v140 = vadd.f32 %v138, 1e-05
    %v141 = vrsqrt.pop %v139
    %v142 = vmul.f32 %v141, %v139
    %v143 = vmul.f32 %v142, %v141
    %v144 = vmul.f32 0.5, %v143
    %v145 = vsub.f32 1.5, %v144
    %v146 = vmul.f32 %v141, %v145
    %vm147 = vweird.f32 %v139
    %vm148 = vweird.f32 %v141
    %vm149 = vmor %vm147, %vm148
    %v150 = vsel %vm149, %v141, %v146
    %v151 = vrsqrt.pop %v140
    %v152 = vmul.f32 %v151, %v140
    %v153 = vmul.f32 %v152, %v151
    %v154 = vmul.f32 0.5, %v153
    %v155 = vsub.f32 1.5, %v154
    %v156 = vmul.f32 %v151, %v155
    %vm157 = vweird.f32 %v140
    %vm158 = vweird.f32 %v151
    %vm159 = vmor %vm157, %vm158
    %v160 = vsel %vm159, %v151, %v156
    %v161 = vmul.f32 %v127, %v150
    %v162 = vmul.f32 %v128, %v160
    %v163 = vld [vmem:[%s4] sm:$0x1]
    %v165 = vperm.slane %v163, 0
    %v167 = vmul.f32 %v161, %v165
    %v168 = vmul.f32 %v162, %v165
    %v169 = vld [vmem:[%s5] sm:$0x1]
    %v171 = vperm.slane %v169, 0
    %v173 = vadd.f32 %v167, %v171
    %v174 = vadd.f32 %v168, %v171
    %v175 = vpack.c.bf16 %v173, %v173
    %v176 = vpack.c.bf16 %v174, %v174
    %vm177 = vcmask 257024
    %178 = vst.msk [vmem:[%s6] sm:$0xf] %vm177, %v175
    %179 = vst.msk [vmem:[%s6 + $0x4] sm:$0xf] %vm177, %v176
  $region33: #{stacked_transformers_crf_forward.18} parent=0 // pred_fallthru
    _
  // Predicated region
  $region34: #{stacked_transformers_crf_forward.18} parent=0 // pred_check
    _
  $region35: #{stacked_transformers_crf_forward.18} parent=0 // pred_check_branch
    %181 = sbr.rel (0) target = $region37
  $region36: #{stacked_transformers_crf_forward.18} parent=0 // pred_region
    _
  $region37: #{stacked_transformers_crf_forward.18} parent=0 // pred_fallthru
    _
  // Predicated region
  $region38: #{stacked_transformers_crf_forward.18} parent=0 // pred_check
    _
  $region39: #{stacked_transformers_crf_forward.18} parent=0 // pred_check_branch
    %183 = sbr.rel (0) target = $region41
  $region40: #{stacked_transformers_crf_forward.18} parent=0 // pred_region
    _
  $region41: #{stacked_transformers_crf_forward.18} parent=0 // pred_fallthru
    _

// kernel: stacked_transformers_crf_forward.25
$region0: #{stacked_transformers_crf_forward.25}
  #allocation0 [shape = 'u32[]', space=smem, size = 0x4, offset = 0x4, fixed_abs, tag = 'smem constant byte address 0x4 - core index']
  #allocation1 [shape = 'u32[72,128]{1,0:T(1,128)}', space=vmem, size = 0x9000, scoped, tag = 'internal scratch']
  %s0 = inlined_call_operand.vmem [shape: f32[8,2,256], index: 0, kind: input, shape index: {}]
  %s1 = inlined_call_operand.vmem [shape: s32[2,8,2], index: 1, kind: input, shape index: {}]
  %s2 = inlined_call_operand.vmem [shape: f32[8,2,1], index: 2, kind: input, shape index: {}]
  %s3 = inlined_call_operand.vmem [shape: f32[2,128,128], index: 3, kind: input, shape index: {}]
  %s4 = inlined_call_operand.hbm [shape: f32[2,128,128], index: 4, kind: input, shape index: {}]
  %s5 = inlined_call_operand.vmem [shape: f32[2,1,128], index: 5, kind: input, shape index: {}]
  %s6 = inlined_call_operand.vmem [shape: f32[2,1,128], index: 6, kind: input, shape index: {}]
  %s7 = inlined_call_operand.vmem [shape: f32[2,2,1], index: 7, kind: output, shape index: {}]
  %s8 = sld [smem:[#allocation0]]
  $region113: #{stacked_transformers_crf_forward.25} parent=0
    _
  %s10 = ssub.s32 1, %s8
  %s11 = scalar_select 0, %s10, %s8
  $region1: #{stacked_transformers_crf_forward.25} parent=0
    #allocation2 [shape = 'u8[16384]{0}', space=vmem, size = 0x4000, scoped, tag = 'input window, operand 0']
    #allocation3 [shape = 'u8[131072]{0}', space=vmem, size = 0x20000, scoped, tag = 'input window, operand 4']
    #allocation4 [shape = 's32[2]{0}', space=sflag, size = 0x8, scoped, tag = 'scoped memory for stacked_transformers_crf_forward.25']
    %12 = vsyncpa [#allocation4], 0
    %s13 = scalar_lea.sflag [#allocation4], 1
    %14 = vsyncpa %s13, 0
    loop: start=0, step=1, limit=4
    $region2: #{stacked_transformers_crf_forward.25} parent=1 // loop_pre_header
      _
    $region3: #{stacked_transformers_crf_forward.25} parent=1 // loop_header
      %s16 = sphi 0, %s20
      %p17 = scmp.ge.s32.totalorder %s16, 4
      %s26 = sphi 0, %s28
      %s29 = sphi 0, %s26
      %s30 = sphi 0, %s29
      %s46 = sphi 0, %s30
      %s52 = sphi 0, %s54
      %s55 = sphi 0, %s52
      %s56 = sphi 0, %s55
      %s72 = sphi 0, %s56
      %s76 = sphi 0, %s76
      %s78 = sphi 0, %s76
      %s79 = sphi 0, %s78
      %s93 = sphi 0, %s79
      %s99 = sphi 0, %s101
      %s102 = sphi 0, %s99
      %s103 = sphi 0, %s102
      %s119 = sphi 0, %s103
      %s125 = sphi 0, %s127
      %s128 = sphi 0, %s125
      %s129 = sphi 0, %s128
      %s145 = sphi 0, %s129
      %s151 = sphi 0, %s153
      %s154 = sphi 0, %s151
      %s155 = sphi 0, %s154
      %s171 = sphi 0, %s155
      %s177 = sphi 0, %s179
      %s180 = sphi 0, %s177
      %s181 = sphi 0, %s180
      %s197 = sphi 0, %s181
      %s203 = sphi 0, %s205
      %s206 = sphi 0, %s203
      %s207 = sphi 0, %s206
      %s223 = sphi 0, %s207
    $region4: #{stacked_transformers_crf_forward.25} parent=1 // loop_header_branch
      %19 = sbr.rel (%p17) target = $region8
    $region5: #{stacked_transformers_crf_forward.25} parent=1 // loop_body
      %s21 = ssub.s32 %s16, 1
      %s22 = ssub.s32 %s16, 2
      %s23 = sadd.s32 %s16, 1
      %s24 = ssub.s32 %s16, %s23
      %p25 = scmp.eq.s32.totalorder %s24, 0
      %s27 = sadd.s32 %s26, 1
      %s28 = scalar_select %p25, %s26, %s27
      %p31 = pneg %p25
      %p32 = scmp.eq.s32.totalorder %s16, 1
      %p33 = por %p31, %p32
      %p34 = scmp.ne.s32.totalorder %s26, %s29
      %p35 = scmp.eq.s32.totalorder %s16, 0
      %p36 = por %p34, %p35
      %p37 = scmp.ne.s32.totalorder %s26, %s29
      %p38 = scmp.eq.s32.totalorder %s21, 1
      %p39 = por %p37, %p38
      %p40 = scmp.ne.s32.totalorder %s29, %s30
      %p41 = scmp.eq.s32.totalorder %s21, 0
      %p42 = por %p40, %p41
      %p43 = scmp.ne.s32.totalorder %s29, %s30
      %p44 = scmp.eq.s32.totalorder %s22, 1
      %p45 = por %p43, %p44
      %p47 = scmp.ne.s32.totalorder %s30, %s46
      %p48 = scmp.eq.s32.totalorder %s22, 0
      %p49 = por %p47, %p48
      %s50 = ssub.s32 %s16, %s23
      %p51 = scmp.eq.s32.totalorder %s50, 0
      %s53 = sadd.s32 %s52, 1
      %s54 = scalar_select %p51, %s52, %s53
      %p57 = pneg %p51
      %p58 = scmp.eq.s32.totalorder %s16, 1
      %p59 = por %p57, %p58
      %p60 = scmp.ne.s32.totalorder %s52, %s55
      %p61 = scmp.eq.s32.totalorder %s16, 0
      %p62 = por %p60, %p61
      %p63 = scmp.ne.s32.totalorder %s52, %s55
      %p64 = scmp.eq.s32.totalorder %s21, 1
      %p65 = por %p63, %p64
      %p66 = scmp.ne.s32.totalorder %s55, %s56
      %p67 = scmp.eq.s32.totalorder %s21, 0
      %p68 = por %p66, %p67
      %p69 = scmp.ne.s32.totalorder %s55, %s56
      %p70 = scmp.eq.s32.totalorder %s22, 1
      %p71 = por %p69, %p70
      %p73 = scmp.ne.s32.totalorder %s56, %s72
      %p74 = scmp.eq.s32.totalorder %s22, 0
      %p75 = por %p73, %p74
      %s77 = sadd.s32 %s76, 1
      %p80 = scmp.eq.s32.totalorder %s16, 1
      %p81 = scmp.ne.s32.totalorder %s76, %s78
      %p82 = scmp.eq.s32.totalorder %s16, 0
      %p83 = por %p81, %p82
      %p84 = scmp.ne.s32.totalorder %s76, %s78
      %p85 = scmp.eq.s32.totalorder %s21, 1
      %p86 = por %p84, %p85
      %p87 = scmp.ne.s32.totalorder %s78, %s79
      %p88 = scmp.eq.s32.totalorder %s21, 0
      %p89 = por %p87, %p88
      %p90 = scmp.ne.s32.totalorder %s78, %s79
      %p91 = scmp.eq.s32.totalorder %s22, 1
      %p92 = por %p90, %p91
      %p94 = scmp.ne.s32.totalorder %s79, %s93
      %p95 = scmp.eq.s32.totalorder %s22, 0
      %p96 = por %p94, %p95
      %s97 = ssub.s32 %s16, %s23
      %p98 = scmp.eq.s32.totalorder %s97, 0
      %s100 = sadd.s32 %s99, 1
      %s101 = scalar_select %p98, %s99, %s100
      %p104 = pneg %p98
      %p105 = scmp.eq.s32.totalorder %s16, 1
      %p106 = por %p104, %p105
      %p107 = scmp.ne.s32.totalorder %s99, %s102
      %p108 = scmp.eq.s32.totalorder %s16, 0
      %p109 = por %p107, %p108
      %p110 = scmp.ne.s32.totalorder %s99, %s102
      %p111 = scmp.eq.s32.totalorder %s21, 1
      %p112 = por %p110, %p111
      %p113 = scmp.ne.s32.totalorder %s102, %s103
      %p114 = scmp.eq.s32.totalorder %s21, 0
      %p115 = por %p113, %p114
      %p116 = scmp.ne.s32.totalorder %s102, %s103
      %p117 = scmp.eq.s32.totalorder %s22, 1
      %p118 = por %p116, %p117
      %p120 = scmp.ne.s32.totalorder %s103, %s119
      %p121 = scmp.eq.s32.totalorder %s22, 0
      %p122 = por %p120, %p121
      %s123 = ssub.s32 %s16, %s23
      %p124 = scmp.eq.s32.totalorder %s123, 0
      %s126 = sadd.s32 %s125, 1
      %s127 = scalar_select %p124, %s125, %s126
      %p130 = pneg %p124
      %p131 = scmp.eq.s32.totalorder %s16, 1
      %p132 = por %p130, %p131
      %p133 = scmp.ne.s32.totalorder %s125, %s128
      %p134 = scmp.eq.s32.totalorder %s16, 0
      %p135 = por %p133, %p134
      %p136 = scmp.ne.s32.totalorder %s125, %s128
      %p137 = scmp.eq.s32.totalorder %s21, 1
      %p138 = por %p136, %p137
      %p139 = scmp.ne.s32.totalorder %s128, %s129
      %p140 = scmp.eq.s32.totalorder %s21, 0
      %p141 = por %p139, %p140
      %p142 = scmp.ne.s32.totalorder %s128, %s129
      %p143 = scmp.eq.s32.totalorder %s22, 1
      %p144 = por %p142, %p143
      %p146 = scmp.ne.s32.totalorder %s129, %s145
      %p147 = scmp.eq.s32.totalorder %s22, 0
      %p148 = por %p146, %p147
      %s149 = ssub.s32 %s16, %s23
      %p150 = scmp.eq.s32.totalorder %s149, 0
      %s152 = sadd.s32 %s151, 1
      %s153 = scalar_select %p150, %s151, %s152
      %p156 = pneg %p150
      %p157 = scmp.eq.s32.totalorder %s16, 1
      %p158 = por %p156, %p157
      %p159 = scmp.ne.s32.totalorder %s151, %s154
      %p160 = scmp.eq.s32.totalorder %s16, 0
      %p161 = por %p159, %p160
      %p162 = scmp.ne.s32.totalorder %s151, %s154
      %p163 = scmp.eq.s32.totalorder %s21, 1
      %p164 = por %p162, %p163
      %p165 = scmp.ne.s32.totalorder %s154, %s155
      %p166 = scmp.eq.s32.totalorder %s21, 0
      %p167 = por %p165, %p166
      %p168 = scmp.ne.s32.totalorder %s154, %s155
      %p169 = scmp.eq.s32.totalorder %s22, 1
      %p170 = por %p168, %p169
      %p172 = scmp.ne.s32.totalorder %s155, %s171
      %p173 = scmp.eq.s32.totalorder %s22, 0
      %p174 = por %p172, %p173
      %s175 = ssub.s32 %s16, %s23
      %p176 = scmp.eq.s32.totalorder %s175, 0
      %s178 = sadd.s32 %s177, 1
      %s179 = scalar_select %p176, %s177, %s178
      %p182 = pneg %p176
      %p183 = scmp.eq.s32.totalorder %s16, 1
      %p184 = por %p182, %p183
      %p185 = scmp.ne.s32.totalorder %s177, %s180
      %p186 = scmp.eq.s32.totalorder %s16, 0
      %p187 = por %p185, %p186
      %p188 = scmp.ne.s32.totalorder %s177, %s180
      %p189 = scmp.eq.s32.totalorder %s21, 1
      %p190 = por %p188, %p189
      %p191 = scmp.ne.s32.totalorder %s180, %s181
      %p192 = scmp.eq.s32.totalorder %s21, 0
      %p193 = por %p191, %p192
      %p194 = scmp.ne.s32.totalorder %s180, %s181
      %p195 = scmp.eq.s32.totalorder %s22, 1
      %p196 = por %p194, %p195
      %p198 = scmp.ne.s32.totalorder %s181, %s197
      %p199 = scmp.eq.s32.totalorder %s22, 0
      %p200 = por %p198, %p199
      %s201 = ssub.s32 %s16, %s23
      %p202 = scmp.eq.s32.totalorder %s201, 0
      %s204 = sadd.s32 %s203, 1
      %s205 = scalar_select %p202, %s203, %s204
      %p208 = pneg %p202
      %p209 = scmp.eq.s32.totalorder %s16, 1
      %p210 = por %p208, %p209
      %p211 = scmp.ne.s32.totalorder %s203, %s206
      %p212 = scmp.eq.s32.totalorder %s16, 0
      %p213 = por %p211, %p212
      %p214 = scmp.ne.s32.totalorder %s203, %s206
      %p215 = scmp.eq.s32.totalorder %s21, 1
      %p216 = por %p214, %p215
      %p217 = scmp.ne.s32.totalorder %s206, %s207
      %p218 = scmp.eq.s32.totalorder %s21, 0
      %p219 = por %p217, %p218
      %p220 = scmp.ne.s32.totalorder %s206, %s207
      %p221 = scmp.eq.s32.totalorder %s22, 1
      %p222 = por %p220, %p221
      %p224 = scmp.ne.s32.totalorder %s207, %s223
      %p225 = scmp.eq.s32.totalorder %s22, 0
      %p226 = por %p224, %p225
      %p227 = scmp.le.s32.totalorder 1, %s16
      %p228 = scmp.lt.s32.totalorder %s16, 3
      %p229 = pnand %p227, %p228
      %p230 = pneg %p229
      // Predicated region
      $region9: #{stacked_transformers_crf_forward.25} parent=5 // pred_check
        _
      $region10: #{stacked_transformers_crf_forward.25} parent=5 // pred_check_branch
        %232 = sbr.rel (%p229) target = $region12
      $region11: #{stacked_transformers_crf_forward.25} parent=5 // pred_region
        %s233 = ssub.s32 %s16, 1
        // Predicated region
        $region13: #{stacked_transformers_crf_forward.25} parent=11 // pred_check
          %p234 = pneg %p89
        $region14: #{stacked_transformers_crf_forward.25} parent=11 // pred_check_branch
          %236 = sbr.rel (%p234) target = $region16
        $region15: #{stacked_transformers_crf_forward.25} parent=11 // pred_region
          _
        $region16: #{stacked_transformers_crf_forward.25} parent=11 // pred_fallthru
          _
      $region12: #{stacked_transformers_crf_forward.25} parent=5 // pred_fallthru
        _
      %p237 = scmp.lt.s32.totalorder %s16, 2
      // Predicated region
      $region17: #{stacked_transformers_crf_forward.25} parent=5 // pred_check
        %p238 = pneg %p237
      $region18: #{stacked_transformers_crf_forward.25} parent=5 // pred_check_branch
        %240 = sbr.rel (%p238) target = $region20
      $region19: #{stacked_transformers_crf_forward.25} parent=5 // pred_region
        // Predicated region
        $region21: #{stacked_transformers_crf_forward.25} parent=19 // pred_check
          %p241 = pneg %p36
        $region22: #{stacked_transformers_crf_forward.25} parent=19 // pred_check_branch
          %243 = sbr.rel (%p241) target = $region24
        $region23: #{stacked_transformers_crf_forward.25} parent=19 // pred_region
          %s244 = sand.u32 %s26, 1
          %s245 = sand.u32 %s26, 1
          %s246 = smul.addr %s245, 16
          %s247 = scalar_lea.vmem [#allocation2], %s246
          %s248 = smul.addr %s16, 2
          %s249 = scalar_lea.vmem %s0, %s248
          // Predicated region
          $region25: #{stacked_transformers_crf_forward.25} parent=23 // pred_check
            _
          $region26: #{stacked_transformers_crf_forward.25} parent=23 // pred_check_branch
            %251 = sbr.rel (0) target = $region28
          $region27: #{stacked_transformers_crf_forward.25} parent=23 // pred_region
            // Predicated region
            $region29: #{stacked_transformers_crf_forward.25} parent=27 // pred_check
              _
            $region30: #{stacked_transformers_crf_forward.25} parent=27 // pred_check_branch
              %253 = sbr.rel target = $region32
            $region31: #{stacked_transformers_crf_forward.25} parent=27 // pred_region
              // Predicated region
              $region44: #{stacked_transformers_crf_forward.25} parent=31 // pred_check
                _
              $region45: #{stacked_transformers_crf_forward.25} parent=31 // pred_check_branch
                %283 = sbr.rel (0) target = $region47
              $region46: #{stacked_transformers_crf_forward.25} parent=31 // pred_region
                loop: start=0, step=1, limit=1
                $region48: #{stacked_transformers_crf_forward.25} parent=46 // loop_pre_header
                  _
                $region49: #{stacked_transformers_crf_forward.25} parent=46 // loop_header
                  %s285 = sphi 0, %s289
                  %p286 = scmp.ge.s32.totalorder %s285, 1
                  %s290 = sphi %s249, %s249
                  %s291 = sphi %s247, %s247
                $region50: #{stacked_transformers_crf_forward.25} parent=46 // loop_header_branch
                  %288 = sbr.rel (%p286) target = $region54
                $region51: #{stacked_transformers_crf_forward.25} parent=46 // loop_body
                  _
                $region52: #{stacked_transformers_crf_forward.25} parent=46 // loop_footer
                  %s289 = sadd.s32 1, %s285
                $region53: #{stacked_transformers_crf_forward.25} parent=46 // loop_footer_branch
                  %284 = sbr.rel target = $region49
                $region54: #{stacked_transformers_crf_forward.25} parent=46 // loop_exit
                  _
                %s293 = ssub.s32 4, 1
                loop: start=0, step=1, limit=1
                $region55: #{stacked_transformers_crf_forward.25} parent=46 // loop_pre_header
                  _
                $region56: #{stacked_transformers_crf_forward.25} parent=46 // loop_header
                  %s295 = sphi 0, %s299
                  %p296 = scmp.ge.s32.totalorder %s295, 1
                  %s300 = sphi %s249, %s249
                  %s301 = sphi %s247, %s247
                $region57: #{stacked_transformers_crf_forward.25} parent=46 // loop_header_branch
                  %298 = sbr.rel (%p296) target = $region61
                $region58: #{stacked_transformers_crf_forward.25} parent=46 // loop_body
                  %v302 = vld [vmem:[%s300] sm:%s293]
                  %303 = vst [vmem:[%s301] sm:%s293] %v302
                  %v304 = vld [vmem:[%s300 + $0x4] sm:%s293]
                  %305 = vst [vmem:[%s301 + $0x2] sm:%s293] %v304
                  %v306 = vld [vmem:[%s300 + $0x8] sm:%s293]
                  %307 = vst [vmem:[%s301 + $0x4] sm:%s293] %v306
                  %v308 = vld [vmem:[%s300 + $0xc] sm:%s293]
                  %309 = vst [vmem:[%s301 + $0x6] sm:%s293] %v308
                  %v310 = vld [vmem:[%s300 + $0x10] sm:%s293]
                  %311 = vst [vmem:[%s301 + $0x8] sm:%s293] %v310
                  %v312 = vld [vmem:[%s300 + $0x14] sm:%s293]
                  %313 = vst [vmem:[%s301 + $0xa] sm:%s293] %v312
                  %v314 = vld [vmem:[%s300 + $0x18] sm:%s293]
                  %315 = vst [vmem:[%s301 + $0xc] sm:%s293] %v314
                  %v316 = vld [vmem:[%s300 + $0x1c] sm:%s293]
                  %317 = vst [vmem:[%s301 + $0xe] sm:%s293] %v316
                $region59: #{stacked_transformers_crf_forward.25} parent=46 // loop_footer
                  %s299 = sadd.s32 1, %s295
                $region60: #{stacked_transformers_crf_forward.25} parent=46 // loop_footer_branch
                  %294 = sbr.rel target = $region56
                $region61: #{stacked_transformers_crf_forward.25} parent=46 // loop_exit
                  _
              $region47: #{stacked_transformers_crf_forward.25} parent=31 // pred_fallthru
                _
            $region32: #{stacked_transformers_crf_forward.25} parent=27 // pred_fallthru
              _
            // Predicated region
            $region33: #{stacked_transformers_crf_forward.25} parent=27 // pred_check
              _
            $region34: #{stacked_transformers_crf_forward.25} parent=27 // pred_check_branch
              %255 = sbr.rel (0) target = $region36
            $region35: #{stacked_transformers_crf_forward.25} parent=27 // pred_region
              %s257 = ssub.s32 4, 1
              loop: start=0, step=1, limit=1
              $region37: #{stacked_transformers_crf_forward.25} parent=35 // loop_pre_header
                _
              $region38: #{stacked_transformers_crf_forward.25} parent=35 // loop_header
                %s259 = sphi 0, %s263
                %p260 = scmp.ge.s32.totalorder %s259, 1
                %s264 = sphi %s249, %s249
                %s265 = sphi %s247, %s247
              $region39: #{stacked_transformers_crf_forward.25} parent=35 // loop_header_branch
                %262 = sbr.rel (%p260) target = $region43
              $region40: #{stacked_transformers_crf_forward.25} parent=35 // loop_body
                %v266 = vld [vmem:[%s264] sm:%s257]
                %267 = vst [vmem:[%s265] sm:%s257] %v266
                %v268 = vld [vmem:[%s264 + $0x4] sm:%s257]
                %269 = vst [vmem:[%s265 + $0x2] sm:%s257] %v268
                %v270 = vld [vmem:[%s264 + $0x8] sm:%s257]
                %271 = vst [vmem:[%s265 + $0x4] sm:%s257] %v270
                %v272 = vld [vmem:[%s264 + $0xc] sm:%s257]
                %273 = vst [vmem:[%s265 + $0x6] sm:%s257] %v272
                %v274 = vld [vmem:[%s264 + $0x10] sm:%s257]
                %275 = vst [vmem:[%s265 + $0x8] sm:%s257] %v274
                %v276 = vld [vmem:[%s264 + $0x14] sm:%s257]
                %277 = vst [vmem:[%s265 + $0xa] sm:%s257] %v276
                %v278 = vld [vmem:[%s264 + $0x18] sm:%s257]
                %279 = vst [vmem:[%s265 + $0xc] sm:%s257] %v278
                %v280 = vld [vmem:[%s264 + $0x1c] sm:%s257]
                %281 = vst [vmem:[%s265 + $0xe] sm:%s257] %v280
              $region41: #{stacked_transformers_crf_forward.25} parent=35 // loop_footer
                %s263 = sadd.s32 1, %s259
              $region42: #{stacked_transformers_crf_forward.25} parent=35 // loop_footer_branch
                %258 = sbr.rel target = $region38
              $region43: #{stacked_transformers_crf_forward.25} parent=35 // loop_exit
                _
            $region36: #{stacked_transformers_crf_forward.25} parent=27 // pred_fallthru
              _
          $region28: #{stacked_transformers_crf_forward.25} parent=23 // pred_fallthru
            _
          %318 = vnop
        $region24: #{stacked_transformers_crf_forward.25} parent=19 // pred_fallthru
          _
        // Predicated region
        $region62: #{stacked_transformers_crf_forward.25} parent=19 // pred_check
          %p319 = pneg %p62
        $region63: #{stacked_transformers_crf_forward.25} parent=19 // pred_check_branch
          %321 = sbr.rel (%p319) target = $region65
        $region64: #{stacked_transformers_crf_forward.25} parent=19 // pred_region
          %p322 = scmp.lt.s32.totalorder %s16, 1
          %s323 = scalar_select %p322, %s16, 1
          %s324 = smul.addr %s323, 8
          %s325 = scalar_lea.vmem %s1, %s324
        $region65: #{stacked_transformers_crf_forward.25} parent=19 // pred_fallthru
          _
        // Predicated region
        $region66: #{stacked_transformers_crf_forward.25} parent=19 // pred_check
          %p326 = pneg %p109
        $region67: #{stacked_transformers_crf_forward.25} parent=19 // pred_check_branch
          %328 = sbr.rel (%p326) target = $region69
        $region68: #{stacked_transformers_crf_forward.25} parent=19 // pred_region
          %p329 = scmp.lt.s32.totalorder %s16, 1
          %s330 = scalar_select %p329, %s16, 1
          %s331 = smul.addr %s330, 16
          %s332 = smul.addr %s331, 8
          %s333 = scalar_lea.vmem %s3, %s332
        $region69: #{stacked_transformers_crf_forward.25} parent=19 // pred_fallthru
          _
        // Predicated region
        $region70: #{stacked_transformers_crf_forward.25} parent=19 // pred_check
          %p334 = pneg %p135
        $region71: #{stacked_transformers_crf_forward.25} parent=19 // pred_check_branch
          %336 = sbr.rel (%p334) target = $region73
        $region72: #{stacked_transformers_crf_forward.25} parent=19 // pred_region
          %s337 = sand.u32 %s125, 1
          %s338 = scalar_lea.sflag [#allocation4], %s337
          %s339 = sand.u32 %s125, 1
          %s340 = smul.addr %s339, 128
          %s341 = scalar_lea.vmem [#allocation3], %s340
          %343 = vsyncadd %s338, 0
          %s344 = smul.addr %s16, 16
          %s345 = smul.addr %s344, 8
          %s346 = scalar_lea.hbm %s4, %s345
          %s347 = sshll.u32 %s346, 4
          %s348 = int_to_ptr.hbm [resolvable:$true] %s347
          %s349 = sshll.u32 %s341, 4
          %s350 = int_to_ptr.vmem [resolvable:$true] %s349
          %355 = dma.hbm_to_vmem [thread:$0]  %s348, 2048, %s350, %s338, 128, 128, 8
        $region73: #{stacked_transformers_crf_forward.25} parent=19 // pred_fallthru
          _
        // Predicated region
        $region74: #{stacked_transformers_crf_forward.25} parent=19 // pred_check
          %p356 = pneg %p161
        $region75: #{stacked_transformers_crf_forward.25} parent=19 // pred_check_branch
          %358 = sbr.rel (%p356) target = $region77
        $region76: #{stacked_transformers_crf_forward.25} parent=19 // pred_region
          %p359 = scmp.lt.s32.totalorder %s16, 1
          %s360 = scalar_select %p359, %s16, 1
          %s361 = scalar_lea.vmem %s5, %s360
        $region77: #{stacked_transformers_crf_forward.25} parent=19 // pred_fallthru
          _
        // Predicated region
        $region78: #{stacked_transformers_crf_forward.25} parent=19 // pred_check
          %p362 = pneg %p187
        $region79: #{stacked_transformers_crf_forward.25} parent=19 // pred_check_branch
          %364 = sbr.rel (%p362) target = $region81
        $region80: #{stacked_transformers_crf_forward.25} parent=19 // pred_region
          %p365 = scmp.lt.s32.totalorder %s16, 1
          %s366 = scalar_select %p365, %s16, 1
          %s367 = scalar_lea.vmem %s6, %s366
        $region81: #{stacked_transformers_crf_forward.25} parent=19 // pred_fallthru
          _
      $region20: #{stacked_transformers_crf_forward.25} parent=5 // pred_fallthru
        _
      %p368 = scmp.le.s32.totalorder 1, %s16
      %p369 = scmp.lt.s32.totalorder %s16, 3
      %p370 = pnand %p368, %p369
      %p371 = pneg %p370
      // Predicated region
      $region82: #{stacked_transformers_crf_forward.25} parent=5 // pred_check
        _
      $region83: #{stacked_transformers_crf_forward.25} parent=5 // pred_check_branch
        %373 = sbr.rel (%p370) target = $region85
      $region84: #{stacked_transformers_crf_forward.25} parent=5 // pred_region
        %s374 = ssub.s32 %s16, 1
        %s375 = sand.u32 %s29, 1
        %s376 = sand.u32 %s29, 1
        %s377 = smul.addr %s376, 16
        %s378 = scalar_lea.vmem [#allocation2], %s377
        // Predicated region
        $region86: #{stacked_transformers_crf_forward.25} parent=84 // pred_check
          %p379 = pneg %p42
        $region87: #{stacked_transformers_crf_forward.25} parent=84 // pred_check_branch
          %381 = sbr.rel (%p379) target = $region89
        $region88: #{stacked_transformers_crf_forward.25} parent=84 // pred_region
          _
        $region89: #{stacked_transformers_crf_forward.25} parent=84 // pred_fallthru
          _
        %s382 = sand.u32 %s128, 1
        %s383 = scalar_lea.sflag [#allocation4], %s382
        %s384 = sand.u32 %s128, 1
        %s385 = smul.addr %s384, 128
        %s386 = scalar_lea.vmem [#allocation3], %s385
        // Predicated region
        $region90: #{stacked_transformers_crf_forward.25} parent=84 // pred_check
          %p387 = pneg %p141
        $region91: #{stacked_transformers_crf_forward.25} parent=84 // pred_check_branch
          %389 = sbr.rel (%p387) target = $region93
        $region92: #{stacked_transformers_crf_forward.25} parent=84 // pred_region
          %391 = dma.done %s383, 2048
        $region93: #{stacked_transformers_crf_forward.25} parent=84 // pred_fallthru
          _
        %s392 = sand.u32 %s29, 1
        %s393 = sand.u32 %s29, 1
        %s394 = smul.addr %s393, 16
        %s395 = scalar_lea.vmem [#allocation2], %s394
        %p396 = pneg %p42
        %p397 = pneg %p39
        %p398 = scmp.lt.s32.totalorder %s21, 1
        %s399 = scalar_select %p398, %s21, 1
        %s400 = smul.addr %s399, 8
        %s401 = scalar_lea.vmem %s1, %s400
        %p402 = pneg %p68
        %p403 = pneg %p65
        %p404 = pneg %p89
        %p405 = pneg %p86
        %p406 = scmp.lt.s32.totalorder %s21, 1
        %s407 = scalar_select %p406, %s21, 1
        %s408 = smul.addr %s407, 16
        %s409 = smul.addr %s408, 8
        %s410 = scalar_lea.vmem %s3, %s409
        %p411 = pneg %p115
        %p412 = pneg %p112
        %s413 = sand.u32 %s128, 1
        %s414 = scalar_lea.sflag [#allocation4], %s413
        %s415 = sand.u32 %s128, 1
        %s416 = smul.addr %s415, 128
        %s417 = scalar_lea.vmem [#allocation3], %s416
        %p418 = pneg %p141
        %p419 = pneg %p138
        %p420 = scmp.lt.s32.totalorder %s21, 1
        %s421 = scalar_select %p420, %s21, 1
        %s422 = scalar_lea.vmem %s5, %s421
        %p423 = pneg %p167
        %p424 = pneg %p164
        %p425 = scmp.lt.s32.totalorder %s21, 1
        %s426 = scalar_select %p425, %s21, 1
        %s427 = scalar_lea.vmem %s6, %s426
        %p428 = pneg %p193
        %p429 = pneg %p190
        %p430 = pneg %p219
        %p431 = pneg %p216
        %p432 = scmp.lt.s32.totalorder %s21, 1
        %s433 = scalar_select %p432, %s21, 1
        %s434 = smul.addr %s433, 2
        %s435 = scalar_lea.vmem %s7, %s434
        %p436 = scmp.lt.s32.totalorder %s21, 1
        %s437 = scalar_select %p436, %s21, 1
        %s438 = smul.addr %s437, 8
        %s439 = scalar_lea.vmem %s1, %s438
        %p440 = scmp.lt.s32.totalorder %s21, 1
        %s441 = scalar_select %p440, %s21, 1
        %s442 = smul.addr %s441, 16
        %s443 = smul.addr %s442, 8
        %s444 = scalar_lea.vmem %s3, %s443
        %p445 = scmp.lt.s32.totalorder %s21, 1
        %s446 = scalar_select %p445, %s21, 1
        %s447 = scalar_lea.vmem %s5, %s446
        %p448 = scmp.lt.s32.totalorder %s21, 1
        %s449 = scalar_select %p448, %s21, 1
        %s450 = scalar_lea.vmem %s6, %s449
        %p451 = scmp.lt.s32.totalorder %s21, 1
        %s452 = scalar_select %p451, %s21, 1
        %s453 = smul.addr %s452, 2
        %s454 = scalar_lea.vmem %s7, %s453
        %v455 = vld [vmem:[%s444] sm:$0xff]
        %v456 = vld [vmem:[%s444 + $0x8] sm:$0xff]
        %v457 = vld [vmem:[%s386] sm:$0xff]
        %v458 = vld [vmem:[%s386 + $0x8] sm:$0xff]
        %v459 = vld [vmem:[%s447] sm:$0x1]
        %v460 = vld [vmem:[%s450] sm:$0x1]
        %v461 = vld [vmem:[%s378] sm:$0x3]
        %v463 = vperm.slane %v459, 0
        %v465 = vadd.f32 %v461, %v463
        loop: start=1, step=1, limit=8
        $region94: #{stacked_transformers_crf_forward.25} parent=84 // loop_pre_header
          _
        $region95: #{stacked_transformers_crf_forward.25} parent=84 // loop_header
          %s467 = sphi 1, %s471
          %p468 = scmp.ge.s32.totalorder %s467, 8
          %v472 = vphi %v465, %v607
        $region96: #{stacked_transformers_crf_forward.25} parent=84 // loop_header_branch
          %470 = sbr.rel (%p468) target = $region100
        $region97: #{stacked_transformers_crf_forward.25} parent=84 // loop_body
          %s473 = smul.u32 %s467, 2
          %s474 = scalar_lea.vmem %s378, %s473 [#allocation2]
          %v475 = vld [vmem:[%s474] sm:$0x3]
          %s476 = scalar_lea.vmem %s2, %s473
          %v477 = vld [vmem:[%s476] sm:$0x3]
          %v479 = vrot.slane %v472, 1
          %v480 = vperm.slane %v472, 0
          %v481 = vperm.slane %v479, 0
          %v484 = vadd.f32 %v480, %v457
          %v485 = vadd.f32 %v480, %v458
          %v486 = vadd.f32 %v481, %v457
          %v487 = vadd.f32 %v481, %v458
          %vm488 = vcmask 130048
          %v489 = vsel %vm488, %v484, -inf
          %490 = vmax.xlane.f32.xlu0 %v489
          %v491 = vpop.xlane.xlu0 %490
          %v492 = vsel %vm488, %v485, -inf
          %493 = vmax.xlane.f32.xlu0 %v492
          %v494 = vpop.xlane.xlu0 %493
          %v495 = vsel %vm488, %v486, -inf
          %496 = vmax.xlane.f32.xlu0 %v495
          %v497 = vpop.xlane.xlu0 %496
          %v498 = vsel %vm488, %v487, -inf
          %499 = vmax.xlane.f32.xlu0 %v498
          %v500 = vpop.xlane.xlu0 %499
          %v501 = vsub.f32 %v484, %v491
          %v502 = vsub.f32 %v485, %v494
          %v503 = vsub.f32 %v486, %v497
          %v504 = vsub.f32 %v487, %v500
          %v505 = vmul.f32 %v501, 1.442695
          %v506 = vpow.pop %v505
          %v507 = vmul.f32 %v502, 1.442695
          %v508 = vpow.pop %v507
          %v509 = vmul.f32 %v503, 1.442695
          %v510 = vpow.pop %v509
          %v511 = vmul.f32 %v504, 1.442695
          %v512 = vpow.pop %v511
          %v513 = vsel %vm488, %v506, 0.0
          %514 = vadd.xlane.f32.xlu0 %v513
          %v515 = vpop.xlane.xlu0 %514
          %v516 = vsel %vm488, %v508, 0.0
          %517 = vadd.xlane.f32.xlu0 %v516
          %v518 = vpop.xlane.xlu0 %517
          %v519 = vsel %vm488, %v510, 0.0
          %520 = vadd.xlane.f32.xlu0 %v519
          %v521 = vpop.xlane.xlu0 %520
          %v522 = vsel %vm488, %v512, 0.0
          %523 = vadd.xlane.f32.xlu0 %v522
          %v524 = vpop.xlane.xlu0 %523
          %v525 = vlog2.pop %v515
          %v526 = vmul.f32 %v525, 0.6931472
          %v527 = vlog2.pop %v518
          %v528 = vmul.f32 %v527, 0.6931472
          %v529 = vlog2.pop %v521
          %v530 = vmul.f32 %v529, 0.6931472
          %v531 = vlog2.pop %v524
          %v532 = vmul.f32 %v531, 0.6931472
          %v533 = vadd.f32 %v526, %v491
          %v534 = vadd.f32 %v528, %v494
          %v535 = vadd.f32 %v530, %v497
          %v536 = vadd.f32 %v532, %v500
          %vm537 = vcmp.gt.f32.partialorder %v477, 0.0
          %v539 = vperm.slane %v475, 0
          %v540 = vlaneseq
          %v541 = vshrl.u32 %v540, 7
          %543 = vset.pattern.permute.xlu0 %v541
          %544 = vperm.xlu0 %543, %v539
          %v545 = vpop.permute.xlu0 %544
          %v546 = vlaneseq
          %v547 = vshrl.u32 %v546, 7
          %v548 = vadd.s32 %v547, 8
          %549 = vset.pattern.permute.xlu0 %v548
          %550 = vperm.xlu0 %549, %v539
          %v551 = vpop.permute.xlu0 %550
          %v552 = vperm.slane %v475, 1
          %v553 = vlaneseq
          %v554 = vshrl.u32 %v553, 7
          %556 = vset.pattern.permute.xlu0 %v554
          %557 = vperm.xlu0 %556, %v552
          %v558 = vpop.permute.xlu0 %557
          %v559 = vlaneseq
          %v560 = vshrl.u32 %v559, 7
          %v561 = vadd.s32 %v560, 8
          %562 = vset.pattern.permute.xlu0 %v561
          %563 = vperm.xlu0 %562, %v552
          %v564 = vpop.permute.xlu0 %563
          %v569 = vadd.f32 %v533, %v545
          %v570 = vadd.f32 %v534, %v551
          %v571 = vadd.f32 %v535, %v558
          %v572 = vadd.f32 %v536, %v564
          %v573 = vsel %vm537, 1, 0
          %574 = vset.pattern.permute.xlu0 0
          %575 = vperm.xlu0 %574, %v573
          %v576 = vpop.permute.xlu0 %575
          %vm577 = vcmp.eq.s32.totalorder %v576, 1
          %582 = vset.pattern.permute.xlu0 0
          %583 = vperm.xlu0 %582, %v569
          %v584 = vpop.permute.xlu0 %583
          %585 = vset.pattern.permute.xlu0 0
          %586 = vperm.xlu0 %585, %v570
          %v587 = vpop.permute.xlu0 %586
          %588 = vset.pattern.permute.xlu0 0
          %589 = vperm.xlu0 %588, %v571
          %v590 = vpop.permute.xlu0 %589
          %591 = vset.pattern.permute.xlu0 0
          %592 = vperm.xlu0 %591, %v572
          %v593 = vpop.permute.xlu0 %592
          %v594 = vlaneseq
          %v595 = vand.u32 %v594, 127
          %v596 = vperm.slane %v584, %v595
          %v597 = vadd.s32 %v595, 4294967288
          %v598 = vperm.slane %v587, %v597
          %vm599 = vcmask 130112
          %v600 = vsel %vm599, %v598, %v596
          %v601 = vperm.slane %v590, %v595
          %v602 = vperm.slane %v593, %v597
          %v603 = vsel %vm599, %v602, %v601
          %vm604 = vcmask 1041409
          %v605 = vsel %vm604, %v603, %v600
          %v607 = vsel %vm577, %v605, %v472
        $region98: #{stacked_transformers_crf_forward.25} parent=84 // loop_footer
          %s471 = sadd.s32 1, %s467
        $region99: #{stacked_transformers_crf_forward.25} parent=84 // loop_footer_branch
          %466 = sbr.rel target = $region95
        $region100: #{stacked_transformers_crf_forward.25} parent=84 // loop_exit
          _
        %v609 = vperm.slane %v460, 0
        %v611 = vadd.f32 %v472, %v609
        %vm612 = vcmask 123904
        %v613 = vsel %vm612, %v611, -inf
        %614 = vmax.xlane.f32.xlu0 %v613
        %v615 = vpop.xlane.xlu0 %614
        %v616 = vsub.f32 %v611, %v615
        %v617 = vmul.f32 %v616, 1.442695
        %v618 = vpow.pop %v617
        %v619 = vsel %vm612, %v618, 0.0
        %620 = vadd.xlane.f32.xlu0 %v619
        %v621 = vpop.xlane.xlu0 %620
        %v622 = vlog2.pop %v621
        %v623 = vmul.f32 %v622, 0.6931472
        %v624 = vadd.f32 %v623, %v615
        %v625 = vld [vmem:[%s378] sm:$0x3]
        %v626 = vld [vmem:[%s378 + $0x2] sm:$0x3]
        %v627 = vld [vmem:[%s378 + $0x4] sm:$0x3]
        %v628 = vld [vmem:[%s378 + $0x6] sm:$0x3]
        %v629 = vld [vmem:[%s378 + $0x8] sm:$0x3]
        %v630 = vld [vmem:[%s378 + $0xa] sm:$0x3]
        %v631 = vld [vmem:[%s378 + $0xc] sm:$0x3]
        %v632 = vld [vmem:[%s378 + $0xe] sm:$0x3]
        %v633 = vld [vmem:[%s439] sm:$0xff]
        %v634 = vld [vmem:[%s2] sm:$0x3]
        %v635 = vld [vmem:[%s2 + $0x2] sm:$0x3]
        %v636 = vld [vmem:[%s2 + $0x4] sm:$0x3]
        %v637 = vld [vmem:[%s2 + $0x6] sm:$0x3]
        %v638 = vld [vmem:[%s2 + $0x8] sm:$0x3]
        %v639 = vld [vmem:[%s2 + $0xa] sm:$0x3]
        %v640 = vld [vmem:[%s2 + $0xc] sm:$0x3]
        %v641 = vld [vmem:[%s2 + $0xe] sm:$0x3]
        %v642 = vlaneseq
        %v643 = vand.u32 %v642, 127
        %v644 = vperm.slane %v633, 0
        %v645 = vlaneseq
        %v646 = vshrl.u32 %v645, 7
        %648 = vset.pattern.permute.xlu0 %v646
        %649 = vperm.xlu0 %648, %v644
        %v650 = vpop.permute.xlu0 %649
        %v651 = vperm.slane %v633, 1
        %v652 = vlaneseq
        %v653 = vshrl.u32 %v652, 7
        %655 = vset.pattern.permute.xlu0 %v653
        %656 = vperm.xlu0 %655, %v651
        %v657 = vpop.permute.xlu0 %656
        %v658 = vperm.slane %v633, 2
        %v659 = vlaneseq
        %v660 = vshrl.u32 %v659, 7
        %662 = vset.pattern.permute.xlu0 %v660
        %663 = vperm.xlu0 %662, %v658
        %v664 = vpop.permute.xlu0 %663
        %v665 = vperm.slane %v633, 3
        %v666 = vlaneseq
        %v667 = vshrl.u32 %v666, 7
        %669 = vset.pattern.permute.xlu0 %v667
        %670 = vperm.xlu0 %669, %v665
        %v671 = vpop.permute.xlu0 %670
        %v672 = vperm.slane %v633, 4
        %v673 = vlaneseq
        %v674 = vshrl.u32 %v673, 7
        %676 = vset.pattern.permute.xlu0 %v674
        %677 = vperm.xlu0 %676, %v672
        %v678 = vpop.permute.xlu0 %677
        %v679 = vperm.slane %v633, 5
        %v680 = vlaneseq
        %v681 = vshrl.u32 %v680, 7
        %683 = vset.pattern.permute.xlu0 %v681
        %684 = vperm.xlu0 %683, %v679
        %v685 = vpop.permute.xlu0 %684
        %v686 = vperm.slane %v633, 6
        %v687 = vlaneseq
        %v688 = vshrl.u32 %v687, 7
        %690 = vset.pattern.permute.xlu0 %v688
        %691 = vperm.xlu0 %690, %v686
        %v692 = vpop.permute.xlu0 %691
        %v693 = vperm.slane %v633, 7
        %v694 = vlaneseq
        %v695 = vshrl.u32 %v694, 7
        %697 = vset.pattern.permute.xlu0 %v695
        %698 = vperm.xlu0 %697, %v693
        %v699 = vpop.permute.xlu0 %698
        %vm700 = vcmp.eq.s32.totalorder %v650, %v643
        %vm701 = vcmp.eq.s32.totalorder %v657, %v643
        %vm702 = vcmp.eq.s32.totalorder %v664, %v643
        %vm703 = vcmp.eq.s32.totalorder %v671, %v643
        %vm704 = vcmp.eq.s32.totalorder %v678, %v643
        %vm705 = vcmp.eq.s32.totalorder %v685, %v643
        %vm706 = vcmp.eq.s32.totalorder %v692, %v643
        %vm707 = vcmp.eq.s32.totalorder %v699, %v643
        %v708 = vsel %vm700, 1, 0
        %v709 = vsel %vm701, 1, 0
        %v710 = vsel %vm702, 1, 0
        %v711 = vsel %vm703, 1, 0
        %v712 = vsel %vm704, 1, 0
        %v713 = vsel %vm705, 1, 0
        %v714 = vsel %vm706, 1, 0
        %v715 = vsel %vm707, 1, 0
        %v716 = vcvt.s32.f32 %v708
        %v717 = vcvt.s32.f32 %v709
        %v718 = vcvt.s32.f32 %v710
        %v719 = vcvt.s32.f32 %v711
        %v720 = vcvt.s32.f32 %v712
        %v721 = vcvt.s32.f32 %v713
        %v722 = vcvt.s32.f32 %v714
        %v723 = vcvt.s32.f32 %v715
        %v724 = vmul.f32 %v716, %v625
        %v725 = vmul.f32 %v717, %v626
        %v726 = vmul.f32 %v718, %v627
        %v727 = vmul.f32 %v719, %v628
        %v728 = vmul.f32 %v720, %v629
        %v729 = vmul.f32 %v721, %v630
        %v730 = vmul.f32 %v722, %v631
        %v731 = vmul.f32 %v723, %v632
        %v732 = vsel %vm612, %v724, 0.0
        %733 = vadd.xlane.f32.xlu0 %v732
        %v734 = vpop.xlane.xlu0 %733
        %v735 = vsel %vm612, %v725, 0.0
        %736 = vadd.xlane.f32.xlu0 %v735
        %v737 = vpop.xlane.xlu0 %736
        %v738 = vsel %vm612, %v726, 0.0
        %739 = vadd.xlane.f32.xlu0 %v738
        %v740 = vpop.xlane.xlu0 %739
        %v741 = vsel %vm612, %v727, 0.0
        %742 = vadd.xlane.f32.xlu0 %v741
        %v743 = vpop.xlane.xlu0 %742
        %v744 = vsel %vm612, %v728, 0.0
        %745 = vadd.xlane.f32.xlu0 %v744
        %v746 = vpop.xlane.xlu0 %745
        %v747 = vsel %vm612, %v729, 0.0
        %748 = vadd.xlane.f32.xlu0 %v747
        %v749 = vpop.xlane.xlu0 %748
        %v750 = vsel %vm612, %v730, 0.0
        %751 = vadd.xlane.f32.xlu0 %v750
        %v752 = vpop.xlane.xlu0 %751
        %v753 = vsel %vm612, %v731, 0.0
        %754 = vadd.xlane.f32.xlu0 %v753
        %v755 = vpop.xlane.xlu0 %754
        %v756 = vmul.f32 %v734, %v634
        %v757 = vmul.f32 %v737, %v635
        %v758 = vmul.f32 %v740, %v636
        %v759 = vmul.f32 %v743, %v637
        %v760 = vmul.f32 %v746, %v638
        %v761 = vmul.f32 %v749, %v639
        %v762 = vmul.f32 %v752, %v640
        %v763 = vmul.f32 %v755, %v641
        %vm764 = vcmask 1024
        %v765 = vsel %vm764, %v756, 0.0
        %v766 = vsel %vm764, %v757, 0.0
        %v767 = vadd.f32 %v765, %v766
        %v768 = vsel %vm764, %v758, 0.0
        %v769 = vadd.f32 %v767, %v768
        %v770 = vsel %vm764, %v759, 0.0
        %v771 = vadd.f32 %v769, %v770
        %v772 = vsel %vm764, %v760, 0.0
        %v773 = vadd.f32 %v771, %v772
        %v774 = vsel %vm764, %v761, 0.0
        %v775 = vadd.f32 %v773, %v774
        %v776 = vsel %vm764, %v762, 0.0
        %v777 = vadd.f32 %v775, %v776
        %v778 = vsel %vm764, %v763, 0.0
        %v779 = vadd.f32 %v777, %v778
        %v780 = vperm.slane %v716, 0
        %v781 = vlaneseq
        %v782 = vshrl.u32 %v781, 7
        %784 = vset.pattern.permute.xlu0 %v782
        %785 = vperm.xlu0 %784, %v780
        %v786 = vpop.permute.xlu0 %785
        %v787 = vlaneseq
        %v788 = vshrl.u32 %v787, 7
        %v789 = vadd.s32 %v788, 8
        %790 = vset.pattern.permute.xlu0 %v789
        %791 = vperm.xlu0 %790, %v780
        %v792 = vpop.permute.xlu0 %791
        %v793 = vperm.slane %v716, 1
        %v794 = vlaneseq
        %v795 = vshrl.u32 %v794, 7
        %797 = vset.pattern.permute.xlu0 %v795
        %798 = vperm.xlu0 %797, %v793
        %v799 = vpop.permute.xlu0 %798
        %v800 = vlaneseq
        %v801 = vshrl.u32 %v800, 7
        %v802 = vadd.s32 %v801, 8
        %803 = vset.pattern.permute.xlu0 %v802
        %804 = vperm.xlu0 %803, %v793
        %v805 = vpop.permute.xlu0 %804
        %v806 = vperm.slane %v717, 0
        %v807 = vlaneseq
        %v808 = vshrl.u32 %v807, 7
        %810 = vset.pattern.permute.xlu0 %v808
        %811 = vperm.xlu0 %810, %v806
        %v812 = vpop.permute.xlu0 %811
        %v813 = vlaneseq
        %v814 = vshrl.u32 %v813, 7
        %v815 = vadd.s32 %v814, 8
        %816 = vset.pattern.permute.xlu0 %v815
        %817 = vperm.xlu0 %816, %v806
        %v818 = vpop.permute.xlu0 %817
        %v819 = vperm.slane %v717, 1
        %v820 = vlaneseq
        %v821 = vshrl.u32 %v820, 7
        %823 = vset.pattern.permute.xlu0 %v821
        %824 = vperm.xlu0 %823, %v819
        %v825 = vpop.permute.xlu0 %824
        %v826 = vlaneseq
        %v827 = vshrl.u32 %v826, 7
        %v828 = vadd.s32 %v827, 8
        %829 = vset.pattern.permute.xlu0 %v828
        %830 = vperm.xlu0 %829, %v819
        %v831 = vpop.permute.xlu0 %830
        %v832 = vperm.slane %v718, 0
        %v833 = vlaneseq
        %v834 = vshrl.u32 %v833, 7
        %836 = vset.pattern.permute.xlu0 %v834
        %837 = vperm.xlu0 %836, %v832
        %v838 = vpop.permute.xlu0 %837
        %v839 = vlaneseq
        %v840 = vshrl.u32 %v839, 7
        %v841 = vadd.s32 %v840, 8
        %842 = vset.pattern.permute.xlu0 %v841
        %843 = vperm.xlu0 %842, %v832
        %v844 = vpop.permute.xlu0 %843
        %v845 = vperm.slane %v718, 1
        %v846 = vlaneseq
        %v847 = vshrl.u32 %v846, 7
        %849 = vset.pattern.permute.xlu0 %v847
        %850 = vperm.xlu0 %849, %v845
        %v851 = vpop.permute.xlu0 %850
        %v852 = vlaneseq
        %v853 = vshrl.u32 %v852, 7
        %v854 = vadd.s32 %v853, 8
        %855 = vset.pattern.permute.xlu0 %v854
        %856 = vperm.xlu0 %855, %v845
        %v857 = vpop.permute.xlu0 %856
        %v858 = vperm.slane %v719, 0
        %v859 = vlaneseq
        %v860 = vshrl.u32 %v859, 7
        %862 = vset.pattern.permute.xlu0 %v860
        %863 = vperm.xlu0 %862, %v858
        %v864 = vpop.permute.xlu0 %863
        %v865 = vlaneseq
        %v866 = vshrl.u32 %v865, 7
        %v867 = vadd.s32 %v866, 8
        %868 = vset.pattern.permute.xlu0 %v867
        %869 = vperm.xlu0 %868, %v858
        %v870 = vpop.permute.xlu0 %869
        %v871 = vperm.slane %v719, 1
        %v872 = vlaneseq
        %v873 = vshrl.u32 %v872, 7
        %875 = vset.pattern.permute.xlu0 %v873
        %876 = vperm.xlu0 %875, %v871
        %v877 = vpop.permute.xlu0 %876
        %v878 = vlaneseq
        %v879 = vshrl.u32 %v878, 7
        %v880 = vadd.s32 %v879, 8
        %881 = vset.pattern.permute.xlu0 %v880
        %882 = vperm.xlu0 %881, %v871
        %v883 = vpop.permute.xlu0 %882
        %v884 = vperm.slane %v720, 0
        %v885 = vlaneseq
        %v886 = vshrl.u32 %v885, 7
        %888 = vset.pattern.permute.xlu0 %v886
        %889 = vperm.xlu0 %888, %v884
        %v890 = vpop.permute.xlu0 %889
        %v891 = vlaneseq
        %v892 = vshrl.u32 %v891, 7
        %v893 = vadd.s32 %v892, 8
        %894 = vset.pattern.permute.xlu0 %v893
        %895 = vperm.xlu0 %894, %v884
        %v896 = vpop.permute.xlu0 %895
        %v897 = vperm.slane %v720, 1
        %v898 = vlaneseq
        %v899 = vshrl.u32 %v898, 7
        %901 = vset.pattern.permute.xlu0 %v899
        %902 = vperm.xlu0 %901, %v897
        %v903 = vpop.permute.xlu0 %902
        %v904 = vlaneseq
        %v905 = vshrl.u32 %v904, 7
        %v906 = vadd.s32 %v905, 8
        %907 = vset.pattern.permute.xlu0 %v906
        %908 = vperm.xlu0 %907, %v897
        %v909 = vpop.permute.xlu0 %908
        %v910 = vperm.slane %v721, 0
        %v911 = vlaneseq
        %v912 = vshrl.u32 %v911, 7
        %914 = vset.pattern.permute.xlu0 %v912
        %915 = vperm.xlu0 %914, %v910
        %v916 = vpop.permute.xlu0 %915
        %v917 = vlaneseq
        %v918 = vshrl.u32 %v917, 7
        %v919 = vadd.s32 %v918, 8
        %920 = vset.pattern.permute.xlu0 %v919
        %921 = vperm.xlu0 %920, %v910
        %v922 = vpop.permute.xlu0 %921
        %v923 = vperm.slane %v721, 1
        %v924 = vlaneseq
        %v925 = vshrl.u32 %v924, 7
        %927 = vset.pattern.permute.xlu0 %v925
        %928 = vperm.xlu0 %927, %v923
        %v929 = vpop.permute.xlu0 %928
        %v930 = vlaneseq
        %v931 = vshrl.u32 %v930, 7
        %v932 = vadd.s32 %v931, 8
        %933 = vset.pattern.permute.xlu0 %v932
        %934 = vperm.xlu0 %933, %v923
        %v935 = vpop.permute.xlu0 %934
        %v936 = vperm.slane %v722, 0
        %v937 = vlaneseq
        %v938 = vshrl.u32 %v937, 7
        %940 = vset.pattern.permute.xlu0 %v938
        %941 = vperm.xlu0 %940, %v936
        %v942 = vpop.permute.xlu0 %941
        %v943 = vlaneseq
        %v944 = vshrl.u32 %v943, 7
        %v945 = vadd.s32 %v944, 8
        %946 = vset.pattern.permute.xlu0 %v945
        %947 = vperm.xlu0 %946, %v936
        %v948 = vpop.permute.xlu0 %947
        %v949 = vperm.slane %v722, 1
        %v950 = vlaneseq
        %v951 = vshrl.u32 %v950, 7
        %953 = vset.pattern.permute.xlu0 %v951
        %954 = vperm.xlu0 %953, %v949
        %v955 = vpop.permute.xlu0 %954
        %v956 = vlaneseq
        %v957 = vshrl.u32 %v956, 7
        %v958 = vadd.s32 %v957, 8
        %959 = vset.pattern.permute.xlu0 %v958
        %960 = vperm.xlu0 %959, %v949
        %v961 = vpop.permute.xlu0 %960
        %v962 = vmul.f32 %v786, %v455
        %v963 = vmul.f32 %v792, %v456
        %v964 = vmul.f32 %v799, %v455
        %v965 = vmul.f32 %v805, %v456
        %v966 = vmul.f32 %v812, %v455
        %v967 = vmul.f32 %v818, %v456
        %v968 = vmul.f32 %v825, %v455
        %v969 = vmul.f32 %v831, %v456
        %v970 = vmul.f32 %v838, %v455
        %v971 = vmul.f32 %v844, %v456
        %v972 = vmul.f32 %v851, %v455
        %v973 = vmul.f32 %v857, %v456
        %v974 = vmul.f32 %v864, %v455
        %v975 = vmul.f32 %v870, %v456
        %v976 = vmul.f32 %v877, %v455
        %v977 = vmul.f32 %v883, %v456
        %v978 = vmul.f32 %v890, %v455
        %v979 = vmul.f32 %v896, %v456
        %v980 = vmul.f32 %v903, %v455
        %v981 = vmul.f32 %v909, %v456
        %v982 = vmul.f32 %v916, %v455
        %v983 = vmul.f32 %v922, %v456
        %v984 = vmul.f32 %v929, %v455
        %v985 = vmul.f32 %v935, %v456
        %v986 = vmul.f32 %v942, %v455
        %v987 = vmul.f32 %v948, %v456
        %v988 = vmul.f32 %v955, %v455
        %v989 = vmul.f32 %v961, %v456
        %vm990 = vcmask 130048
        %v991 = vsel %vm990, %v962, 0.0
        %v992 = vsel %vm990, %v963, 0.0
        %v993 = vadd.f32 %v991, %v992
        %v994 = vrot.slane %v993, 4
        %v995 = vadd.f32 %v993, %v994
        %v996 = vrot.slane %v995, 2
        %v997 = vadd.f32 %v995, %v996
        %v998 = vrot.slane %v997, 1
        %v999 = vadd.f32 %v997, %v998
        %v1000 = vsel %vm990, %v964, 0.0
        %v1001 = vsel %vm990, %v965, 0.0
        %v1002 = vadd.f32 %v1000, %v1001
        %v1003 = vrot.slane %v1002, 4
        %v1004 = vadd.f32 %v1002, %v1003
        %v1005 = vrot.slane %v1004, 2
        %v1006 = vadd.f32 %v1004, %v1005
        %v1007 = vrot.slane %v1006, 1
        %v1008 = vadd.f32 %v1006, %v1007
        %v1009 = vsel %vm990, %v966, 0.0
        %v1010 = vsel %vm990, %v967, 0.0
        %v1011 = vadd.f32 %v1009, %v1010
        %v1012 = vrot.slane %v1011, 4
        %v1013 = vadd.f32 %v1011, %v1012
        %v1014 = vrot.slane %v1013, 2
        %v1015 = vadd.f32 %v1013, %v1014
        %v1016 = vrot.slane %v1015, 1
        %v1017 = vadd.f32 %v1015, %v1016
        %v1018 = vsel %vm990, %v968, 0.0
        %v1019 = vsel %vm990, %v969, 0.0
        %v1020 = vadd.f32 %v1018, %v1019
        %v1021 = vrot.slane %v1020, 4
        %v1022 = vadd.f32 %v1020, %v1021
        %v1023 = vrot.slane %v1022, 2
        %v1024 = vadd.f32 %v1022, %v1023
        %v1025 = vrot.slane %v1024, 1
        %v1026 = vadd.f32 %v1024, %v1025
        %v1027 = vsel %vm990, %v970, 0.0
        %v1028 = vsel %vm990, %v971, 0.0
        %v1029 = vadd.f32 %v1027, %v1028
        %v1030 = vrot.slane %v1029, 4
        %v1031 = vadd.f32 %v1029, %v1030
        %v1032 = vrot.slane %v1031, 2
        %v1033 = vadd.f32 %v1031, %v1032
        %v1034 = vrot.slane %v1033, 1
        %v1035 = vadd.f32 %v1033, %v1034
        %v1036 = vsel %vm990, %v972, 0.0
        %v1037 = vsel %vm990, %v973, 0.0
        %v1038 = vadd.f32 %v1036, %v1037
        %v1039 = vrot.slane %v1038, 4
        %v1040 = vadd.f32 %v1038, %v1039
        %v1041 = vrot.slane %v1040, 2
        %v1042 = vadd.f32 %v1040, %v1041
        %v1043 = vrot.slane %v1042, 1
        %v1044 = vadd.f32 %v1042, %v1043
        %v1045 = vsel %vm990, %v974, 0.0
        %v1046 = vsel %vm990, %v975, 0.0
        %v1047 = vadd.f32 %v1045, %v1046
        %v1048 = vrot.slane %v1047, 4
        %v1049 = vadd.f32 %v1047, %v1048
        %v1050 = vrot.slane %v1049, 2
        %v1051 = vadd.f32 %v1049, %v1050
        %v1052 = vrot.slane %v1051, 1
        %v1053 = vadd.f32 %v1051, %v1052
        %v1054 = vsel %vm990, %v976, 0.0
        %v1055 = vsel %vm990, %v977, 0.0
        %v1056 = vadd.f32 %v1054, %v1055
        %v1057 = vrot.slane %v1056, 4
        %v1058 = vadd.f32 %v1056, %v1057
        %v1059 = vrot.slane %v1058, 2
        %v1060 = vadd.f32 %v1058, %v1059
        %v1061 = vrot.slane %v1060, 1
        %v1062 = vadd.f32 %v1060, %v1061
        %v1063 = vsel %vm990, %v978, 0.0
        %v1064 = vsel %vm990, %v979, 0.0
        %v1065 = vadd.f32 %v1063, %v1064
        %v1066 = vrot.slane %v1065, 4
        %v1067 = vadd.f32 %v1065, %v1066
        %v1068 = vrot.slane %v1067, 2
        %v1069 = vadd.f32 %v1067, %v1068
        %v1070 = vrot.slane %v1069, 1
        %v1071 = vadd.f32 %v1069, %v1070
        %v1072 = vsel %vm990, %v980, 0.0
        %v1073 = vsel %vm990, %v981, 0.0
        %v1074 = vadd.f32 %v1072, %v1073
        %v1075 = vrot.slane %v1074, 4
        %v1076 = vadd.f32 %v1074, %v1075
        %v1077 = vrot.slane %v1076, 2
        %v1078 = vadd.f32 %v1076, %v1077
        %v1079 = vrot.slane %v1078, 1
        %v1080 = vadd.f32 %v1078, %v1079
        %v1081 = vsel %vm990, %v982, 0.0
        %v1082 = vsel %vm990, %v983, 0.0
        %v1083 = vadd.f32 %v1081, %v1082
        %v1084 = vrot.slane %v1083, 4
        %v1085 = vadd.f32 %v1083, %v1084
        %v1086 = vrot.slane %v1085, 2
        %v1087 = vadd.f32 %v1085, %v1086
        %v1088 = vrot.slane %v1087, 1
        %v1089 = vadd.f32 %v1087, %v1088
        %v1090 = vsel %vm990, %v984, 0.0
        %v1091 = vsel %vm990, %v985, 0.0
        %v1092 = vadd.f32 %v1090, %v1091
        %v1093 = vrot.slane %v1092, 4
        %v1094 = vadd.f32 %v1092, %v1093
        %v1095 = vrot.slane %v1094, 2
        %v1096 = vadd.f32 %v1094, %v1095
        %v1097 = vrot.slane %v1096, 1
        %v1098 = vadd.f32 %v1096, %v1097
        %v1099 = vsel %vm990, %v986, 0.0
        %v1100 = vsel %vm990, %v987, 0.0
        %v1101 = vadd.f32 %v1099, %v1100
        %v1102 = vrot.slane %v1101, 4
        %v1103 = vadd.f32 %v1101, %v1102
        %v1104 = vrot.slane %v1103, 2
        %v1105 = vadd.f32 %v1103, %v1104
        %v1106 = vrot.slane %v1105, 1
        %v1107 = vadd.f32 %v1105, %v1106
        %v1108 = vsel %vm990, %v988, 0.0
        %v1109 = vsel %vm990, %v989, 0.0
        %v1110 = vadd.f32 %v1108, %v1109
        %v1111 = vrot.slane %v1110, 4
        %v1112 = vadd.f32 %v1110, %v1111
        %v1113 = vrot.slane %v1112, 2
        %v1114 = vadd.f32 %v1112, %v1113
        %v1115 = vrot.slane %v1114, 1
        %v1116 = vadd.f32 %v1114, %v1115
        %v1124 = vrot.slane %v717, 1
        %v1125 = vrot.slane %v718, 1
        %v1126 = vrot.slane %v719, 1
        %v1127 = vrot.slane %v720, 1
        %v1128 = vrot.slane %v721, 1
        %v1129 = vrot.slane %v722, 1
        %v1130 = vrot.slane %v723, 1
        %v1145 = vmul.f32 %v999, %v717
        %v1146 = vmul.f32 %v1008, %v1124
        %v1147 = vmul.f32 %v1017, %v718
        %v1148 = vmul.f32 %v1026, %v1125
        %v1149 = vmul.f32 %v1035, %v719
        %v1150 = vmul.f32 %v1044, %v1126
        %v1151 = vmul.f32 %v1053, %v720
        %v1152 = vmul.f32 %v1062, %v1127
        %v1153 = vmul.f32 %v1071, %v721
        %v1154 = vmul.f32 %v1080, %v1128
        %v1155 = vmul.f32 %v1089, %v722
        %v1156 = vmul.f32 %v1098, %v1129
        %v1157 = vmul.f32 %v1107, %v723
        %v1158 = vmul.f32 %v1116, %v1130
        %v1173 = vrot.slane %v1146, 7
        %vm1174 = vcmask 1041409
        %v1175 = vsel %vm1174, %v1173, %v1145
        %v1176 = vrot.slane %v1148, 7
        %v1177 = vsel %vm1174, %v1176, %v1147
        %v1178 = vrot.slane %v1150, 7
        %v1179 = vsel %vm1174, %v1178, %v1149
        %v1180 = vrot.slane %v1152, 7
        %v1181 = vsel %vm1174, %v1180, %v1151
        %v1182 = vrot.slane %v1154, 7
        %v1183 = vsel %vm1174, %v1182, %v1153
        %v1184 = vrot.slane %v1156, 7
        %v1185 = vsel %vm1174, %v1184, %v1155
        %v1186 = vrot.slane %v1158, 7
        %v1187 = vsel %vm1174, %v1186, %v1157
        %v1195 = vsel %vm612, %v1175, 0.0
        %1196 = vadd.xlane.f32.xlu0 %v1195
        %v1197 = vpop.xlane.xlu0 %1196
        %v1198 = vsel %vm612, %v1177, 0.0
        %1199 = vadd.xlane.f32.xlu0 %v1198
        %v1200 = vpop.xlane.xlu0 %1199
        %v1201 = vsel %vm612, %v1179, 0.0
        %1202 = vadd.xlane.f32.xlu0 %v1201
        %v1203 = vpop.xlane.xlu0 %1202
        %v1204 = vsel %vm612, %v1181, 0.0
        %1205 = vadd.xlane.f32.xlu0 %v1204
        %v1206 = vpop.xlane.xlu0 %1205
        %v1207 = vsel %vm612, %v1183, 0.0
        %1208 = vadd.xlane.f32.xlu0 %v1207
        %v1209 = vpop.xlane.xlu0 %1208
        %v1210 = vsel %vm612, %v1185, 0.0
        %1211 = vadd.xlane.f32.xlu0 %v1210
        %v1212 = vpop.xlane.xlu0 %1211
        %v1213 = vsel %vm612, %v1187, 0.0
        %1214 = vadd.xlane.f32.xlu0 %v1213
        %v1215 = vpop.xlane.xlu0 %1214
        %v1216 = vmul.f32 %v1197, %v635
        %v1217 = vmul.f32 %v1200, %v636
        %v1218 = vmul.f32 %v1203, %v637
        %v1219 = vmul.f32 %v1206, %v638
        %v1220 = vmul.f32 %v1209, %v639
        %v1221 = vmul.f32 %v1212, %v640
        %v1222 = vmul.f32 %v1215, %v641
        %v1223 = vsel %vm764, %v1216, 0.0
        %v1224 = vsel %vm764, %v1217, 0.0
        %v1225 = vadd.f32 %v1223, %v1224
        %v1226 = vsel %vm764, %v1218, 0.0
        %v1227 = vadd.f32 %v1225, %v1226
        %v1228 = vsel %vm764, %v1219, 0.0
        %v1229 = vadd.f32 %v1227, %v1228
        %v1230 = vsel %vm764, %v1220, 0.0
        %v1231 = vadd.f32 %v1229, %v1230
        %v1232 = vsel %vm764, %v1221, 0.0
        %v1233 = vadd.f32 %v1231, %v1232
        %v1234 = vsel %vm764, %v1222, 0.0
        %v1235 = vadd.f32 %v1233, %v1234
        %v1236 = vmul.f32 %v716, %v463
        %v1237 = vsel %vm612, %v1236, 0.0
        %1238 = vadd.xlane.f32.xlu0 %v1237
        %v1239 = vpop.xlane.xlu0 %1238
        %v1240 = vsel %vm764, %v634, 0.0
        %v1241 = vsel %vm764, %v635, 0.0
        %v1242 = vadd.f32 %v1240, %v1241
        %v1243 = vsel %vm764, %v636, 0.0
        %v1244 = vadd.f32 %v1242, %v1243
        %v1245 = vsel %vm764, %v637, 0.0
        %v1246 = vadd.f32 %v1244, %v1245
        %v1247 = vsel %vm764, %v638, 0.0
        %v1248 = vadd.f32 %v1246, %v1247
        %v1249 = vsel %vm764, %v639, 0.0
        %v1250 = vadd.f32 %v1248, %v1249
        %v1251 = vsel %vm764, %v640, 0.0
        %v1252 = vadd.f32 %v1250, %v1251
        %v1253 = vsel %vm764, %v641, 0.0
        %v1254 = vadd.f32 %v1252, %v1253
        %v1255 = vcvt.f32.s32.to.zero.pseudo %v1254
        %v1256 = vsub.s32 %v1255, 1
        %vm1257 = vcmp.eq.s32.totalorder %v1256, 0
        %vm1258 = vcmp.eq.s32.totalorder %v1256, 1
        %vm1259 = vcmp.eq.s32.totalorder %v1256, 2
        %vm1260 = vcmp.eq.s32.totalorder %v1256, 3
        %vm1261 = vcmp.eq.s32.totalorder %v1256, 4
        %vm1262 = vcmp.eq.s32.totalorder %v1256, 5
        %vm1263 = vcmp.eq.s32.totalorder %v1256, 6
        %vm1264 = vcmp.eq.s32.totalorder %v1256, 7
        %v1265 = vsel %vm1257, 1, 0
        %v1266 = vsel %vm1258, 1, 0
        %v1267 = vsel %vm1259, 1, 0
        %v1268 = vsel %vm1260, 1, 0
        %v1269 = vsel %vm1261, 1, 0
        %v1270 = vsel %vm1262, 1, 0
        %v1271 = vsel %vm1263, 1, 0
        %v1272 = vsel %vm1264, 1, 0
        %v1273 = vcvt.s32.f32 %v1265
        %v1274 = vcvt.s32.f32 %v1266
        %v1275 = vcvt.s32.f32 %v1267
        %v1276 = vcvt.s32.f32 %v1268
        %v1277 = vcvt.s32.f32 %v1269
        %v1278 = vcvt.s32.f32 %v1270
        %v1279 = vcvt.s32.f32 %v1271
        %v1280 = vcvt.s32.f32 %v1272
        %1282 = vset.pattern.permute.xlu0 0
        %1283 = vperm.xlu0 %1282, %v1273
        %v1284 = vpop.permute.xlu0 %1283
        %1287 = vset.pattern.permute.xlu0 0
        %1288 = vperm.xlu0 %1287, %v1274
        %v1289 = vpop.permute.xlu0 %1288
        %1292 = vset.pattern.permute.xlu0 0
        %1293 = vperm.xlu0 %1292, %v1275
        %v1294 = vpop.permute.xlu0 %1293
        %1297 = vset.pattern.permute.xlu0 0
        %1298 = vperm.xlu0 %1297, %v1276
        %v1299 = vpop.permute.xlu0 %1298
        %1302 = vset.pattern.permute.xlu0 0
        %1303 = vperm.xlu0 %1302, %v1277
        %v1304 = vpop.permute.xlu0 %1303
        %1307 = vset.pattern.permute.xlu0 0
        %1308 = vperm.xlu0 %1307, %v1278
        %v1309 = vpop.permute.xlu0 %1308
        %1312 = vset.pattern.permute.xlu0 0
        %1313 = vperm.xlu0 %1312, %v1279
        %v1314 = vpop.permute.xlu0 %1313
        %1317 = vset.pattern.permute.xlu0 0
        %1318 = vperm.xlu0 %1317, %v1280
        %v1319 = vpop.permute.xlu0 %1318
        %v1321 = vmul.f32 %v1284, %v716
        %v1322 = vmul.f32 %v1289, %v717
        %v1323 = vmul.f32 %v1294, %v718
        %v1324 = vmul.f32 %v1299, %v719
        %v1325 = vmul.f32 %v1304, %v720
        %v1326 = vmul.f32 %v1309, %v721
        %v1327 = vmul.f32 %v1314, %v722
        %v1328 = vmul.f32 %v1319, %v723
        %v1329 = vsel %vm612, %v1321, 0.0
        %v1330 = vsel %vm612, %v1322, 0.0
        %v1331 = vadd.f32 %v1329, %v1330
        %v1332 = vsel %vm612, %v1323, 0.0
        %v1333 = vadd.f32 %v1331, %v1332
        %v1334 = vsel %vm612, %v1324, 0.0
        %v1335 = vadd.f32 %v1333, %v1334
        %v1336 = vsel %vm612, %v1325, 0.0
        %v1337 = vadd.f32 %v1335, %v1336
        %v1338 = vsel %vm612, %v1326, 0.0
        %v1339 = vadd.f32 %v1337, %v1338
        %v1340 = vsel %vm612, %v1327, 0.0
        %v1341 = vadd.f32 %v1339, %v1340
        %v1342 = vsel %vm612, %v1328, 0.0
        %v1343 = vadd.f32 %v1341, %v1342
        %v1344 = vmul.f32 %v1343, %v609
        %v1345 = vsel %vm612, %v1344, 0.0
        %1346 = vadd.xlane.f32.xlu0 %v1345
        %v1347 = vpop.xlane.xlu0 %1346
        %v1348 = vadd.f32 %v779, %v1235
        %v1349 = vadd.f32 %v1348, %v1239
        %v1350 = vadd.f32 %v1349, %v1347
        %v1351 = vsub.f32 %v624, %v1350
        %1352 = vst.msk [vmem:[%s454] sm:$0x3] %vm764, %v1351
        %p1353 = scmp.lt.s32.totalorder %s21, 1
        %s1354 = scalar_select %p1353, %s21, 1
        %s1355 = smul.addr %s1354, 2
        %s1356 = scalar_lea.vmem %s7, %s1355
        // Predicated region
        $region101: #{stacked_transformers_crf_forward.25} parent=84 // pred_check
          %p1357 = pneg %p216
        $region102: #{stacked_transformers_crf_forward.25} parent=84 // pred_check_branch
          %1359 = sbr.rel (%p1357) target = $region104
        $region103: #{stacked_transformers_crf_forward.25} parent=84 // pred_region
          _
        $region104: #{stacked_transformers_crf_forward.25} parent=84 // pred_fallthru
          _
      $region85: #{stacked_transformers_crf_forward.25} parent=5 // pred_fallthru
        _
      %p1360 = scmp.le.s32.totalorder 2, %s16
      // Predicated region
      $region105: #{stacked_transformers_crf_forward.25} parent=5 // pred_check
        %p1361 = pneg %p1360
      $region106: #{stacked_transformers_crf_forward.25} parent=5 // pred_check_branch
        %1363 = sbr.rel (%p1361) target = $region108
      $region107: #{stacked_transformers_crf_forward.25} parent=5 // pred_region
        %s1364 = ssub.s32 %s16, 2
        // Predicated region
        $region109: #{stacked_transformers_crf_forward.25} parent=107 // pred_check
          %p1365 = pneg %p222
        $region110: #{stacked_transformers_crf_forward.25} parent=107 // pred_check_branch
          %1367 = sbr.rel (%p1365) target = $region112
        $region111: #{stacked_transformers_crf_forward.25} parent=107 // pred_region
          %p1368 = scmp.lt.s32.totalorder %s22, 1
          %s1369 = scalar_select %p1368, %s22, 1
          %s1370 = smul.addr %s1369, 2
          %s1371 = scalar_lea.vmem %s7, %s1370
        $region112: #{stacked_transformers_crf_forward.25} parent=107 // pred_fallthru
          _
      $region108: #{stacked_transformers_crf_forward.25} parent=5 // pred_fallthru
        _
    $region6: #{stacked_transformers_crf_forward.25} parent=1 // loop_footer
      %s20 = sadd.s32 1, %s16
    $region7: #{stacked_transformers_crf_forward.25} parent=1 // loop_footer_branch
      %15 = sbr.rel target = $region3
    $region8: #{stacked_transformers_crf_forward.25} parent=1 // loop_exit
      _
    %1372 = vsyncpa [#allocation4], 1
    %s1373 = scalar_lea.sflag [#allocation4], 1
    %1374 = vsyncpa %s1373, 1

</llo_original>
